<compile_context>
chip_gen: v7x
topology: tpu7x:2x2x1
jax: 0.10.0
libtpu: 0.0.40
codegen_flags: <defaults>
</compile_context>

<pallas_src>
import math
import functools

import jax
import jax.numpy as jnp
from jax.experimental import pallas as pl
from jax.experimental.pallas import tpu as pltpu


# ----------------------------------------------------------------------------- helpers

def _layer_norm(x, gamma, beta, eps=1e-5):
    """LayerNorm over the last dim, f32 math (matches torch.nn.LayerNorm defaults)."""
    mu = jnp.mean(x, axis=-1, keepdims=True)
    var = jnp.mean((x - mu) ** 2, axis=-1, keepdims=True)
    return (x - mu) * jax.lax.rsqrt(var + eps) * gamma + beta


def _pick_tile(n, target):
    """Largest 8-aligned divisor of n that is <= target; full extent if none / n small."""
    if n <= target:
        return n
    for t in range(target, 7, -1):
        if n % t == 0 and t % 8 == 0:
            return t
    return n


_VMEM_LIMIT = 32 * 1024 * 1024  # explicit scoped-VMEM limit, safe on v5e/v6e/v7x


# ----------------------------------------------------------------------------- attention kernel
# Residual(AttentionLayer):  out = x + fc( softmax( (LN_h(x_hyper) Wq) (LN(x) Wk)^T / sqrt(d) ) (LN(x) Wv) )
# grid = (B, num_q_tiles, num_kv_tiles); kv axis is the innermost "arbitrary" (reduction) axis.

def _attn_kernel(xh_ref, xkv_ref, xres_ref,
                 gh_ref, bh_ref, gx_ref, bx_ref,
                 wq_ref, bq_ref, wk_ref, bk_ref, wv_ref, bv_ref,
                 wfc_ref, bfc_ref,
                 o_ref,
                 q_sc, m_sc, l_sc, acc_sc,
                 *, num_heads, head_dim, scale):
    ki = pl.program_id(2)
    nk = pl.num_programs(2)

    @pl.when(ki == 0)
    def _init():
        # Query projection once per (batch, q-tile); scale folded into q (not into scores).
        xh_n = _layer_norm(xh_ref[...], gh_ref[0], bh_ref[0])                 # f32 (tq, D)
        q = jnp.dot(xh_n.astype(jnp.bfloat16), wq_ref[...],
                    preferred_element_type=jnp.float32) + bq_ref[0]
        q = q * scale
        q_sc[...] = q.reshape(q.shape[0], num_heads, head_dim).astype(jnp.bfloat16)
        m_sc[...] = jnp.full(m_sc.shape, -jnp.inf, dtype=jnp.float32)
        l_sc[...] = jnp.zeros(l_sc.shape, dtype=jnp.float32)
        acc_sc[...] = jnp.zeros(acc_sc.shape, dtype=jnp.float32)

    # K/V projection for this kv tile (LayerNorm in f32, matmul operands in bf16).
    x_n = _layer_norm(xkv_ref[...], gx_ref[0], bx_ref[0])                     # f32 (tk, D)
    x_b = x_n.astype(jnp.bfloat16)
    k = jnp.dot(x_b, wk_ref[...], preferred_element_type=jnp.float32) + bk_ref[0]
    v = jnp.dot(x_b, wv_ref[...], preferred_element_type=jnp.float32) + bv_ref[0]
    kh = k.reshape(k.shape[0], num_heads, head_dim).astype(jnp.bfloat16)      # (tk, H, d)
    vh = v.reshape(v.shape[0], num_heads, head_dim).astype(jnp.bfloat16)      # (tk, H, d)

    # Scores for this (q-tile, kv-tile): (H, tq, tk); q is already scaled.
    s = jnp.einsum("qhd,khd->hqk", q_sc[...], kh,
                   preferred_element_type=jnp.float32)

    # Online softmax update (f32).
    m_prev = m_sc[...]                                                        # (H, tq, 1)
    m_new = jnp.maximum(m_prev, jnp.max(s, axis=-1, keepdims=True))
    alpha = jnp.exp(m_prev - m_new)
    p = jnp.exp(s - m_new)                                                    # (H, tq, tk)
    l_sc[...] = alpha * l_sc[...] + jnp.sum(p, axis=-1, keepdims=True)
    acc_sc[...] = alpha * acc_sc[...] + jnp.einsum(
        "hqk,khd->hqd", p.astype(jnp.bfloat16), vh,
        preferred_element_type=jnp.float32)
    m_sc[...] = m_new

    @pl.when(ki == nk - 1)
    def _finish():
        inv_l = pl.reciprocal(l_sc[...], approx=True)                         # EUP
        ctx = (acc_sc[...] * inv_l).astype(jnp.bfloat16)                      # (H, tq, d)
        # Output projection with the head-merge fused: wfc comes in as (H, d, D).
        heads_out = jnp.einsum("hqd,hdo->hqo", ctx, wfc_ref[...],
                               preferred_element_type=jnp.float32)            # (H, tq, D)
        out = jnp.sum(heads_out, axis=0) + bfc_ref[0]                         # (tq, D)
        # dropout = identity (eval); fused residual add.
        o_ref[...] = (out + xres_ref[...]).astype(o_ref.dtype)


def attention_block(x, x_hyper, p, *, num_heads, tq=None, tk=None):
    B, S, D = x.shape
    Bh, Sh, Dh = x_hyper.shape
    assert D == Dh and B == Bh
    assert Sh == S, "residual add requires x and x_hyper to share sequence length"
    assert D % num_heads == 0
    head_dim = D // num_heads
    scale = 1.0 / math.sqrt(head_dim)

    tq = _pick_tile(Sh, 256) if tq is None else tq
    tk = _pick_tile(S, 512) if tk is None else tk
    assert Sh % tq == 0 and S % tk == 0
    nq, nk = Sh // tq, S // tk

    wfc3 = p["wfc"].reshape(num_heads, head_dim, D)   # bf16, head-split view of fc weight

    wspec = pl.BlockSpec((D, D), lambda b, qi, ki: (0, 0))
    w3spec = pl.BlockSpec((num_heads, head_dim, D), lambda b, qi, ki: (0, 0, 0))
    pspec = pl.BlockSpec((1, D), lambda b, qi, ki: (0, 0))

    kernel = functools.partial(_attn_kernel, num_heads=num_heads,
                               head_dim=head_dim, scale=scale)

    return pl.pallas_call(
        kernel,
        out_shape=jax.ShapeDtypeStruct((B, Sh, D), jnp.float32),
        grid_spec=pltpu.PrefetchScalarGridSpec(
            num_scalar_prefetch=0,
            grid=(B, nq, nk),
            in_specs=[
                pl.BlockSpec((None, tq, D), lambda b, qi, ki: (b, qi, 0)),   # x_hyper (queries)
                pl.BlockSpec((None, tk, D), lambda b, qi, ki: (b, ki, 0)),   # x (K/V source)
                pl.BlockSpec((None, tq, D), lambda b, qi, ki: (b, qi, 0)),   # x (residual rows)
                pspec, pspec,                                                # norm_hyper g, b
                pspec, pspec,                                                # norm g, b
                wspec, pspec,                                                # wq, bq
                wspec, pspec,                                                # wk, bk
                wspec, pspec,                                                # wv, bv
                w3spec, pspec,                                               # wfc (H,d,D), bfc
            ],
            out_specs=pl.BlockSpec((None, tq, D), lambda b, qi, ki: (b, qi, 0)),
            scratch_shapes=[
                pltpu.VMEM((tq, num_heads, head_dim), jnp.bfloat16),  # scaled q heads
                pltpu.VMEM((num_heads, tq, 1), jnp.float32),          # running max
                pltpu.VMEM((num_heads, tq, 1), jnp.float32),          # running denom
                pltpu.VMEM((num_heads, tq, head_dim), jnp.float32),   # output accumulator
            ]),
        compiler_params=pltpu.CompilerParams(
            dimension_semantics=("parallel", "parallel", "arbitrary"),
            vmem_limit_bytes=_VMEM_LIMIT),
    )(x_hyper, x, x,
      p["norm_h_g"], p["norm_h_b"], p["norm_g"], p["norm_b"],
      p["wq"], p["bq"], p["wk"], p["bk"], p["wv"], p["bv"],
      wfc3, p["bfc"])


# ----------------------------------------------------------------------------- feed-forward kernel
# Residual(FeedForwardLayer): out = x + W2 relu(W1 LN(x) + b1) + b2    (dropouts = identity)

def _ffn_kernel(x_ref, g_ref, b_ref, w1_ref, b1_ref, w2_ref, b2_ref, o_ref):
    x = x_ref[...]                                                            # f32 (tr, D)
    xn = _layer_norm(x, g_ref[0], b_ref[0])
    h = jnp.dot(xn.astype(jnp.bfloat16), w1_ref[...],
                preferred_element_type=jnp.float32) + b1_ref[0]               # (tr, 2D)
    h = jnp.maximum(h, 0.0)
    y = jnp.dot(h.astype(jnp.bfloat16), w2_ref[...],
                preferred_element_type=jnp.float32) + b2_ref[0]               # (tr, D)
    o_ref[...] = (y + x).astype(o_ref.dtype)


def feedforward_block(x, p, *, tr=None):
    B, S, D = x.shape
    D2 = p["w1"].shape[1]
    tr = _pick_tile(S, 256) if tr is None else tr
    assert S % tr == 0
    nr = S // tr

    pD = pl.BlockSpec((1, D), lambda b, r: (0, 0))
    pD2 = pl.BlockSpec((1, D2), lambda b, r: (0, 0))

    return pl.pallas_call(
        _ffn_kernel,
        out_shape=jax.ShapeDtypeStruct((B, S, D), jnp.float32),
        grid_spec=pltpu.PrefetchScalarGridSpec(
            num_scalar_prefetch=0,
            grid=(B, nr),
            in_specs=[
                pl.BlockSpec((None, tr, D), lambda b, r: (b, r, 0)),
                pD, pD,
                pl.BlockSpec((D, D2), lambda b, r: (0, 0)), pD2,
                pl.BlockSpec((D2, D), lambda b, r: (0, 0)), pD,
            ],
            out_specs=pl.BlockSpec((None, tr, D), lambda b, r: (b, r, 0))),
        compiler_params=pltpu.CompilerParams(
            dimension_semantics=("parallel", "parallel"),
            vmem_limit_bytes=_VMEM_LIMIT),
    )(x, p["norm_g"], p["norm_b"], p["w1"], p["b1"], p["w2"], p["b2"])


# ----------------------------------------------------------------------------- full module

def attention_forward(x, x_hyper, blocks, *, num_heads, tq=None, tk=None, tr=None):
    """Attention.forward (depth = len(blocks)): x and x_hyper are (B, S, D)."""
    for p in blocks:
        x = attention_block(x, x_hyper, p["attn"], num_heads=num_heads, tq=tq, tk=tk)
        x = feedforward_block(x, p["ffn"], tr=tr)
    return x


def init_params(key, dim, *, depth=1):
    """Mirrors the PyTorch init: Linear weights trunc_normal(std=0.02), biases 0, LayerNorm (1,0).
    Weights are stored pre-transposed as (in, out) and in bf16 (MXU operands)."""
    def trunc(k, shape):
        w = jax.random.truncated_normal(k, -2.0, 2.0, shape, jnp.float32) * 0.02
        return w.astype(jnp.bfloat16)

    blocks = []
    for _ in range(depth):
        key, *ks = jax.random.split(key, 7)
        attn = {
            "norm_g": jnp.ones((1, dim), jnp.float32),
            "norm_b": jnp.zeros((1, dim), jnp.float32),
            "norm_h_g": jnp.ones((1, dim), jnp.float32),
            "norm_h_b": jnp.zeros((1, dim), jnp.float32),
            "wq": trunc(ks[0], (dim, dim)), "bq": jnp.zeros((1, dim), jnp.float32),
            "wk": trunc(ks[1], (dim, dim)), "bk": jnp.zeros((1, dim), jnp.float32),
            "wv": trunc(ks[2], (dim, dim)), "bv": jnp.zeros((1, dim), jnp.float32),
            "wfc": trunc(ks[3], (dim, dim)), "bfc": jnp.zeros((1, dim), jnp.float32),
        }
        ffn = {
            "norm_g": jnp.ones((1, dim), jnp.float32),
            "norm_b": jnp.zeros((1, dim), jnp.float32),
            "w1": trunc(ks[4], (dim, 2 * dim)), "b1": jnp.zeros((1, 2 * dim), jnp.float32),
            "w2": trunc(ks[5], (2 * dim, dim)), "b2": jnp.zeros((1, dim), jnp.float32),
        }
        blocks.append({"attn": attn, "ffn": ffn})
    return blocks


# ----------------------------------------------------------------------------- pure-JAX reference

def _ref_attention_layer(x, x_hyper, p, num_heads):
    D = x.shape[-1]
    d = D // num_heads
    f32 = lambda w: w.astype(jnp.float32)
    xn = _layer_norm(x, p["norm_g"][0], p["norm_b"][0])
    xhn = _layer_norm(x_hyper, p["norm_h_g"][0], p["norm_h_b"][0])
    q = xhn @ f32(p["wq"]) + p["bq"][0]
    k = xn @ f32(p["wk"]) + p["bk"][0]
    v = xn @ f32(p["wv"]) + p["bv"][0]

    def split(t):
        B, S, _ = t.shape
        return t.reshape(B, S, num_heads, d).transpose(0, 2, 1, 3)

    qh, kh, vh = split(q), split(k), split(v)
    s = jnp.einsum("bhqd,bhkd->bhqk", qh, kh) / jnp.sqrt(jnp.float32(d))
    a = jax.nn.softmax(s, axis=-1)
    ctx = jnp.einsum("bhqk,bhkd->bhqd", a, vh)
    B, H, Sq, dd = ctx.shape
    ctx = ctx.transpose(0, 2, 1, 3).reshape(B, Sq, H * dd)
    return ctx @ f32(p["wfc"]) + p["bfc"][0]


def _ref_ffn(x, p):
    f32 = lambda w: w.astype(jnp.float32)
    xn = _layer_norm(x, p["norm_g"][0], p["norm_b"][0])
    h = jnp.maximum(xn @ f32(p["w1"]) + p["b1"][0], 0.0)
    return h @ f32(p["w2"]) + p["b2"][0]


def reference(x, x_hyper, blocks, *, num_heads):
    for p in blocks:
        x = x + _ref_attention_layer(x, x_hyper, p["attn"], num_heads)
        x = x + _ref_ffn(x, p["ffn"])
    return x


# ----------------------------------------------------------------------------- test harness

if __name__ == "__main__":
    B, S, D, H, DEPTH = 2, 32, 128, 8, 1   # lane-dense D; S == Sh (required by the residual)

    key = jax.random.PRNGKey(0)
    kx, kxh, kp = jax.random.split(key, 3)
    x = jax.random.normal(kx, (B, S, D), jnp.float32)
    x_hyper = jax.random.normal(kxh, (B, S, D), jnp.float32)
    blocks = init_params(kp, D, depth=DEPTH)

    # Small tiles so the online-softmax / multi-tile path (nq=2, nk=2) is exercised.
    out = attention_forward(x, x_hyper, blocks, num_heads=H, tq=16, tk=16, tr=16)
    out = jax.block_until_ready(out)

    ref = reference(x, x_hyper, blocks, num_heads=H)
    assert out.shape == (B, S, D)
    max_err = float(jnp.max(jnp.abs(out - ref)))
    assert jnp.allclose(out, ref, atol=1e-2, rtol=1e-2), \
        f"mismatch vs reference, max_abs_err={max_err}"

    print("KERNEL_OK")
</pallas_src>

<mosaic_0001>
module attributes {stable_mosaic.version = 11 : i64} {
  func.func @_attn_kernel(%arg0: i32, %arg1: i32, %arg2: i32, %arg3: memref<1x16x128xf32, #tpu.memory_space<vmem>>, %arg4: memref<1x16x128xf32, #tpu.memory_space<vmem>>, %arg5: memref<1x16x128xf32, #tpu.memory_space<vmem>>, %arg6: memref<1x128xf32, #tpu.memory_space<vmem>>, %arg7: memref<1x128xf32, #tpu.memory_space<vmem>>, %arg8: memref<1x128xf32, #tpu.memory_space<vmem>>, %arg9: memref<1x128xf32, #tpu.memory_space<vmem>>, %arg10: memref<128x128xbf16, #tpu.memory_space<vmem>>, %arg11: memref<1x128xf32, #tpu.memory_space<vmem>>, %arg12: memref<128x128xbf16, #tpu.memory_space<vmem>>, %arg13: memref<1x128xf32, #tpu.memory_space<vmem>>, %arg14: memref<128x128xbf16, #tpu.memory_space<vmem>>, %arg15: memref<1x128xf32, #tpu.memory_space<vmem>>, %arg16: memref<8x16x128xbf16, #tpu.memory_space<vmem>>, %arg17: memref<1x128xf32, #tpu.memory_space<vmem>>, %arg18: memref<1x16x128xf32, #tpu.memory_space<vmem>>, %arg19: memref<16x8x16xbf16, #tpu.memory_space<vmem>>, %arg20: memref<8x16x1xf32, #tpu.memory_space<vmem>>, %arg21: memref<8x16x1xf32, #tpu.memory_space<vmem>>, %arg22: memref<8x16x16xf32, #tpu.memory_space<vmem>>) attributes {dimension_semantics = [#tpu.dimension_semantics<parallel>, #tpu.dimension_semantics<parallel>, #tpu.dimension_semantics<arbitrary>], iteration_bounds = array<i64: 2, 2, 2>, scalar_prefetch = 0 : i64, scratch_operands = 4 : i64, tpu.core_type = #tpu.core_type<tc>, window_params = [{transform_indices = @transform_0, window_bounds = array<i64: 1, 16, 128>}, {transform_indices = @transform_1, window_bounds = array<i64: 1, 16, 128>}, {transform_indices = @transform_2, window_bounds = array<i64: 1, 16, 128>}, {pipeline_mode = #tpu.pipeline_mode<synchronous>, transform_indices = @transform_3, window_bounds = array<i64: 1, 128>}, {pipeline_mode = #tpu.pipeline_mode<synchronous>, transform_indices = @transform_4, window_bounds = array<i64: 1, 128>}, {pipeline_mode = #tpu.pipeline_mode<synchronous>, transform_indices = @transform_5, window_bounds = array<i64: 1, 128>}, {pipeline_mode = #tpu.pipeline_mode<synchronous>, transform_indices = @transform_6, window_bounds = array<i64: 1, 128>}, {pipeline_mode = #tpu.pipeline_mode<synchronous>, transform_indices = @transform_7, window_bounds = array<i64: 128, 128>}, {pipeline_mode = #tpu.pipeline_mode<synchronous>, transform_indices = @transform_8, window_bounds = array<i64: 1, 128>}, {pipeline_mode = #tpu.pipeline_mode<synchronous>, transform_indices = @transform_9, window_bounds = array<i64: 128, 128>}, {pipeline_mode = #tpu.pipeline_mode<synchronous>, transform_indices = @transform_10, window_bounds = array<i64: 1, 128>}, {pipeline_mode = #tpu.pipeline_mode<synchronous>, transform_indices = @transform_11, window_bounds = array<i64: 128, 128>}, {pipeline_mode = #tpu.pipeline_mode<synchronous>, transform_indices = @transform_12, window_bounds = array<i64: 1, 128>}, {pipeline_mode = #tpu.pipeline_mode<synchronous>, transform_indices = @transform_13, window_bounds = array<i64: 8, 16, 128>}, {pipeline_mode = #tpu.pipeline_mode<synchronous>, transform_indices = @transform_14, window_bounds = array<i64: 1, 128>}, {transform_indices = @transform_15, window_bounds = array<i64: 1, 16, 128>}]} {
    %c0_i32 = arith.constant 0 : i32
    %0 = arith.cmpi eq, %arg2, %c0_i32 : i32
    %1 = arith.extui %0 : i1 to i32
    %c0_i32_0 = arith.constant 0 : i32
    %2 = arith.cmpi ne, %1, %c0_i32_0 : i32
    scf.if %2 {
      %c0_47 = arith.constant 0 : index
      %c0_48 = arith.constant 0 : index
      %c0_49 = arith.constant 0 : index
      %80 = vector.load %arg3[%c0_47, %c0_48, %c0_49] : memref<1x16x128xf32, #tpu.memory_space<vmem>>, vector<1x16x128xf32>
      %81 = vector.shape_cast %80 : vector<1x16x128xf32> to vector<16x128xf32>
      %c0_50 = arith.constant 0 : index
      %c0_51 = arith.constant 0 : index
      %82 = vector.load %arg6[%c0_50, %c0_51] : memref<1x128xf32, #tpu.memory_space<vmem>>, vector<1x128xf32>
      %83 = vector.shape_cast %82 : vector<1x128xf32> to vector<128xf32>
      %c0_52 = arith.constant 0 : index
      %c0_53 = arith.constant 0 : index
      %84 = vector.load %arg7[%c0_52, %c0_53] : memref<1x128xf32, #tpu.memory_space<vmem>>, vector<1x128xf32>
      %85 = vector.shape_cast %84 : vector<1x128xf32> to vector<128xf32>
      %cst_54 = arith.constant dense<0.000000e+00> : vector<16xf32>
      %86 = vector.multi_reduction <add>, %81, %cst_54 [1] : vector<16x128xf32> to vector<16xf32>
      %87 = vector.shape_cast %86 : vector<16xf32> to vector<16x1xf32>
      %cst_55 = arith.constant 1.280000e+02 : f32
      %88 = vector.broadcast %cst_55 : f32 to vector<16x1xf32>
      %89 = arith.divf %87, %88 : vector<16x1xf32>
      %90 = vector.broadcast %89 : vector<16x1xf32> to vector<16x128xf32>
      %91 = arith.subf %81, %90 : vector<16x128xf32>
      %92 = arith.mulf %91, %91 : vector<16x128xf32>
      %cst_56 = arith.constant dense<0.000000e+00> : vector<16xf32>
      %93 = vector.multi_reduction <add>, %92, %cst_56 [1] : vector<16x128xf32> to vector<16xf32>
      %94 = vector.shape_cast %93 : vector<16xf32> to vector<16x1xf32>
      %cst_57 = arith.constant 1.280000e+02 : f32
      %95 = vector.broadcast %cst_57 : f32 to vector<16x1xf32>
      %96 = arith.divf %94, %95 : vector<16x1xf32>
      %97 = vector.broadcast %89 : vector<16x1xf32> to vector<16x128xf32>
      %98 = arith.subf %81, %97 : vector<16x128xf32>
      %cst_58 = arith.constant 9.99999974E-6 : f32
      %99 = vector.broadcast %cst_58 : f32 to vector<16x1xf32>
      %100 = arith.addf %96, %99 : vector<16x1xf32>
      %101 = math.rsqrt %100 : vector<16x1xf32>
      %102 = vector.broadcast %101 : vector<16x1xf32> to vector<16x128xf32>
      %103 = arith.mulf %98, %102 : vector<16x128xf32>
      %104 = vector.shape_cast %83 : vector<128xf32> to vector<1x128xf32>
      %105 = vector.broadcast %104 : vector<1x128xf32> to vector<16x128xf32>
      %106 = arith.mulf %103, %105 : vector<16x128xf32>
      %107 = vector.shape_cast %85 : vector<128xf32> to vector<1x128xf32>
      %108 = vector.broadcast %107 : vector<1x128xf32> to vector<16x128xf32>
      %109 = arith.addf %106, %108 : vector<16x128xf32>
      %110 = arith.truncf %109 : vector<16x128xf32> to vector<16x128xbf16>
      %c0_59 = arith.constant 0 : index
      %c0_60 = arith.constant 0 : index
      %111 = vector.load %arg10[%c0_59, %c0_60] : memref<128x128xbf16, #tpu.memory_space<vmem>>, vector<128x128xbf16>
      %cst_61 = arith.constant dense<0.000000e+00> : vector<16x128xf32>
      %112 = tpu.matmul %110, %111, %cst_61 {dimension_numbers = #tpu.dot_dimension_numbers<[1], [0], [0], [1], [0, 0, 1, 1], [], []>} : vector<16x128xbf16>, vector<128x128xbf16>, vector<16x128xf32> -> vector<16x128xf32>
      %c0_62 = arith.constant 0 : index
      %c0_63 = arith.constant 0 : index
      %113 = vector.load %arg11[%c0_62, %c0_63] : memref<1x128xf32, #tpu.memory_space<vmem>>, vector<1x128xf32>
      %114 = vector.shape_cast %113 : vector<1x128xf32> to vector<128xf32>
      %115 = vector.shape_cast %114 : vector<128xf32> to vector<1x128xf32>
      %116 = vector.broadcast %115 : vector<1x128xf32> to vector<16x128xf32>
      %117 = arith.addf %112, %116 : vector<16x128xf32>
      %cst_64 = arith.constant 2.500000e-01 : f32
      %118 = vector.broadcast %cst_64 : f32 to vector<16x128xf32>
      %119 = arith.mulf %117, %118 : vector<16x128xf32>
      %120 = vector.shape_cast %119 : vector<16x128xf32> to vector<16x8x16xf32>
      %121 = arith.truncf %120 : vector<16x8x16xf32> to vector<16x8x16xbf16>
      %c0_65 = arith.constant 0 : index
      %c0_66 = arith.constant 0 : index
      %c0_67 = arith.constant 0 : index
      %122 = vector.load %arg19[%c0_65, %c0_66, %c0_67] : memref<16x8x16xbf16, #tpu.memory_space<vmem>>, vector<16x8x16xbf16>
      tpu.vector_store %arg19[%c0_65, %c0_66, %c0_67], %121 {strides = array<i32>} : memref<16x8x16xbf16, #tpu.memory_space<vmem>>, vector<16x8x16xbf16>,
      %cst_68 = arith.constant 0xFF800000 : f32
      %123 = vector.broadcast %cst_68 : f32 to vector<8x16x1xf32>
      %c0_69 = arith.constant 0 : index
      %c0_70 = arith.constant 0 : index
      %c0_71 = arith.constant 0 : index
      %124 = vector.load %arg20[%c0_69, %c0_70, %c0_71] : memref<8x16x1xf32, #tpu.memory_space<vmem>>, vector<8x16x1xf32>
      tpu.vector_store %arg20[%c0_69, %c0_70, %c0_71], %123 {strides = array<i32>} : memref<8x16x1xf32, #tpu.memory_space<vmem>>, vector<8x16x1xf32>,
      %cst_72 = arith.constant 0.000000e+00 : f32
      %125 = vector.broadcast %cst_72 : f32 to vector<8x16x1xf32>
      %c0_73 = arith.constant 0 : index
      %c0_74 = arith.constant 0 : index
      %c0_75 = arith.constant 0 : index
      %126 = vector.load %arg21[%c0_73, %c0_74, %c0_75] : memref<8x16x1xf32, #tpu.memory_space<vmem>>, vector<8x16x1xf32>
      tpu.vector_store %arg21[%c0_73, %c0_74, %c0_75], %125 {strides = array<i32>} : memref<8x16x1xf32, #tpu.memory_space<vmem>>, vector<8x16x1xf32>,
      %cst_76 = arith.constant 0.000000e+00 : f32
      %127 = vector.broadcast %cst_76 : f32 to vector<8x16x16xf32>
      %c0_77 = arith.constant 0 : index
      %c0_78 = arith.constant 0 : index
      %c0_79 = arith.constant 0 : index
      %128 = vector.load %arg22[%c0_77, %c0_78, %c0_79] : memref<8x16x16xf32, #tpu.memory_space<vmem>>, vector<8x16x16xf32>
      tpu.vector_store %arg22[%c0_77, %c0_78, %c0_79], %127 {strides = array<i32>} : memref<8x16x16xf32, #tpu.memory_space<vmem>>, vector<8x16x16xf32>,
    } else {
    }
    %c0 = arith.constant 0 : index
    %c0_1 = arith.constant 0 : index
    %c0_2 = arith.constant 0 : index
    %3 = vector.load %arg4[%c0, %c0_1, %c0_2] : memref<1x16x128xf32, #tpu.memory_space<vmem>>, vector<1x16x128xf32>
    %4 = vector.shape_cast %3 : vector<1x16x128xf32> to vector<16x128xf32>
    %c0_3 = arith.constant 0 : index
    %c0_4 = arith.constant 0 : index
    %5 = vector.load %arg8[%c0_3, %c0_4] : memref<1x128xf32, #tpu.memory_space<vmem>>, vector<1x128xf32>
    %6 = vector.shape_cast %5 : vector<1x128xf32> to vector<128xf32>
    %c0_5 = arith.constant 0 : index
    %c0_6 = arith.constant 0 : index
    %7 = vector.load %arg9[%c0_5, %c0_6] : memref<1x128xf32, #tpu.memory_space<vmem>>, vector<1x128xf32>
    %8 = vector.shape_cast %7 : vector<1x128xf32> to vector<128xf32>
    %cst = arith.constant dense<0.000000e+00> : vector<16xf32>
    %9 = vector.multi_reduction <add>, %4, %cst [1] : vector<16x128xf32> to vector<16xf32>
    %10 = vector.shape_cast %9 : vector<16xf32> to vector<16x1xf32>
    %cst_7 = arith.constant 1.280000e+02 : f32
    %11 = vector.broadcast %cst_7 : f32 to vector<16x1xf32>
    %12 = arith.divf %10, %11 : vector<16x1xf32>
    %13 = vector.broadcast %12 : vector<16x1xf32> to vector<16x128xf32>
    %14 = arith.subf %4, %13 : vector<16x128xf32>
    %15 = arith.mulf %14, %14 : vector<16x128xf32>
    %cst_8 = arith.constant dense<0.000000e+00> : vector<16xf32>
    %16 = vector.multi_reduction <add>, %15, %cst_8 [1] : vector<16x128xf32> to vector<16xf32>
    %17 = vector.shape_cast %16 : vector<16xf32> to vector<16x1xf32>
    %cst_9 = arith.constant 1.280000e+02 : f32
    %18 = vector.broadcast %cst_9 : f32 to vector<16x1xf32>
    %19 = arith.divf %17, %18 : vector<16x1xf32>
    %20 = vector.broadcast %12 : vector<16x1xf32> to vector<16x128xf32>
    %21 = arith.subf %4, %20 : vector<16x128xf32>
    %cst_10 = arith.constant 9.99999974E-6 : f32
    %22 = vector.broadcast %cst_10 : f32 to vector<16x1xf32>
    %23 = arith.addf %19, %22 : vector<16x1xf32>
    %24 = math.rsqrt %23 : vector<16x1xf32>
    %25 = vector.broadcast %24 : vector<16x1xf32> to vector<16x128xf32>
    %26 = arith.mulf %21, %25 : vector<16x128xf32>
    %27 = vector.shape_cast %6 : vector<128xf32> to vector<1x128xf32>
    %28 = vector.broadcast %27 : vector<1x128xf32> to vector<16x128xf32>
    %29 = arith.mulf %26, %28 : vector<16x128xf32>
    %30 = vector.shape_cast %8 : vector<128xf32> to vector<1x128xf32>
    %31 = vector.broadcast %30 : vector<1x128xf32> to vector<16x128xf32>
    %32 = arith.addf %29, %31 : vector<16x128xf32>
    %33 = arith.truncf %32 : vector<16x128xf32> to vector<16x128xbf16>
    %c0_11 = arith.constant 0 : index
    %c0_12 = arith.constant 0 : index
    %34 = vector.load %arg12[%c0_11, %c0_12] : memref<128x128xbf16, #tpu.memory_space<vmem>>, vector<128x128xbf16>
    %cst_13 = arith.constant dense<0.000000e+00> : vector<16x128xf32>
    %35 = tpu.matmul %33, %34, %cst_13 {dimension_numbers = #tpu.dot_dimension_numbers<[1], [0], [0], [1], [0, 0, 1, 1], [], []>} : vector<16x128xbf16>, vector<128x128xbf16>, vector<16x128xf32> -> vector<16x128xf32>
    %c0_14 = arith.constant 0 : index
    %c0_15 = arith.constant 0 : index
    %36 = vector.load %arg13[%c0_14, %c0_15] : memref<1x128xf32, #tpu.memory_space<vmem>>, vector<1x128xf32>
    %37 = vector.shape_cast %36 : vector<1x128xf32> to vector<128xf32>
    %38 = vector.shape_cast %37 : vector<128xf32> to vector<1x128xf32>
    %39 = vector.broadcast %38 : vector<1x128xf32> to vector<16x128xf32>
    %40 = arith.addf %35, %39 : vector<16x128xf32>
    %c0_16 = arith.constant 0 : index
    %c0_17 = arith.constant 0 : index
    %41 = vector.load %arg14[%c0_16, %c0_17] : memref<128x128xbf16, #tpu.memory_space<vmem>>, vector<128x128xbf16>
    %cst_18 = arith.constant dense<0.000000e+00> : vector<16x128xf32>
    %42 = tpu.matmul %33, %41, %cst_18 {dimension_numbers = #tpu.dot_dimension_numbers<[1], [0], [0], [1], [0, 0, 1, 1], [], []>} : vector<16x128xbf16>, vector<128x128xbf16>, vector<16x128xf32> -> vector<16x128xf32>
    %c0_19 = arith.constant 0 : index
    %c0_20 = arith.constant 0 : index
    %43 = vector.load %arg15[%c0_19, %c0_20] : memref<1x128xf32, #tpu.memory_space<vmem>>, vector<1x128xf32>
    %44 = vector.shape_cast %43 : vector<1x128xf32> to vector<128xf32>
    %45 = vector.shape_cast %44 : vector<128xf32> to vector<1x128xf32>
    %46 = vector.broadcast %45 : vector<1x128xf32> to vector<16x128xf32>
    %47 = arith.addf %42, %46 : vector<16x128xf32>
    %48 = vector.shape_cast %40 : vector<16x128xf32> to vector<16x8x16xf32>
    %49 = arith.truncf %48 : vector<16x8x16xf32> to vector<16x8x16xbf16>
    %50 = vector.shape_cast %47 : vector<16x128xf32> to vector<16x8x16xf32>
    %51 = arith.truncf %50 : vector<16x8x16xf32> to vector<16x8x16xbf16>
    %c0_21 = arith.constant 0 : index
    %c0_22 = arith.constant 0 : index
    %c0_23 = arith.constant 0 : index
    %52 = vector.load %arg19[%c0_21, %c0_22, %c0_23] : memref<16x8x16xbf16, #tpu.memory_space<vmem>>, vector<16x8x16xbf16>
    "tpu.trace_start"() <{level = 10 : i32, message = "qhd,khd->hqk"}> : () -> ()
    %cst_24 = arith.constant dense<0.000000e+00> : vector<8x16x16xf32>
    %53 = tpu.matmul %52, %49, %cst_24 {dimension_numbers = #tpu.dot_dimension_numbers<[2], [2], [0], [0], [0, 1, 0, 0, 1, 0], [1], [1]>} : vector<16x8x16xbf16>, vector<16x8x16xbf16>, vector<8x16x16xf32> -> vector<8x16x16xf32>
    "tpu.trace_stop"() : () -> ()
    %c0_25 = arith.constant 0 : index
    %c0_26 = arith.constant 0 : index
    %c0_27 = arith.constant 0 : index
    %54 = vector.load %arg20[%c0_25, %c0_26, %c0_27] : memref<8x16x1xf32, #tpu.memory_space<vmem>>, vector<8x16x1xf32>
    %cst_28 = arith.constant dense<0xFF800000> : vector<8x16xf32>
    %55 = vector.multi_reduction <maximumf>, %53, %cst_28 [2] : vector<8x16x16xf32> to vector<8x16xf32>
    %56 = vector.shape_cast %55 : vector<8x16xf32> to vector<8x16x1xf32>
    %57 = arith.maximumf %54, %56 : vector<8x16x1xf32>
    %58 = arith.subf %54, %57 : vector<8x16x1xf32>
    %59 = math.exp %58 : vector<8x16x1xf32>
    %60 = vector.broadcast %57 : vector<8x16x1xf32> to vector<8x16x16xf32>
    %61 = arith.subf %53, %60 : vector<8x16x16xf32>
    %62 = math.exp %61 : vector<8x16x16xf32>
    %c0_29 = arith.constant 0 : index
    %c0_30 = arith.constant 0 : index
    %c0_31 = arith.constant 0 : index
    %63 = vector.load %arg21[%c0_29, %c0_30, %c0_31] : memref<8x16x1xf32, #tpu.memory_space<vmem>>, vector<8x16x1xf32>
    %64 = arith.mulf %59, %63 : vector<8x16x1xf32>
    %cst_32 = arith.constant dense<0.000000e+00> : vector<8x16xf32>
    %65 = vector.multi_reduction <add>, %62, %cst_32 [2] : vector<8x16x16xf32> to vector<8x16xf32>
    %66 = vector.shape_cast %65 : vector<8x16xf32> to vector<8x16x1xf32>
    %67 = arith.addf %64, %66 : vector<8x16x1xf32>
    %c0_33 = arith.constant 0 : index
    %c0_34 = arith.constant 0 : index
    %c0_35 = arith.constant 0 : index
    %68 = vector.load %arg21[%c0_33, %c0_34, %c0_35] : memref<8x16x1xf32, #tpu.memory_space<vmem>>, vector<8x16x1xf32>
    tpu.vector_store %arg21[%c0_33, %c0_34, %c0_35], %67 {strides = array<i32>} : memref<8x16x1xf32, #tpu.memory_space<vmem>>, vector<8x16x1xf32>,
    %c0_36 = arith.constant 0 : index
    %c0_37 = arith.constant 0 : index
    %c0_38 = arith.constant 0 : index
    %69 = vector.load %arg22[%c0_36, %c0_37, %c0_38] : memref<8x16x16xf32, #tpu.memory_space<vmem>>, vector<8x16x16xf32>
    %70 = vector.broadcast %59 : vector<8x16x1xf32> to vector<8x16x16xf32>
    %71 = arith.mulf %70, %69 : vector<8x16x16xf32>
    %72 = arith.truncf %62 : vector<8x16x16xf32> to vector<8x16x16xbf16>
    "tpu.trace_start"() <{level = 10 : i32, message = "hqk,khd->hqd"}> : () -> ()
    %cst_39 = arith.constant dense<0.000000e+00> : vector<8x16x16xf32>
    %73 = tpu.matmul %72, %51, %cst_39 {dimension_numbers = #tpu.dot_dimension_numbers<[2], [0], [1], [2], [0, 0, 0, 1, 1, 2], [0], [1]>} : vector<8x16x16xbf16>, vector<16x8x16xbf16>, vector<8x16x16xf32> -> vector<8x16x16xf32>
    "tpu.trace_stop"() : () -> ()
    %74 = arith.addf %71, %73 : vector<8x16x16xf32>
    %c0_40 = arith.constant 0 : index
    %c0_41 = arith.constant 0 : index
    %c0_42 = arith.constant 0 : index
    %75 = vector.load %arg22[%c0_40, %c0_41, %c0_42] : memref<8x16x16xf32, #tpu.memory_space<vmem>>, vector<8x16x16xf32>
    tpu.vector_store %arg22[%c0_40, %c0_41, %c0_42], %74 {strides = array<i32>} : memref<8x16x16xf32, #tpu.memory_space<vmem>>, vector<8x16x16xf32>,
    %c0_43 = arith.constant 0 : index
    %c0_44 = arith.constant 0 : index
    %c0_45 = arith.constant 0 : index
    %76 = vector.load %arg20[%c0_43, %c0_44, %c0_45] : memref<8x16x1xf32, #tpu.memory_space<vmem>>, vector<8x16x1xf32>
    tpu.vector_store %arg20[%c0_43, %c0_44, %c0_45], %57 {strides = array<i32>} : memref<8x16x1xf32, #tpu.memory_space<vmem>>, vector<8x16x1xf32>,
    %c1_i32 = arith.constant 1 : i32
    %77 = arith.cmpi eq, %arg2, %c1_i32 : i32
    %78 = arith.extui %77 : i1 to i32
    %c0_i32_46 = arith.constant 0 : i32
    %79 = arith.cmpi ne, %78, %c0_i32_46 : i32
    scf.if %79 {
      %c0_47 = arith.constant 0 : index
      %c0_48 = arith.constant 0 : index
      %c0_49 = arith.constant 0 : index
      %80 = vector.load %arg21[%c0_47, %c0_48, %c0_49] : memref<8x16x1xf32, #tpu.memory_space<vmem>>, vector<8x16x1xf32>
      %81 = tpu.reciprocal %80 {approx = true} : vector<8x16x1xf32> -> vector<8x16x1xf32>
      %c0_50 = arith.constant 0 : index
      %c0_51 = arith.constant 0 : index
      %c0_52 = arith.constant 0 : index
      %82 = vector.load %arg22[%c0_50, %c0_51, %c0_52] : memref<8x16x16xf32, #tpu.memory_space<vmem>>, vector<8x16x16xf32>
      %83 = vector.broadcast %81 : vector<8x16x1xf32> to vector<8x16x16xf32>
      %84 = arith.mulf %82, %83 : vector<8x16x16xf32>
      %85 = arith.truncf %84 : vector<8x16x16xf32> to vector<8x16x16xbf16>
      %c0_53 = arith.constant 0 : index
      %c0_54 = arith.constant 0 : index
      %c0_55 = arith.constant 0 : index
      %86 = vector.load %arg16[%c0_53, %c0_54, %c0_55] : memref<8x16x128xbf16, #tpu.memory_space<vmem>>, vector<8x16x128xbf16>
      "tpu.trace_start"() <{level = 10 : i32, message = "hqd,hdo->hqo"}> : () -> ()
      %cst_56 = arith.constant dense<0.000000e+00> : vector<8x16x128xf32>
      %87 = tpu.matmul %85, %86, %cst_56 {dimension_numbers = #tpu.dot_dimension_numbers<[2], [1], [1], [2], [0, 0, 0, 1, 1, 2], [0], [0]>} : vector<8x16x16xbf16>, vector<8x16x128xbf16>, vector<8x16x128xf32> -> vector<8x16x128xf32>
      "tpu.trace_stop"() : () -> ()
      %cst_57 = arith.constant dense<0.000000e+00> : vector<16x128xf32>
      %88 = vector.multi_reduction <add>, %87, %cst_57 [0] : vector<8x16x128xf32> to vector<16x128xf32>
      %c0_58 = arith.constant 0 : index
      %c0_59 = arith.constant 0 : index
      %89 = vector.load %arg17[%c0_58, %c0_59] : memref<1x128xf32, #tpu.memory_space<vmem>>, vector<1x128xf32>
      %90 = vector.shape_cast %89 : vector<1x128xf32> to vector<128xf32>
      %91 = vector.shape_cast %90 : vector<128xf32> to vector<1x128xf32>
      %92 = vector.broadcast %91 : vector<1x128xf32> to vector<16x128xf32>
      %93 = arith.addf %88, %92 : vector<16x128xf32>
      %c0_60 = arith.constant 0 : index
      %c0_61 = arith.constant 0 : index
      %c0_62 = arith.constant 0 : index
      %94 = vector.load %arg5[%c0_60, %c0_61, %c0_62] : memref<1x16x128xf32, #tpu.memory_space<vmem>>, vector<1x16x128xf32>
      %95 = vector.shape_cast %94 : vector<1x16x128xf32> to vector<16x128xf32>
      %96 = arith.addf %93, %95 : vector<16x128xf32>
      %c0_63 = arith.constant 0 : index
      %c0_64 = arith.constant 0 : index
      %c0_65 = arith.constant 0 : index
      %97 = vector.load %arg18[%c0_63, %c0_64, %c0_65] : memref<1x16x128xf32, #tpu.memory_space<vmem>>, vector<1x16x128xf32>
      %98 = vector.shape_cast %97 : vector<1x16x128xf32> to vector<16x128xf32>
      %99 = vector.shape_cast %96 : vector<16x128xf32> to vector<1x16x128xf32>
      tpu.vector_store %arg18[%c0_63, %c0_64, %c0_65], %99 {strides = array<i32>} : memref<1x16x128xf32, #tpu.memory_space<vmem>>, vector<1x16x128xf32>,
    } else {
    }
    return
  }
  func.func @transform_0(%arg0: i32, %arg1: i32, %arg2: i32) -> (i32, i32, i32) {
    %c0_i32 = arith.constant 0 : i32
    %c0_i32_0 = arith.constant 0 : i32
    return %arg0, %arg1, %c0_i32 : i32, i32, i32
  }
  func.func @transform_1(%arg0: i32, %arg1: i32, %arg2: i32) -> (i32, i32, i32) {
    %c0_i32 = arith.constant 0 : i32
    %c0_i32_0 = arith.constant 0 : i32
    return %arg0, %arg2, %c0_i32 : i32, i32, i32
  }
  func.func @transform_2(%arg0: i32, %arg1: i32, %arg2: i32) -> (i32, i32, i32) {
    %c0_i32 = arith.constant 0 : i32
    %c0_i32_0 = arith.constant 0 : i32
    return %arg0, %arg1, %c0_i32 : i32, i32, i32
  }
  func.func @transform_3(%arg0: i32, %arg1: i32, %arg2: i32) -> (i32, i32) {
    %c0_i32 = arith.constant 0 : i32
    %c0_i32_0 = arith.constant 0 : i32
    %c0_i32_1 = arith.constant 0 : i32
    return %c0_i32, %c0_i32_0 : i32, i32
  }
  func.func @transform_4(%arg0: i32, %arg1: i32, %arg2: i32) -> (i32, i32) {
    %c0_i32 = arith.constant 0 : i32
    %c0_i32_0 = arith.constant 0 : i32
    %c0_i32_1 = arith.constant 0 : i32
    return %c0_i32, %c0_i32_0 : i32, i32
  }
  func.func @transform_5(%arg0: i32, %arg1: i32, %arg2: i32) -> (i32, i32) {
    %c0_i32 = arith.constant 0 : i32
    %c0_i32_0 = arith.constant 0 : i32
    %c0_i32_1 = arith.constant 0 : i32
    return %c0_i32, %c0_i32_0 : i32, i32
  }
  func.func @transform_6(%arg0: i32, %arg1: i32, %arg2: i32) -> (i32, i32) {
    %c0_i32 = arith.constant 0 : i32
    %c0_i32_0 = arith.constant 0 : i32
    %c0_i32_1 = arith.constant 0 : i32
    return %c0_i32, %c0_i32_0 : i32, i32
  }
  func.func @transform_7(%arg0: i32, %arg1: i32, %arg2: i32) -> (i32, i32) {
    %c0_i32 = arith.constant 0 : i32
    %c0_i32_0 = arith.constant 0 : i32
    %c0_i32_1 = arith.constant 0 : i32
    return %c0_i32, %c0_i32_0 : i32, i32
  }
  func.func @transform_8(%arg0: i32, %arg1: i32, %arg2: i32) -> (i32, i32) {
    %c0_i32 = arith.constant 0 : i32
    %c0_i32_0 = arith.constant 0 : i32
    %c0_i32_1 = arith.constant 0 : i32
    return %c0_i32, %c0_i32_0 : i32, i32
  }
  func.func @transform_9(%arg0: i32, %arg1: i32, %arg2: i32) -> (i32, i32) {
    %c0_i32 = arith.constant 0 : i32
    %c0_i32_0 = arith.constant 0 : i32
    %c0_i32_1 = arith.constant 0 : i32
    return %c0_i32, %c0_i32_0 : i32, i32
  }
  func.func @transform_10(%arg0: i32, %arg1: i32, %arg2: i32) -> (i32, i32) {
    %c0_i32 = arith.constant 0 : i32
    %c0_i32_0 = arith.constant 0 : i32
    %c0_i32_1 = arith.constant 0 : i32
    return %c0_i32, %c0_i32_0 : i32, i32
  }
  func.func @transform_11(%arg0: i32, %arg1: i32, %arg2: i32) -> (i32, i32) {
    %c0_i32 = arith.constant 0 : i32
    %c0_i32_0 = arith.constant 0 : i32
    %c0_i32_1 = arith.constant 0 : i32
    return %c0_i32, %c0_i32_0 : i32, i32
  }
  func.func @transform_12(%arg0: i32, %arg1: i32, %arg2: i32) -> (i32, i32) {
    %c0_i32 = arith.constant 0 : i32
    %c0_i32_0 = arith.constant 0 : i32
    %c0_i32_1 = arith.constant 0 : i32
    return %c0_i32, %c0_i32_0 : i32, i32
  }
  func.func @transform_13(%arg0: i32, %arg1: i32, %arg2: i32) -> (i32, i32, i32) {
    %c0_i32 = arith.constant 0 : i32
    %c0_i32_0 = arith.constant 0 : i32
    %c0_i32_1 = arith.constant 0 : i32
    %c0_i32_2 = arith.constant 0 : i32
    return %c0_i32, %c0_i32_0, %c0_i32_1 : i32, i32, i32
  }
  func.func @transform_14(%arg0: i32, %arg1: i32, %arg2: i32) -> (i32, i32) {
    %c0_i32 = arith.constant 0 : i32
    %c0_i32_0 = arith.constant 0 : i32
    %c0_i32_1 = arith.constant 0 : i32
    return %c0_i32, %c0_i32_0 : i32, i32
  }
  func.func @transform_15(%arg0: i32, %arg1: i32, %arg2: i32) -> (i32, i32, i32) {
    %c0_i32 = arith.constant 0 : i32
    %c0_i32_0 = arith.constant 0 : i32
    return %arg0, %arg1, %c0_i32 : i32, i32, i32
  }
}

</mosaic_0001>

<llo_original>
// kernel: tpu_custom_call.1
$region0: #{tpu_custom_call.1}
  #allocation0 [shape = 'u32[]', space=smem, size = 0x4, offset = 0x4, fixed_abs, tag = 'smem constant byte address 0x4 - core index']
  #allocation1 [shape = 'u32[144,128]{1,0:T(1,128)}', space=vmem, size = 0x12000, scoped, tag = 'internal scratch']
  #allocation2 [shape = 'bf16[16,8,16]{2,1,0:T(8,128)(2,1)}', space=vmem, size = 0x8000, scoped, tag = 'scratch operand']
  #allocation3 [shape = 'f32[8,16,1]{2,1,0:T(8,128)}', space=vmem, size = 0x10000, scoped, tag = 'scratch operand']
  #allocation4 [shape = 'f32[8,16,1]{2,1,0:T(8,128)}', space=vmem, size = 0x10000, scoped, tag = 'scratch operand']
  #allocation5 [shape = 'f32[8,16,16]{2,1,0:T(8,128)}', space=vmem, size = 0x10000, scoped, tag = 'scratch operand']
  %s0 = inlined_call_operand.hbm [shape: f32[2,32,128], index: 0, kind: input, shape index: {}]
  %s1 = inlined_call_operand.hbm [shape: f32[2,32,128], index: 1, kind: input, shape index: {}]
  %s2 = inlined_call_operand.hbm [shape: f32[2,32,128], index: 2, kind: input, shape index: {}]
  %s3 = inlined_call_operand.vmem [shape: f32[1,128], index: 3, kind: input, shape index: {}]
  %s4 = inlined_call_operand.vmem [shape: f32[1,128], index: 4, kind: input, shape index: {}]
  %s5 = inlined_call_operand.vmem [shape: f32[1,128], index: 5, kind: input, shape index: {}]
  %s6 = inlined_call_operand.vmem [shape: f32[1,128], index: 6, kind: input, shape index: {}]
  %s7 = inlined_call_operand.hbm [shape: bf16[128,128], index: 7, kind: input, shape index: {}]
  %s8 = inlined_call_operand.vmem [shape: f32[1,128], index: 8, kind: input, shape index: {}]
  %s9 = inlined_call_operand.hbm [shape: bf16[128,128], index: 9, kind: input, shape index: {}]
  %s10 = inlined_call_operand.vmem [shape: f32[1,128], index: 10, kind: input, shape index: {}]
  %s11 = inlined_call_operand.hbm [shape: bf16[128,128], index: 11, kind: input, shape index: {}]
  %s12 = inlined_call_operand.vmem [shape: f32[1,128], index: 12, kind: input, shape index: {}]
  %s13 = inlined_call_operand.hbm [shape: bf16[8,16,128], index: 13, kind: input, shape index: {}]
  %s14 = inlined_call_operand.vmem [shape: f32[1,128], index: 14, kind: input, shape index: {}]
  %s15 = inlined_call_operand.hbm [shape: f32[2,32,128], index: 15, kind: output, shape index: {}]
  %s16 = sld [smem:[#allocation0]]
  $region129: #{tpu_custom_call.1} parent=0
    _
  %s18 = ssub.s32 1, %s16
  %s19 = scalar_select 0, %s18, %s16
  $region1: #{tpu_custom_call.1} parent=0
    #allocation6 [shape = 'u8[16384]{0}', space=vmem, size = 0x4000, scoped, tag = 'input window, operand 0']
    #allocation7 [shape = 's32[2]{0}', space=sflag, size = 0x8, scoped, tag = 'scoped memory for tpu_custom_call.1']
    #allocation8 [shape = 's32[2]{0}', space=sflag, size = 0x8, scoped, tag = 'scoped memory for tpu_custom_call.1']
    #allocation9 [shape = 'u8[16384]{0}', space=vmem, size = 0x4000, scoped, tag = 'input window, operand 1']
    #allocation10 [shape = 's32[2]{0}', space=sflag, size = 0x8, scoped, tag = 'scoped memory for tpu_custom_call.1']
    #allocation11 [shape = 'u8[16384]{0}', space=vmem, size = 0x4000, scoped, tag = 'input window, operand 2']
    #allocation12 [shape = 'u8[32768]{0}', space=vmem, size = 0x8000, scoped, tag = 'input window, operand 7, single buffered']
    #allocation13 [shape = 's32[1]{0}', space=sflag, size = 0x4, scoped, tag = 'scoped memory for tpu_custom_call.1']
    #allocation14 [shape = 'u8[32768]{0}', space=vmem, size = 0x8000, scoped, tag = 'input window, operand 9, single buffered']
    #allocation15 [shape = 'u8[32768]{0}', space=vmem, size = 0x8000, scoped, tag = 'input window, operand 11, single buffered']
    #allocation16 [shape = 's32[1]{0}', space=sflag, size = 0x4, scoped, tag = 'scoped memory for tpu_custom_call.1']
    #allocation17 [shape = 'u8[32768]{0}', space=vmem, size = 0x8000, scoped, tag = 'input window, operand 13, single buffered']
    #allocation18 [shape = 'u8[16384]{0}', space=vmem, size = 0x4000, scoped, tag = 'output window, operand 0']
    %20 = vsyncpa [#allocation7], 0
    %s21 = scalar_lea.sflag [#allocation7], 1
    %22 = vsyncpa %s21, 0
    %23 = vsyncpa [#allocation10], 0
    %s24 = scalar_lea.sflag [#allocation10], 1
    %25 = vsyncpa %s24, 0
    %26 = vsyncpa [#allocation13], 0
    %27 = vsyncpa [#allocation16], 0
    %28 = vsyncpa [#allocation8], 0
    %s29 = scalar_lea.sflag [#allocation8], 1
    %30 = vsyncpa %s29, 0
    loop: start=0, step=1, limit=10
    $region2: #{tpu_custom_call.1} parent=1 // loop_pre_header
      _
    $region3: #{tpu_custom_call.1} parent=1 // loop_header
      %s32 = sphi 0, %s36
      %p33 = scmp.ge.s32.totalorder %s32, 10
      %s39 = sphi 0, %s58
      %s40 = sphi 0, %s54
      %s41 = sphi 0, %s50
      %s42 = sphi 0, %s39
      %s43 = sphi 0, %s40
      %s44 = sphi 0, %s41
      %s45 = sphi 0, %s42
      %s46 = sphi 0, %s43
      %s47 = sphi 0, %s44
      %s63 = sphi 0, %s65
      %s66 = sphi 0, %s63
      %s67 = sphi 0, %s66
      %s83 = sphi 0, %s67
      %s91 = sphi 0, %s93
      %s94 = sphi 0, %s91
      %s95 = sphi 0, %s94
      %s111 = sphi 0, %s95
      %s119 = sphi 0, %s121
      %s122 = sphi 0, %s119
      %s123 = sphi 0, %s122
      %s139 = sphi 0, %s123
      %s143 = sphi 0, %s143
      %s145 = sphi 0, %s143
      %s146 = sphi 0, %s145
      %s160 = sphi 0, %s146
      %s164 = sphi 0, %s164
      %s166 = sphi 0, %s164
      %s167 = sphi 0, %s166
      %s181 = sphi 0, %s167
      %s185 = sphi 0, %s185
      %s187 = sphi 0, %s185
      %s188 = sphi 0, %s187
      %s202 = sphi 0, %s188
      %s206 = sphi 0, %s206
      %s208 = sphi 0, %s206
      %s209 = sphi 0, %s208
      %s223 = sphi 0, %s209
      %s227 = sphi 0, %s227
      %s229 = sphi 0, %s227
      %s230 = sphi 0, %s229
      %s244 = sphi 0, %s230
      %s248 = sphi 0, %s248
      %s250 = sphi 0, %s248
      %s251 = sphi 0, %s250
      %s265 = sphi 0, %s251
      %s269 = sphi 0, %s269
      %s271 = sphi 0, %s269
      %s272 = sphi 0, %s271
      %s286 = sphi 0, %s272
      %s290 = sphi 0, %s290
      %s292 = sphi 0, %s290
      %s293 = sphi 0, %s292
      %s307 = sphi 0, %s293
      %s311 = sphi 0, %s311
      %s313 = sphi 0, %s311
      %s314 = sphi 0, %s313
      %s328 = sphi 0, %s314
      %s332 = sphi 0, %s332
      %s334 = sphi 0, %s332
      %s335 = sphi 0, %s334
      %s349 = sphi 0, %s335
      %s353 = sphi 0, %s353
      %s355 = sphi 0, %s353
      %s356 = sphi 0, %s355
      %s370 = sphi 0, %s356
      %s374 = sphi 0, %s374
      %s376 = sphi 0, %s374
      %s377 = sphi 0, %s376
      %s391 = sphi 0, %s377
      %s399 = sphi 0, %s401
      %s402 = sphi 0, %s399
      %s403 = sphi 0, %s402
      %s419 = sphi 0, %s403
    $region4: #{tpu_custom_call.1} parent=1 // loop_header_branch
      %35 = sbr.rel (%p33) target = $region8
    $region5: #{tpu_custom_call.1} parent=1 // loop_body
      %s37 = ssub.s32 %s32, 1
      %s38 = ssub.s32 %s32, 2
      %s48 = sadd.s32 1, %s41
      %p49 = scmp.ge.s32.totalorder %s48, 2
      %s50 = scalar_select %p49, 0, %s48
      %s51 = sadd.s32 1, %s40
      %s52 = scalar_select %p49, %s51, %s40
      %p53 = scmp.ge.s32.totalorder %s52, 2
      %s54 = scalar_select %p53, 0, %s52
      %s55 = sadd.s32 1, %s39
      %s56 = scalar_select %p53, %s55, %s39
      %p57 = scmp.ge.s32.totalorder %s56, 2
      %s58 = scalar_select %p57, 0, %s56
      %s59 = ssub.s32 %s39, %s58
      %s60 = ssub.s32 %s40, %s54
      %s61 = sor.u32 %s59, %s60
      %p62 = scmp.eq.s32.totalorder %s61, 0
      %s64 = sadd.s32 %s63, 1
      %s65 = scalar_select %p62, %s63, %s64
      %p68 = pneg %p62
      %p69 = scmp.eq.s32.totalorder %s32, 7
      %p70 = por %p68, %p69
      %p71 = scmp.ne.s32.totalorder %s63, %s66
      %p72 = scmp.eq.s32.totalorder %s32, 0
      %p73 = por %p71, %p72
      %p74 = scmp.ne.s32.totalorder %s63, %s66
      %p75 = scmp.eq.s32.totalorder %s37, 7
      %p76 = por %p74, %p75
      %p77 = scmp.ne.s32.totalorder %s66, %s67
      %p78 = scmp.eq.s32.totalorder %s37, 0
      %p79 = por %p77, %p78
      %p80 = scmp.ne.s32.totalorder %s66, %s67
      %p81 = scmp.eq.s32.totalorder %s38, 7
      %p82 = por %p80, %p81
      %p84 = scmp.ne.s32.totalorder %s67, %s83
      %p85 = scmp.eq.s32.totalorder %s38, 0
      %p86 = por %p84, %p85
      %s87 = ssub.s32 %s39, %s58
      %s88 = ssub.s32 %s41, %s50
      %s89 = sor.u32 %s87, %s88
      %p90 = scmp.eq.s32.totalorder %s89, 0
      %s92 = sadd.s32 %s91, 1
      %s93 = scalar_select %p90, %s91, %s92
      %p96 = pneg %p90
      %p97 = scmp.eq.s32.totalorder %s32, 7
      %p98 = por %p96, %p97
      %p99 = scmp.ne.s32.totalorder %s91, %s94
      %p100 = scmp.eq.s32.totalorder %s32, 0
      %p101 = por %p99, %p100
      %p102 = scmp.ne.s32.totalorder %s91, %s94
      %p103 = scmp.eq.s32.totalorder %s37, 7
      %p104 = por %p102, %p103
      %p105 = scmp.ne.s32.totalorder %s94, %s95
      %p106 = scmp.eq.s32.totalorder %s37, 0
      %p107 = por %p105, %p106
      %p108 = scmp.ne.s32.totalorder %s94, %s95
      %p109 = scmp.eq.s32.totalorder %s38, 7
      %p110 = por %p108, %p109
      %p112 = scmp.ne.s32.totalorder %s95, %s111
      %p113 = scmp.eq.s32.totalorder %s38, 0
      %p114 = por %p112, %p113
      %s115 = ssub.s32 %s39, %s58
      %s116 = ssub.s32 %s40, %s54
      %s117 = sor.u32 %s115, %s116
      %p118 = scmp.eq.s32.totalorder %s117, 0
      %s120 = sadd.s32 %s119, 1
      %s121 = scalar_select %p118, %s119, %s120
      %p124 = pneg %p118
      %p125 = scmp.eq.s32.totalorder %s32, 7
      %p126 = por %p124, %p125
      %p127 = scmp.ne.s32.totalorder %s119, %s122
      %p128 = scmp.eq.s32.totalorder %s32, 0
      %p129 = por %p127, %p128
      %p130 = scmp.ne.s32.totalorder %s119, %s122
      %p131 = scmp.eq.s32.totalorder %s37, 7
      %p132 = por %p130, %p131
      %p133 = scmp.ne.s32.totalorder %s122, %s123
      %p134 = scmp.eq.s32.totalorder %s37, 0
      %p135 = por %p133, %p134
      %p136 = scmp.ne.s32.totalorder %s122, %s123
      %p137 = scmp.eq.s32.totalorder %s38, 7
      %p138 = por %p136, %p137
      %p140 = scmp.ne.s32.totalorder %s123, %s139
      %p141 = scmp.eq.s32.totalorder %s38, 0
      %p142 = por %p140, %p141
      %s144 = sadd.s32 %s143, 1
      %p147 = scmp.eq.s32.totalorder %s32, 7
      %p148 = scmp.ne.s32.totalorder %s143, %s145
      %p149 = scmp.eq.s32.totalorder %s32, 0
      %p150 = por %p148, %p149
      %p151 = scmp.ne.s32.totalorder %s143, %s145
      %p152 = scmp.eq.s32.totalorder %s37, 7
      %p153 = por %p151, %p152
      %p154 = scmp.ne.s32.totalorder %s145, %s146
      %p155 = scmp.eq.s32.totalorder %s37, 0
      %p156 = por %p154, %p155
      %p157 = scmp.ne.s32.totalorder %s145, %s146
      %p158 = scmp.eq.s32.totalorder %s38, 7
      %p159 = por %p157, %p158
      %p161 = scmp.ne.s32.totalorder %s146, %s160
      %p162 = scmp.eq.s32.totalorder %s38, 0
      %p163 = por %p161, %p162
      %s165 = sadd.s32 %s164, 1
      %p168 = scmp.eq.s32.totalorder %s32, 7
      %p169 = scmp.ne.s32.totalorder %s164, %s166
      %p170 = scmp.eq.s32.totalorder %s32, 0
      %p171 = por %p169, %p170
      %p172 = scmp.ne.s32.totalorder %s164, %s166
      %p173 = scmp.eq.s32.totalorder %s37, 7
      %p174 = por %p172, %p173
      %p175 = scmp.ne.s32.totalorder %s166, %s167
      %p176 = scmp.eq.s32.totalorder %s37, 0
      %p177 = por %p175, %p176
      %p178 = scmp.ne.s32.totalorder %s166, %s167
      %p179 = scmp.eq.s32.totalorder %s38, 7
      %p180 = por %p178, %p179
      %p182 = scmp.ne.s32.totalorder %s167, %s181
      %p183 = scmp.eq.s32.totalorder %s38, 0
      %p184 = por %p182, %p183
      %s186 = sadd.s32 %s185, 1
      %p189 = scmp.eq.s32.totalorder %s32, 7
      %p190 = scmp.ne.s32.totalorder %s185, %s187
      %p191 = scmp.eq.s32.totalorder %s32, 0
      %p192 = por %p190, %p191
      %p193 = scmp.ne.s32.totalorder %s185, %s187
      %p194 = scmp.eq.s32.totalorder %s37, 7
      %p195 = por %p193, %p194
      %p196 = scmp.ne.s32.totalorder %s187, %s188
      %p197 = scmp.eq.s32.totalorder %s37, 0
      %p198 = por %p196, %p197
      %p199 = scmp.ne.s32.totalorder %s187, %s188
      %p200 = scmp.eq.s32.totalorder %s38, 7
      %p201 = por %p199, %p200
      %p203 = scmp.ne.s32.totalorder %s188, %s202
      %p204 = scmp.eq.s32.totalorder %s38, 0
      %p205 = por %p203, %p204
      %s207 = sadd.s32 %s206, 1
      %p210 = scmp.eq.s32.totalorder %s32, 7
      %p211 = scmp.ne.s32.totalorder %s206, %s208
      %p212 = scmp.eq.s32.totalorder %s32, 0
      %p213 = por %p211, %p212
      %p214 = scmp.ne.s32.totalorder %s206, %s208
      %p215 = scmp.eq.s32.totalorder %s37, 7
      %p216 = por %p214, %p215
      %p217 = scmp.ne.s32.totalorder %s208, %s209
      %p218 = scmp.eq.s32.totalorder %s37, 0
      %p219 = por %p217, %p218
      %p220 = scmp.ne.s32.totalorder %s208, %s209
      %p221 = scmp.eq.s32.totalorder %s38, 7
      %p222 = por %p220, %p221
      %p224 = scmp.ne.s32.totalorder %s209, %s223
      %p225 = scmp.eq.s32.totalorder %s38, 0
      %p226 = por %p224, %p225
      %s228 = sadd.s32 %s227, 1
      %p231 = scmp.eq.s32.totalorder %s32, 7
      %p232 = scmp.ne.s32.totalorder %s227, %s229
      %p233 = scmp.eq.s32.totalorder %s32, 0
      %p234 = por %p232, %p233
      %p235 = scmp.ne.s32.totalorder %s227, %s229
      %p236 = scmp.eq.s32.totalorder %s37, 7
      %p237 = por %p235, %p236
      %p238 = scmp.ne.s32.totalorder %s229, %s230
      %p239 = scmp.eq.s32.totalorder %s37, 0
      %p240 = por %p238, %p239
      %p241 = scmp.ne.s32.totalorder %s229, %s230
      %p242 = scmp.eq.s32.totalorder %s38, 7
      %p243 = por %p241, %p242
      %p245 = scmp.ne.s32.totalorder %s230, %s244
      %p246 = scmp.eq.s32.totalorder %s38, 0
      %p247 = por %p245, %p246
      %s249 = sadd.s32 %s248, 1
      %p252 = scmp.eq.s32.totalorder %s32, 7
      %p253 = scmp.ne.s32.totalorder %s248, %s250
      %p254 = scmp.eq.s32.totalorder %s32, 0
      %p255 = por %p253, %p254
      %p256 = scmp.ne.s32.totalorder %s248, %s250
      %p257 = scmp.eq.s32.totalorder %s37, 7
      %p258 = por %p256, %p257
      %p259 = scmp.ne.s32.totalorder %s250, %s251
      %p260 = scmp.eq.s32.totalorder %s37, 0
      %p261 = por %p259, %p260
      %p262 = scmp.ne.s32.totalorder %s250, %s251
      %p263 = scmp.eq.s32.totalorder %s38, 7
      %p264 = por %p262, %p263
      %p266 = scmp.ne.s32.totalorder %s251, %s265
      %p267 = scmp.eq.s32.totalorder %s38, 0
      %p268 = por %p266, %p267
      %s270 = sadd.s32 %s269, 1
      %p273 = scmp.eq.s32.totalorder %s32, 7
      %p274 = scmp.ne.s32.totalorder %s269, %s271
      %p275 = scmp.eq.s32.totalorder %s32, 0
      %p276 = por %p274, %p275
      %p277 = scmp.ne.s32.totalorder %s269, %s271
      %p278 = scmp.eq.s32.totalorder %s37, 7
      %p279 = por %p277, %p278
      %p280 = scmp.ne.s32.totalorder %s271, %s272
      %p281 = scmp.eq.s32.totalorder %s37, 0
      %p282 = por %p280, %p281
      %p283 = scmp.ne.s32.totalorder %s271, %s272
      %p284 = scmp.eq.s32.totalorder %s38, 7
      %p285 = por %p283, %p284
      %p287 = scmp.ne.s32.totalorder %s272, %s286
      %p288 = scmp.eq.s32.totalorder %s38, 0
      %p289 = por %p287, %p288
      %s291 = sadd.s32 %s290, 1
      %p294 = scmp.eq.s32.totalorder %s32, 7
      %p295 = scmp.ne.s32.totalorder %s290, %s292
      %p296 = scmp.eq.s32.totalorder %s32, 0
      %p297 = por %p295, %p296
      %p298 = scmp.ne.s32.totalorder %s290, %s292
      %p299 = scmp.eq.s32.totalorder %s37, 7
      %p300 = por %p298, %p299
      %p301 = scmp.ne.s32.totalorder %s292, %s293
      %p302 = scmp.eq.s32.totalorder %s37, 0
      %p303 = por %p301, %p302
      %p304 = scmp.ne.s32.totalorder %s292, %s293
      %p305 = scmp.eq.s32.totalorder %s38, 7
      %p306 = por %p304, %p305
      %p308 = scmp.ne.s32.totalorder %s293, %s307
      %p309 = scmp.eq.s32.totalorder %s38, 0
      %p310 = por %p308, %p309
      %s312 = sadd.s32 %s311, 1
      %p315 = scmp.eq.s32.totalorder %s32, 7
      %p316 = scmp.ne.s32.totalorder %s311, %s313
      %p317 = scmp.eq.s32.totalorder %s32, 0
      %p318 = por %p316, %p317
      %p319 = scmp.ne.s32.totalorder %s311, %s313
      %p320 = scmp.eq.s32.totalorder %s37, 7
      %p321 = por %p319, %p320
      %p322 = scmp.ne.s32.totalorder %s313, %s314
      %p323 = scmp.eq.s32.totalorder %s37, 0
      %p324 = por %p322, %p323
      %p325 = scmp.ne.s32.totalorder %s313, %s314
      %p326 = scmp.eq.s32.totalorder %s38, 7
      %p327 = por %p325, %p326
      %p329 = scmp.ne.s32.totalorder %s314, %s328
      %p330 = scmp.eq.s32.totalorder %s38, 0
      %p331 = por %p329, %p330
      %s333 = sadd.s32 %s332, 1
      %p336 = scmp.eq.s32.totalorder %s32, 7
      %p337 = scmp.ne.s32.totalorder %s332, %s334
      %p338 = scmp.eq.s32.totalorder %s32, 0
      %p339 = por %p337, %p338
      %p340 = scmp.ne.s32.totalorder %s332, %s334
      %p341 = scmp.eq.s32.totalorder %s37, 7
      %p342 = por %p340, %p341
      %p343 = scmp.ne.s32.totalorder %s334, %s335
      %p344 = scmp.eq.s32.totalorder %s37, 0
      %p345 = por %p343, %p344
      %p346 = scmp.ne.s32.totalorder %s334, %s335
      %p347 = scmp.eq.s32.totalorder %s38, 7
      %p348 = por %p346, %p347
      %p350 = scmp.ne.s32.totalorder %s335, %s349
      %p351 = scmp.eq.s32.totalorder %s38, 0
      %p352 = por %p350, %p351
      %s354 = sadd.s32 %s353, 1
      %p357 = scmp.eq.s32.totalorder %s32, 7
      %p358 = scmp.ne.s32.totalorder %s353, %s355
      %p359 = scmp.eq.s32.totalorder %s32, 0
      %p360 = por %p358, %p359
      %p361 = scmp.ne.s32.totalorder %s353, %s355
      %p362 = scmp.eq.s32.totalorder %s37, 7
      %p363 = por %p361, %p362
      %p364 = scmp.ne.s32.totalorder %s355, %s356
      %p365 = scmp.eq.s32.totalorder %s37, 0
      %p366 = por %p364, %p365
      %p367 = scmp.ne.s32.totalorder %s355, %s356
      %p368 = scmp.eq.s32.totalorder %s38, 7
      %p369 = por %p367, %p368
      %p371 = scmp.ne.s32.totalorder %s356, %s370
      %p372 = scmp.eq.s32.totalorder %s38, 0
      %p373 = por %p371, %p372
      %s375 = sadd.s32 %s374, 1
      %p378 = scmp.eq.s32.totalorder %s32, 7
      %p379 = scmp.ne.s32.totalorder %s374, %s376
      %p380 = scmp.eq.s32.totalorder %s32, 0
      %p381 = por %p379, %p380
      %p382 = scmp.ne.s32.totalorder %s374, %s376
      %p383 = scmp.eq.s32.totalorder %s37, 7
      %p384 = por %p382, %p383
      %p385 = scmp.ne.s32.totalorder %s376, %s377
      %p386 = scmp.eq.s32.totalorder %s37, 0
      %p387 = por %p385, %p386
      %p388 = scmp.ne.s32.totalorder %s376, %s377
      %p389 = scmp.eq.s32.totalorder %s38, 7
      %p390 = por %p388, %p389
      %p392 = scmp.ne.s32.totalorder %s377, %s391
      %p393 = scmp.eq.s32.totalorder %s38, 0
      %p394 = por %p392, %p393
      %s395 = ssub.s32 %s39, %s58
      %s396 = ssub.s32 %s40, %s54
      %s397 = sor.u32 %s395, %s396
      %p398 = scmp.eq.s32.totalorder %s397, 0
      %s400 = sadd.s32 %s399, 1
      %s401 = scalar_select %p398, %s399, %s400
      %p404 = pneg %p398
      %p405 = scmp.eq.s32.totalorder %s32, 7
      %p406 = por %p404, %p405
      %p407 = scmp.ne.s32.totalorder %s399, %s402
      %p408 = scmp.eq.s32.totalorder %s32, 0
      %p409 = por %p407, %p408
      %p410 = scmp.ne.s32.totalorder %s399, %s402
      %p411 = scmp.eq.s32.totalorder %s37, 7
      %p412 = por %p410, %p411
      %p413 = scmp.ne.s32.totalorder %s402, %s403
      %p414 = scmp.eq.s32.totalorder %s37, 0
      %p415 = por %p413, %p414
      %p416 = scmp.ne.s32.totalorder %s402, %s403
      %p417 = scmp.eq.s32.totalorder %s38, 7
      %p418 = por %p416, %p417
      %p420 = scmp.ne.s32.totalorder %s403, %s419
      %p421 = scmp.eq.s32.totalorder %s38, 0
      %p422 = por %p420, %p421
      %p423 = scmp.le.s32.totalorder 1, %s32
      %p424 = scmp.lt.s32.totalorder %s32, 9
      %p425 = pnand %p423, %p424
      %p426 = pneg %p425
      // Predicated region
      $region9: #{tpu_custom_call.1} parent=5 // pred_check
        _
      $region10: #{tpu_custom_call.1} parent=5 // pred_check_branch
        %428 = sbr.rel (%p425) target = $region12
      $region11: #{tpu_custom_call.1} parent=5 // pred_region
        %s429 = ssub.s32 %s32, 1
        // Predicated region
        $region13: #{tpu_custom_call.1} parent=11 // pred_check
          %p430 = pneg %p156
        $region14: #{tpu_custom_call.1} parent=11 // pred_check_branch
          %432 = sbr.rel (%p430) target = $region16
        $region15: #{tpu_custom_call.1} parent=11 // pred_region
          _
        $region16: #{tpu_custom_call.1} parent=11 // pred_fallthru
          _
        // Predicated region
        $region17: #{tpu_custom_call.1} parent=11 // pred_check
          %p433 = pneg %p177
        $region18: #{tpu_custom_call.1} parent=11 // pred_check_branch
          %435 = sbr.rel (%p433) target = $region20
        $region19: #{tpu_custom_call.1} parent=11 // pred_region
          _
        $region20: #{tpu_custom_call.1} parent=11 // pred_fallthru
          _
        // Predicated region
        $region21: #{tpu_custom_call.1} parent=11 // pred_check
          %p436 = pneg %p198
        $region22: #{tpu_custom_call.1} parent=11 // pred_check_branch
          %438 = sbr.rel (%p436) target = $region24
        $region23: #{tpu_custom_call.1} parent=11 // pred_region
          _
        $region24: #{tpu_custom_call.1} parent=11 // pred_fallthru
          _
        // Predicated region
        $region25: #{tpu_custom_call.1} parent=11 // pred_check
          %p439 = pneg %p219
        $region26: #{tpu_custom_call.1} parent=11 // pred_check_branch
          %441 = sbr.rel (%p439) target = $region28
        $region27: #{tpu_custom_call.1} parent=11 // pred_region
          _
        $region28: #{tpu_custom_call.1} parent=11 // pred_fallthru
          _
        // Predicated region
        $region29: #{tpu_custom_call.1} parent=11 // pred_check
          %p442 = pneg %p240
        $region30: #{tpu_custom_call.1} parent=11 // pred_check_branch
          %444 = sbr.rel (%p442) target = $region32
        $region31: #{tpu_custom_call.1} parent=11 // pred_region
          %s446 = ssub.s32 1024, 1024
          %447 = vsyncadd [#allocation13], %s446
          %s448 = sshll.u32 [#allocation12], 4
          %s449 = int_to_ptr.vmem [resolvable:$true] %s448
          %454 = dma.hbm_to_vmem [thread:$0]  %s7, 1024, %s449, [#allocation13], 64, 64, 4
        $region32: #{tpu_custom_call.1} parent=11 // pred_fallthru
          _
        // Predicated region
        $region33: #{tpu_custom_call.1} parent=11 // pred_check
          %p455 = pneg %p261
        $region34: #{tpu_custom_call.1} parent=11 // pred_check_branch
          %457 = sbr.rel (%p455) target = $region36
        $region35: #{tpu_custom_call.1} parent=11 // pred_region
          _
        $region36: #{tpu_custom_call.1} parent=11 // pred_fallthru
          _
        // Predicated region
        $region37: #{tpu_custom_call.1} parent=11 // pred_check
          %p458 = pneg %p282
        $region38: #{tpu_custom_call.1} parent=11 // pred_check_branch
          %460 = sbr.rel (%p458) target = $region40
        $region39: #{tpu_custom_call.1} parent=11 // pred_region
          %s462 = ssub.s32 1024, 1024
          %463 = vsyncadd [#allocation13], %s462
          %s464 = sshll.u32 [#allocation14], 4
          %s465 = int_to_ptr.vmem [resolvable:$true] %s464
          %470 = dma.hbm_to_vmem [thread:$0]  %s9, 1024, %s465, [#allocation13], 64, 64, 4
        $region40: #{tpu_custom_call.1} parent=11 // pred_fallthru
          _
        // Predicated region
        $region41: #{tpu_custom_call.1} parent=11 // pred_check
          %p471 = pneg %p303
        $region42: #{tpu_custom_call.1} parent=11 // pred_check_branch
          %473 = sbr.rel (%p471) target = $region44
        $region43: #{tpu_custom_call.1} parent=11 // pred_region
          _
        $region44: #{tpu_custom_call.1} parent=11 // pred_fallthru
          _
        // Predicated region
        $region45: #{tpu_custom_call.1} parent=11 // pred_check
          %p474 = pneg %p324
        $region46: #{tpu_custom_call.1} parent=11 // pred_check_branch
          %476 = sbr.rel (%p474) target = $region48
        $region47: #{tpu_custom_call.1} parent=11 // pred_region
          %s478 = ssub.s32 1024, 1024
          %479 = vsyncadd [#allocation16], %s478
          %s480 = sshll.u32 [#allocation15], 4
          %s481 = int_to_ptr.vmem [resolvable:$true] %s480
          %486 = dma.hbm_to_vmem [thread:$0]  %s11, 1024, %s481, [#allocation16], 64, 64, 4
        $region48: #{tpu_custom_call.1} parent=11 // pred_fallthru
          _
        // Predicated region
        $region49: #{tpu_custom_call.1} parent=11 // pred_check
          %p487 = pneg %p345
        $region50: #{tpu_custom_call.1} parent=11 // pred_check_branch
          %489 = sbr.rel (%p487) target = $region52
        $region51: #{tpu_custom_call.1} parent=11 // pred_region
          _
        $region52: #{tpu_custom_call.1} parent=11 // pred_fallthru
          _
        // Predicated region
        $region53: #{tpu_custom_call.1} parent=11 // pred_check
          %p490 = pneg %p366
        $region54: #{tpu_custom_call.1} parent=11 // pred_check_branch
          %492 = sbr.rel (%p490) target = $region56
        $region55: #{tpu_custom_call.1} parent=11 // pred_region
          %s494 = ssub.s32 1024, 1024
          %495 = vsyncadd [#allocation16], %s494
          %s496 = sshll.u32 [#allocation17], 4
          %s497 = int_to_ptr.vmem [resolvable:$true] %s496
          %502 = dma.hbm_to_vmem [thread:$0]  %s13, 1024, %s497, [#allocation16], 64, 64, 4
        $region56: #{tpu_custom_call.1} parent=11 // pred_fallthru
          _
        // Predicated region
        $region57: #{tpu_custom_call.1} parent=11 // pred_check
          %p503 = pneg %p387
        $region58: #{tpu_custom_call.1} parent=11 // pred_check_branch
          %505 = sbr.rel (%p503) target = $region60
        $region59: #{tpu_custom_call.1} parent=11 // pred_region
          _
        $region60: #{tpu_custom_call.1} parent=11 // pred_fallthru
          _
      $region12: #{tpu_custom_call.1} parent=5 // pred_fallthru
        _
      %p506 = scmp.lt.s32.totalorder %s32, 8
      // Predicated region
      $region61: #{tpu_custom_call.1} parent=5 // pred_check
        %p507 = pneg %p506
      $region62: #{tpu_custom_call.1} parent=5 // pred_check_branch
        %509 = sbr.rel (%p507) target = $region64
      $region63: #{tpu_custom_call.1} parent=5 // pred_region
        // Predicated region
        $region65: #{tpu_custom_call.1} parent=63 // pred_check
          %p510 = pneg %p73
        $region66: #{tpu_custom_call.1} parent=63 // pred_check_branch
          %512 = sbr.rel (%p510) target = $region68
        $region67: #{tpu_custom_call.1} parent=63 // pred_region
          %s513 = sand.u32 %s63, 1
          %s514 = scalar_lea.sflag [#allocation7], %s513
          %s515 = sand.u32 %s63, 1
          %s516 = smul.addr %s515, 16
          %s517 = scalar_lea.vmem [#allocation6], %s516
          %s518 = smul.u32 2, %s40
          %s520 = ssub.s32 256, 256
          %521 = vsyncadd %s514, %s520
          %s522 = smul.addr %s39, 4
          %s523 = sadd.s32 %s518, %s522
          %s524 = smul.addr %s523, 128
          %s525 = scalar_lea.hbm %s0, %s524
          %s526 = sshll.u32 %s517, 4
          %s527 = int_to_ptr.vmem [resolvable:$true] %s526
          %532 = dma.hbm_to_vmem [thread:$0]  %s525, 256, %s527, %s514, 128, 128, 8
        $region68: #{tpu_custom_call.1} parent=63 // pred_fallthru
          _
        // Predicated region
        $region69: #{tpu_custom_call.1} parent=63 // pred_check
          %p533 = pneg %p101
        $region70: #{tpu_custom_call.1} parent=63 // pred_check_branch
          %535 = sbr.rel (%p533) target = $region72
        $region71: #{tpu_custom_call.1} parent=63 // pred_region
          %s536 = sand.u32 %s32, 1
          %s537 = scalar_lea.sflag [#allocation10], %s536
          %s538 = sand.u32 %s91, 1
          %s539 = smul.addr %s538, 16
          %s540 = scalar_lea.vmem [#allocation9], %s539
          %s541 = smul.u32 2, %s41
          %s543 = ssub.s32 256, 256
          %544 = vsyncadd %s537, %s543
          %s545 = smul.addr %s39, 4
          %s546 = sadd.s32 %s541, %s545
          %s547 = smul.addr %s546, 128
          %s548 = scalar_lea.hbm %s1, %s547
          %s549 = sshll.u32 %s540, 4
          %s550 = int_to_ptr.vmem [resolvable:$true] %s549
          %555 = dma.hbm_to_vmem [thread:$0]  %s548, 256, %s550, %s537, 128, 128, 8
        $region72: #{tpu_custom_call.1} parent=63 // pred_fallthru
          _
        // Predicated region
        $region73: #{tpu_custom_call.1} parent=63 // pred_check
          %p556 = pneg %p129
        $region74: #{tpu_custom_call.1} parent=63 // pred_check_branch
          %558 = sbr.rel (%p556) target = $region76
        $region75: #{tpu_custom_call.1} parent=63 // pred_region
          %s559 = sand.u32 %s32, 1
          %s560 = scalar_lea.sflag [#allocation10], %s559
          %s561 = sand.u32 %s119, 1
          %s562 = smul.addr %s561, 16
          %s563 = scalar_lea.vmem [#allocation11], %s562
          %s564 = smul.u32 2, %s40
          %s566 = ssub.s32 256, 256
          %567 = vsyncadd %s560, %s566
          %s568 = smul.addr %s39, 4
          %s569 = sadd.s32 %s564, %s568
          %s570 = smul.addr %s569, 128
          %s571 = scalar_lea.hbm %s2, %s570
          %s572 = sshll.u32 %s563, 4
          %s573 = int_to_ptr.vmem [resolvable:$true] %s572
          %578 = dma.hbm_to_vmem [thread:$0]  %s571, 256, %s573, %s560, 128, 128, 8
        $region76: #{tpu_custom_call.1} parent=63 // pred_fallthru
          _
      $region64: #{tpu_custom_call.1} parent=5 // pred_fallthru
        _
      %p579 = scmp.le.s32.totalorder 1, %s32
      %p580 = scmp.lt.s32.totalorder %s32, 9
      %p581 = pnand %p579, %p580
      %p582 = pneg %p581
      // Predicated region
      $region77: #{tpu_custom_call.1} parent=5 // pred_check
        _
      $region78: #{tpu_custom_call.1} parent=5 // pred_check_branch
        %584 = sbr.rel (%p581) target = $region80
      $region79: #{tpu_custom_call.1} parent=5 // pred_region
        %s585 = ssub.s32 %s32, 1
        %s586 = sand.u32 %s66, 1
        %s587 = scalar_lea.sflag [#allocation7], %s586
        %s588 = sand.u32 %s66, 1
        %s589 = smul.addr %s588, 16
        %s590 = scalar_lea.vmem [#allocation6], %s589
        // Predicated region
        $region81: #{tpu_custom_call.1} parent=79 // pred_check
          %p591 = pneg %p79
        $region82: #{tpu_custom_call.1} parent=79 // pred_check_branch
          %593 = sbr.rel (%p591) target = $region84
        $region83: #{tpu_custom_call.1} parent=79 // pred_region
          %594 = dma.done %s587, 256
        $region84: #{tpu_custom_call.1} parent=79 // pred_fallthru
          _
        %s595 = sand.u32 %s37, 1
        %s596 = scalar_lea.sflag [#allocation10], %s595
        %s597 = sand.u32 %s94, 1
        %s598 = smul.addr %s597, 16
        %s599 = scalar_lea.vmem [#allocation9], %s598
        // Predicated region
        $region85: #{tpu_custom_call.1} parent=79 // pred_check
          %p600 = pneg %p107
        $region86: #{tpu_custom_call.1} parent=79 // pred_check_branch
          %602 = sbr.rel (%p600) target = $region88
        $region87: #{tpu_custom_call.1} parent=79 // pred_region
          %603 = dma.done %s596, 256
        $region88: #{tpu_custom_call.1} parent=79 // pred_fallthru
          _
        %s604 = sand.u32 %s37, 1
        %s605 = scalar_lea.sflag [#allocation10], %s604
        %s606 = sand.u32 %s122, 1
        %s607 = smul.addr %s606, 16
        %s608 = scalar_lea.vmem [#allocation11], %s607
        // Predicated region
        $region89: #{tpu_custom_call.1} parent=79 // pred_check
          %p609 = pneg %p135
        $region90: #{tpu_custom_call.1} parent=79 // pred_check_branch
          %611 = sbr.rel (%p609) target = $region92
        $region91: #{tpu_custom_call.1} parent=79 // pred_region
          %612 = dma.done %s605, 256
        $region92: #{tpu_custom_call.1} parent=79 // pred_fallthru
          _
        // Predicated region
        $region93: #{tpu_custom_call.1} parent=79 // pred_check
          %p613 = pneg %p240
        $region94: #{tpu_custom_call.1} parent=79 // pred_check_branch
          %615 = sbr.rel (%p613) target = $region96
        $region95: #{tpu_custom_call.1} parent=79 // pred_region
          %616 = dma.done [#allocation13], 1024
        $region96: #{tpu_custom_call.1} parent=79 // pred_fallthru
          _
        // Predicated region
        $region97: #{tpu_custom_call.1} parent=79 // pred_check
          %p617 = pneg %p282
        $region98: #{tpu_custom_call.1} parent=79 // pred_check_branch
          %619 = sbr.rel (%p617) target = $region100
        $region99: #{tpu_custom_call.1} parent=79 // pred_region
          %620 = dma.done [#allocation13], 1024
        $region100: #{tpu_custom_call.1} parent=79 // pred_fallthru
          _
        // Predicated region
        $region101: #{tpu_custom_call.1} parent=79 // pred_check
          %p621 = pneg %p324
        $region102: #{tpu_custom_call.1} parent=79 // pred_check_branch
          %623 = sbr.rel (%p621) target = $region104
        $region103: #{tpu_custom_call.1} parent=79 // pred_region
          %624 = dma.done [#allocation16], 1024
        $region104: #{tpu_custom_call.1} parent=79 // pred_fallthru
          _
        // Predicated region
        $region105: #{tpu_custom_call.1} parent=79 // pred_check
          %p625 = pneg %p366
        $region106: #{tpu_custom_call.1} parent=79 // pred_check_branch
          %627 = sbr.rel (%p625) target = $region108
        $region107: #{tpu_custom_call.1} parent=79 // pred_region
          %628 = dma.done [#allocation16], 1024
        $region108: #{tpu_custom_call.1} parent=79 // pred_fallthru
          _
        %s629 = sand.u32 %s66, 1
        %s630 = scalar_lea.sflag [#allocation7], %s629
        %s631 = sand.u32 %s66, 1
        %s632 = smul.addr %s631, 16
        %s633 = scalar_lea.vmem [#allocation6], %s632
        %p634 = pneg %p79
        %p635 = pneg %p76
        %s636 = sand.u32 %s37, 1
        %s637 = scalar_lea.sflag [#allocation10], %s636
        %s638 = sand.u32 %s94, 1
        %s639 = smul.addr %s638, 16
        %s640 = scalar_lea.vmem [#allocation9], %s639
        %p641 = pneg %p107
        %p642 = pneg %p104
        %s643 = sand.u32 %s37, 1
        %s644 = scalar_lea.sflag [#allocation10], %s643
        %s645 = sand.u32 %s122, 1
        %s646 = smul.addr %s645, 16
        %s647 = scalar_lea.vmem [#allocation11], %s646
        %p648 = pneg %p135
        %p649 = pneg %p132
        %p650 = pneg %p156
        %p651 = pneg %p153
        %p652 = pneg %p177
        %p653 = pneg %p174
        %p654 = pneg %p198
        %p655 = pneg %p195
        %p656 = pneg %p219
        %p657 = pneg %p216
        %p658 = pneg %p240
        %p659 = pneg %p237
        %p660 = pneg %p261
        %p661 = pneg %p258
        %p662 = pneg %p282
        %p663 = pneg %p279
        %p664 = pneg %p303
        %p665 = pneg %p300
        %p666 = pneg %p324
        %p667 = pneg %p321
        %p668 = pneg %p345
        %p669 = pneg %p342
        %p670 = pneg %p366
        %p671 = pneg %p363
        %p672 = pneg %p387
        %p673 = pneg %p384
        %p674 = pneg %p415
        %p675 = pneg %p412
        %s676 = sand.u32 %s402, 1
        %s677 = scalar_lea.sflag [#allocation8], %s676
        %s678 = sand.u32 %s402, 1
        %s679 = smul.addr %s678, 16
        %s680 = scalar_lea.vmem [#allocation18], %s679
        %s681 = smul.u32 2, %s43
        %s682 = smul.u32 2, %s44
        %s683 = smul.u32 2, %s43
        %s684 = smul.u32 2, %s43
        %p686 = scmp.eq.s32.totalorder %s44, 0
        // Predicated region
        $region109: #{tpu_custom_call.1} parent=79 // pred_check
          %p687 = pneg %p686
        $region110: #{tpu_custom_call.1} parent=79 // pred_check_branch
          %689 = sbr.rel (%p687) target = $region112
        $region111: #{tpu_custom_call.1} parent=79 // pred_region
          %v690 = vld [vmem:[%s590] sm:$0xff]
          %v691 = vld [vmem:[%s590 + $0x8] sm:$0xff]
          %v692 = vld [vmem:[%s3] sm:$0x1]
          %v693 = vld [vmem:[%s4] sm:$0x1]
          %694 = vadd.xlane.f32.xlu0 %v690
          %v695 = vpop.xlane.xlu0 %694
          %696 = vadd.xlane.f32.xlu0 %v691
          %v697 = vpop.xlane.xlu0 %696
          %v698 = vrcp.pop 128.0
          %v699 = vmul.f32 %v695, %v698
          %v700 = vmul.f32 %v697, %v698
          %v701 = vsub.f32 %v690, %v699
          %v702 = vsub.f32 %v691, %v700
          %v703 = vmul.f32 %v701, %v701
          %v704 = vmul.f32 %v702, %v702
          %705 = vadd.xlane.f32.xlu0 %v703
          %v706 = vpop.xlane.xlu0 %705
          %707 = vadd.xlane.f32.xlu0 %v704
          %v708 = vpop.xlane.xlu0 %707
          %v709 = vmul.f32 %v706, %v698
          %v710 = vmul.f32 %v708, %v698
          %v711 = vadd.f32 %v709, 1e-05
          %v712 = vadd.f32 %v710, 1e-05
          %v713 = vrsqrt.pop %v711
          %v714 = vrsqrt.pop %v712
          %v715 = vmul.f32 %v701, %v713
          %v716 = vmul.f32 %v702, %v714
          %v718 = vlaneseq
          %v719 = vshrl.u32 %v718, 7
          %v720 = vsub.s32 0, %v719
          %v721 = vrot.slane %v692, %v720
          %v723 = vmul.f32 %v715, %v721
          %v724 = vmul.f32 %v716, %v721
          %v726 = vlaneseq
          %v727 = vshrl.u32 %v726, 7
          %v728 = vsub.s32 0, %v727
          %v729 = vrot.slane %v693, %v728
          %v731 = vadd.f32 %v723, %v729
          %v732 = vadd.f32 %v724, %v729
          %v733 = vpack.c.bf16 %v732, %v731
          %v734 = vld [vmem:[#allocation12] sm:$0xf]
          %v735 = vld [vmem:[#allocation12 + $0x4] sm:$0xf]
          %v736 = vld [vmem:[#allocation12 + $0x8] sm:$0xf]
          %v737 = vld [vmem:[#allocation12 + $0xc] sm:$0xf]
          %v738 = vld [vmem:[#allocation12 + $0x10] sm:$0xf]
          %v739 = vld [vmem:[#allocation12 + $0x14] sm:$0xf]
          %v740 = vld [vmem:[#allocation12 + $0x18] sm:$0xf]
          %v741 = vld [vmem:[#allocation12 + $0x1c] sm:$0xf]
          %v742 = vld [vmem:[#allocation12 + $0x20] sm:$0xf]
          %v743 = vld [vmem:[#allocation12 + $0x24] sm:$0xf]
          %v744 = vld [vmem:[#allocation12 + $0x28] sm:$0xf]
          %v745 = vld [vmem:[#allocation12 + $0x2c] sm:$0xf]
          %v746 = vld [vmem:[#allocation12 + $0x30] sm:$0xf]
          %v747 = vld [vmem:[#allocation12 + $0x34] sm:$0xf]
          %v748 = vld [vmem:[#allocation12 + $0x38] sm:$0xf]
          %v749 = vld [vmem:[#allocation12 + $0x3c] sm:$0xf]
          %v750 = vld [vmem:[%s8] sm:$0x1]
          %v752 = vlaneseq
          %v753 = vshrl.u32 %v752, 7
          %v754 = vsub.s32 0, %v753
          %v755 = vrot.slane %v750, %v754
          %v773 = vunpack.c.l.b16 %v734
          %v774 = vunpack.c.l.b16 %v735
          %v775 = vunpack.c.l.b16 %v736
          %v776 = vunpack.c.l.b16 %v737
          %v777 = vunpack.c.l.b16 %v738
          %v778 = vunpack.c.l.b16 %v739
          %v779 = vunpack.c.l.b16 %v740
          %v780 = vunpack.c.l.b16 %v741
          %v781 = vunpack.c.l.b16 %v742
          %v782 = vunpack.c.l.b16 %v743
          %v783 = vunpack.c.l.b16 %v744
          %v784 = vunpack.c.l.b16 %v745
          %v785 = vunpack.c.l.b16 %v746
          %v786 = vunpack.c.l.b16 %v747
          %v787 = vunpack.c.l.b16 %v748
          %v788 = vunpack.c.l.b16 %v749
          %v789 = vpack.c.b16 %v774, %v773
          %v790 = vpack.c.b16 %v776, %v775
          %v791 = vpack.c.b16 %v778, %v777
          %v792 = vpack.c.b16 %v780, %v779
          %v793 = vpack.c.b16 %v782, %v781
          %v794 = vpack.c.b16 %v784, %v783
          %v795 = vpack.c.b16 %v786, %v785
          %v796 = vpack.c.b16 %v788, %v787
          %805 = vmatprep.subr.bf16.mxu0 0
          %806 = vmatpush1.bf16.msra.mxu0 %v789
          %807 = vmatprep.subr.bf16.mxu0 0
          %808 = vmatpush1.bf16.msra.mxu0 %v790
          %809 = vmatprep.subr.bf16.mxu0 0
          %810 = vmatpush1.bf16.msra.mxu0 %v791
          %811 = vmatprep.subr.bf16.mxu0 0
          %812 = vmatpush1.bf16.msra.mxu0 %v792
          %813 = vmatprep.subr.bf16.mxu0 0
          %814 = vmatpush1.bf16.msra.mxu0 %v793
          %815 = vmatprep.subr.bf16.mxu0 0
          %816 = vmatpush1.bf16.msra.mxu0 %v794
          %817 = vmatprep.subr.bf16.mxu0 0
          %818 = vmatpush1.bf16.msra.mxu0 %v795
          %819 = vmatprep.subr.bf16.mxu0 0
          %820 = vmatpush1.bf16.msra.mxu0 %v796
          %821 = vmatprep.subr.bf16.mxu0 0
          %822 = vmatpush1.bf16.msra.mxu0 0
          %823 = vmatprep.subr.bf16.mxu0 0
          %824 = vmatpush1.bf16.msra.mxu0 0
          %825 = vmatprep.subr.bf16.mxu0 0
          %826 = vmatpush1.bf16.msra.mxu0 0
          %827 = vmatprep.subr.bf16.mxu0 0
          %828 = vmatpush1.bf16.msra.mxu0 0
          %829 = vmatprep.subr.bf16.mxu0 0
          %830 = vmatpush1.bf16.msra.mxu0 0
          %831 = vmatprep.subr.bf16.mxu0 0
          %832 = vmatpush1.bf16.msra.mxu0 0
          %833 = vmatprep.subr.bf16.mxu0 0
          %834 = vmatpush1.bf16.msra.mxu0 0
          %835 = vmatprep.subr.bf16.mxu0 0
          %836 = vmatpush1.bf16.msra.mxu0 0
          %837 = vmatprep.mubr.bf16.mxu0 0
          %838 = vmatmul.mubr.bf16.gmra.mrb[0].mxu0 %v733
          %v839 = vpop.f32.mrb[0].mxu0
          %v840 = vadd.f32 %v755, %v839
          %v841 = vpop.f32.mrb[0].mxu0
          %v842 = vpop.f32.mrb[0].mxu0
          %v843 = vadd.f32 %v755, %v842
          %v844 = vpop.f32.mrb[0].mxu0
          %845 = vdwg.mxu0
          %v846 = vmul.f32 %v840, 0.25
          %v847 = vmul.f32 %v843, 0.25
          %850 = vrot.lane.b32.xlu0 %v846, 112
          %v851 = vpop.permute.xlu0 %850
          %852 = vrot.lane.b32.xlu0 %v847, 112
          %v853 = vpop.permute.xlu0 %852
          %856 = vrot.lane.b32.xlu0 %v846, 96
          %v857 = vpop.permute.xlu0 %856
          %858 = vrot.lane.b32.xlu0 %v847, 96
          %v859 = vpop.permute.xlu0 %858
          %862 = vrot.lane.b32.xlu0 %v846, 80
          %v863 = vpop.permute.xlu0 %862
          %864 = vrot.lane.b32.xlu0 %v847, 80
          %v865 = vpop.permute.xlu0 %864
          %868 = vrot.lane.b32.xlu0 %v846, 64
          %v869 = vpop.permute.xlu0 %868
          %870 = vrot.lane.b32.xlu0 %v847, 64
          %v871 = vpop.permute.xlu0 %870
          %874 = vrot.lane.b32.xlu0 %v846, 48
          %v875 = vpop.permute.xlu0 %874
          %876 = vrot.lane.b32.xlu0 %v847, 48
          %v877 = vpop.permute.xlu0 %876
          %880 = vrot.lane.b32.xlu0 %v846, 32
          %v881 = vpop.permute.xlu0 %880
          %882 = vrot.lane.b32.xlu0 %v847, 32
          %v883 = vpop.permute.xlu0 %882
          %886 = vrot.lane.b32.xlu0 %v846, 16
          %v887 = vpop.permute.xlu0 %886
          %888 = vrot.lane.b32.xlu0 %v847, 16
          %v889 = vpop.permute.xlu0 %888
          %v892 = vcombine.low %v846, %v857
          %v893 = vcombine.high %v846, %v857
          %v895 = vunpack.c.l.s4 1983009808
          %v896 = vunpack.c.0.s8 %v895
          %v897 = vlaneseq
          %v898 = vshrl.u32 %v897, 7
          %v899 = vsub.s32 %v896, %v898
          %v900 = vrot.slane %v892, %v899
          %v902 = vunpack.c.l.s4 1983009808
          %v903 = vunpack.c.0.s8 %v902
          %v904 = vlaneseq
          %v905 = vshrl.u32 %v904, 7
          %v906 = vsub.s32 %v903, %v905
          %v907 = vrot.slane %v893, %v906
          %v908 = vcombine.low %v851, %v863
          %v909 = vcombine.high %v851, %v863
          %v911 = vunpack.c.l.s4 1983009808
          %v912 = vunpack.c.0.s8 %v911
          %v913 = vlaneseq
          %v914 = vshrl.u32 %v913, 7
          %v915 = vsub.s32 %v912, %v914
          %v916 = vrot.slane %v908, %v915
          %v918 = vunpack.c.l.s4 1983009808
          %v919 = vunpack.c.0.s8 %v918
          %v920 = vlaneseq
          %v921 = vshrl.u32 %v920, 7
          %v922 = vsub.s32 %v919, %v921
          %v923 = vrot.slane %v909, %v922
          %v924 = vcombine.low %v869, %v881
          %v925 = vcombine.high %v869, %v881
          %v927 = vunpack.c.l.s4 1983009808
          %v928 = vunpack.c.0.s8 %v927
          %v929 = vlaneseq
          %v930 = vshrl.u32 %v929, 7
          %v931 = vsub.s32 %v928, %v930
          %v932 = vrot.slane %v924, %v931
          %v934 = vunpack.c.l.s4 1983009808
          %v935 = vunpack.c.0.s8 %v934
          %v936 = vlaneseq
          %v937 = vshrl.u32 %v936, 7
          %v938 = vsub.s32 %v935, %v937
          %v939 = vrot.slane %v925, %v938
          %v940 = vcombine.low %v875, %v887
          %v941 = vcombine.high %v875, %v887
          %v943 = vunpack.c.l.s4 1983009808
          %v944 = vunpack.c.0.s8 %v943
          %v945 = vlaneseq
          %v946 = vshrl.u32 %v945, 7
          %v947 = vsub.s32 %v944, %v946
          %v948 = vrot.slane %v940, %v947
          %v950 = vunpack.c.l.s4 1983009808
          %v951 = vunpack.c.0.s8 %v950
          %v952 = vlaneseq
          %v953 = vshrl.u32 %v952, 7
          %v954 = vsub.s32 %v951, %v953
          %v955 = vrot.slane %v941, %v954
          %v956 = vcombine.low %v900, %v916
          %v957 = vcombine.high %v900, %v916
          %v959 = vunpack.c.l.s4 1934713408
          %v960 = vunpack.c.0.s8 %v959
          %v961 = vlaneseq
          %v962 = vshrl.u32 %v961, 7
          %v963 = vsub.s32 %v960, %v962
          %v964 = vrot.slane %v956, %v963
          %v966 = vunpack.c.l.s4 1934713408
          %v967 = vunpack.c.0.s8 %v966
          %v968 = vlaneseq
          %v969 = vshrl.u32 %v968, 7
          %v970 = vsub.s32 %v967, %v969
          %v971 = vrot.slane %v957, %v970
          %v972 = vcombine.low %v907, %v923
          %v973 = vcombine.high %v907, %v923
          %v975 = vunpack.c.l.s4 1934713408
          %v976 = vunpack.c.0.s8 %v975
          %v977 = vlaneseq
          %v978 = vshrl.u32 %v977, 7
          %v979 = vsub.s32 %v976, %v978
          %v980 = vrot.slane %v972, %v979
          %v982 = vunpack.c.l.s4 1934713408
          %v983 = vunpack.c.0.s8 %v982
          %v984 = vlaneseq
          %v985 = vshrl.u32 %v984, 7
          %v986 = vsub.s32 %v983, %v985
          %v987 = vrot.slane %v973, %v986
          %v988 = vcombine.low %v932, %v948
          %v989 = vcombine.high %v932, %v948
          %v991 = vunpack.c.l.s4 1934713408
          %v992 = vunpack.c.0.s8 %v991
          %v993 = vlaneseq
          %v994 = vshrl.u32 %v993, 7
          %v995 = vsub.s32 %v992, %v994
          %v996 = vrot.slane %v988, %v995
          %v998 = vunpack.c.l.s4 1934713408
          %v999 = vunpack.c.0.s8 %v998
          %v1000 = vlaneseq
          %v1001 = vshrl.u32 %v1000, 7
          %v1002 = vsub.s32 %v999, %v1001
          %v1003 = vrot.slane %v989, %v1002
          %v1004 = vcombine.low %v939, %v955
          %v1005 = vcombine.high %v939, %v955
          %v1007 = vunpack.c.l.s4 1934713408
          %v1008 = vunpack.c.0.s8 %v1007
          %v1009 = vlaneseq
          %v1010 = vshrl.u32 %v1009, 7
          %v1011 = vsub.s32 %v1008, %v1010
          %v1012 = vrot.slane %v1004, %v1011
          %v1014 = vunpack.c.l.s4 1934713408
          %v1015 = vunpack.c.0.s8 %v1014
          %v1016 = vlaneseq
          %v1017 = vshrl.u32 %v1016, 7
          %v1018 = vsub.s32 %v1015, %v1017
          %v1019 = vrot.slane %v1005, %v1018
          %v1020 = vcombine.low %v964, %v996
          %v1021 = vcombine.high %v964, %v996
          %v1022 = vcombine.low %v971, %v1003
          %v1023 = vcombine.high %v971, %v1003
          %v1024 = vcombine.low %v980, %v1012
          %v1025 = vcombine.high %v980, %v1012
          %v1026 = vcombine.low %v987, %v1019
          %v1027 = vcombine.high %v987, %v1019
          %v1028 = vcombine.low %v847, %v859
          %v1029 = vcombine.high %v847, %v859
          %v1031 = vunpack.c.l.s4 1983009808
          %v1032 = vunpack.c.0.s8 %v1031
          %v1033 = vlaneseq
          %v1034 = vshrl.u32 %v1033, 7
          %v1035 = vsub.s32 %v1032, %v1034
          %v1036 = vrot.slane %v1028, %v1035
          %v1038 = vunpack.c.l.s4 1983009808
          %v1039 = vunpack.c.0.s8 %v1038
          %v1040 = vlaneseq
          %v1041 = vshrl.u32 %v1040, 7
          %v1042 = vsub.s32 %v1039, %v1041
          %v1043 = vrot.slane %v1029, %v1042
          %v1044 = vcombine.low %v853, %v865
          %v1045 = vcombine.high %v853, %v865
          %v1047 = vunpack.c.l.s4 1983009808
          %v1048 = vunpack.c.0.s8 %v1047
          %v1049 = vlaneseq
          %v1050 = vshrl.u32 %v1049, 7
          %v1051 = vsub.s32 %v1048, %v1050
          %v1052 = vrot.slane %v1044, %v1051
          %v1054 = vunpack.c.l.s4 1983009808
          %v1055 = vunpack.c.0.s8 %v1054
          %v1056 = vlaneseq
          %v1057 = vshrl.u32 %v1056, 7
          %v1058 = vsub.s32 %v1055, %v1057
          %v1059 = vrot.slane %v1045, %v1058
          %v1060 = vcombine.low %v871, %v883
          %v1061 = vcombine.high %v871, %v883
          %v1063 = vunpack.c.l.s4 1983009808
          %v1064 = vunpack.c.0.s8 %v1063
          %v1065 = vlaneseq
          %v1066 = vshrl.u32 %v1065, 7
          %v1067 = vsub.s32 %v1064, %v1066
          %v1068 = vrot.slane %v1060, %v1067
          %v1070 = vunpack.c.l.s4 1983009808
          %v1071 = vunpack.c.0.s8 %v1070
          %v1072 = vlaneseq
          %v1073 = vshrl.u32 %v1072, 7
          %v1074 = vsub.s32 %v1071, %v1073
          %v1075 = vrot.slane %v1061, %v1074
          %v1076 = vcombine.low %v877, %v889
          %v1077 = vcombine.high %v877, %v889
          %v1079 = vunpack.c.l.s4 1983009808
          %v1080 = vunpack.c.0.s8 %v1079
          %v1081 = vlaneseq
          %v1082 = vshrl.u32 %v1081, 7
          %v1083 = vsub.s32 %v1080, %v1082
          %v1084 = vrot.slane %v1076, %v1083
          %v1086 = vunpack.c.l.s4 1983009808
          %v1087 = vunpack.c.0.s8 %v1086
          %v1088 = vlaneseq
          %v1089 = vshrl.u32 %v1088, 7
          %v1090 = vsub.s32 %v1087, %v1089
          %v1091 = vrot.slane %v1077, %v1090
          %v1092 = vcombine.low %v1036, %v1052
          %v1093 = vcombine.high %v1036, %v1052
          %v1095 = vunpack.c.l.s4 1934713408
          %v1096 = vunpack.c.0.s8 %v1095
          %v1097 = vlaneseq
          %v1098 = vshrl.u32 %v1097, 7
          %v1099 = vsub.s32 %v1096, %v1098
          %v1100 = vrot.slane %v1092, %v1099
          %v1102 = vunpack.c.l.s4 1934713408
          %v1103 = vunpack.c.0.s8 %v1102
          %v1104 = vlaneseq
          %v1105 = vshrl.u32 %v1104, 7
          %v1106 = vsub.s32 %v1103, %v1105
          %v1107 = vrot.slane %v1093, %v1106
          %v1108 = vcombine.low %v1043, %v1059
          %v1109 = vcombine.high %v1043, %v1059
          %v1111 = vunpack.c.l.s4 1934713408
          %v1112 = vunpack.c.0.s8 %v1111
          %v1113 = vlaneseq
          %v1114 = vshrl.u32 %v1113, 7
          %v1115 = vsub.s32 %v1112, %v1114
          %v1116 = vrot.slane %v1108, %v1115
          %v1118 = vunpack.c.l.s4 1934713408
          %v1119 = vunpack.c.0.s8 %v1118
          %v1120 = vlaneseq
          %v1121 = vshrl.u32 %v1120, 7
          %v1122 = vsub.s32 %v1119, %v1121
          %v1123 = vrot.slane %v1109, %v1122
          %v1124 = vcombine.low %v1068, %v1084
          %v1125 = vcombine.high %v1068, %v1084
          %v1127 = vunpack.c.l.s4 1934713408
          %v1128 = vunpack.c.0.s8 %v1127
          %v1129 = vlaneseq
          %v1130 = vshrl.u32 %v1129, 7
          %v1131 = vsub.s32 %v1128, %v1130
          %v1132 = vrot.slane %v1124, %v1131
          %v1134 = vunpack.c.l.s4 1934713408
          %v1135 = vunpack.c.0.s8 %v1134
          %v1136 = vlaneseq
          %v1137 = vshrl.u32 %v1136, 7
          %v1138 = vsub.s32 %v1135, %v1137
          %v1139 = vrot.slane %v1125, %v1138
          %v1140 = vcombine.low %v1075, %v1091
          %v1141 = vcombine.high %v1075, %v1091
          %v1143 = vunpack.c.l.s4 1934713408
          %v1144 = vunpack.c.0.s8 %v1143
          %v1145 = vlaneseq
          %v1146 = vshrl.u32 %v1145, 7
          %v1147 = vsub.s32 %v1144, %v1146
          %v1148 = vrot.slane %v1140, %v1147
          %v1150 = vunpack.c.l.s4 1934713408
          %v1151 = vunpack.c.0.s8 %v1150
          %v1152 = vlaneseq
          %v1153 = vshrl.u32 %v1152, 7
          %v1154 = vsub.s32 %v1151, %v1153
          %v1155 = vrot.slane %v1141, %v1154
          %v1156 = vcombine.low %v1100, %v1132
          %v1157 = vcombine.high %v1100, %v1132
          %v1158 = vcombine.low %v1107, %v1139
          %v1159 = vcombine.high %v1107, %v1139
          %v1160 = vcombine.low %v1116, %v1148
          %v1161 = vcombine.high %v1116, %v1148
          %v1162 = vcombine.low %v1123, %v1155
          %v1163 = vcombine.high %v1123, %v1155
          %v1164 = vpack.c.bf16 %v1020, %v1020
          %v1165 = vpack.c.bf16 %v1021, %v1021
          %v1166 = vpack.c.bf16 %v1022, %v1022
          %v1167 = vpack.c.bf16 %v1023, %v1023
          %v1168 = vpack.c.bf16 %v1024, %v1024
          %v1169 = vpack.c.bf16 %v1025, %v1025
          %v1170 = vpack.c.bf16 %v1026, %v1026
          %v1171 = vpack.c.bf16 %v1027, %v1027
          %v1172 = vpack.c.bf16 %v1156, %v1156
          %v1173 = vpack.c.bf16 %v1157, %v1157
          %v1174 = vpack.c.bf16 %v1158, %v1158
          %v1175 = vpack.c.bf16 %v1159, %v1159
          %v1176 = vpack.c.bf16 %v1160, %v1160
          %v1177 = vpack.c.bf16 %v1161, %v1161
          %v1178 = vpack.c.bf16 %v1162, %v1162
          %v1179 = vpack.c.bf16 %v1163, %v1163
          %vm1180 = vcmask 125952
          %1181 = vst.msk [vmem:[#allocation2] sm:$0xf] %vm1180, %v1164
          %1182 = vst.msk [vmem:[#allocation2 + $0x4] sm:$0xf] %vm1180, %v1165
          %1183 = vst.msk [vmem:[#allocation2 + $0x8] sm:$0xf] %vm1180, %v1166
          %1184 = vst.msk [vmem:[#allocation2 + $0xc] sm:$0xf] %vm1180, %v1167
          %1185 = vst.msk [vmem:[#allocation2 + $0x10] sm:$0xf] %vm1180, %v1168
          %1186 = vst.msk [vmem:[#allocation2 + $0x14] sm:$0xf] %vm1180, %v1169
          %1187 = vst.msk [vmem:[#allocation2 + $0x18] sm:$0xf] %vm1180, %v1170
          %1188 = vst.msk [vmem:[#allocation2 + $0x1c] sm:$0xf] %vm1180, %v1171
          %1189 = vst.msk [vmem:[#allocation2 + $0x20] sm:$0xf] %vm1180, %v1172
          %1190 = vst.msk [vmem:[#allocation2 + $0x24] sm:$0xf] %vm1180, %v1173
          %1191 = vst.msk [vmem:[#allocation2 + $0x28] sm:$0xf] %vm1180, %v1174
          %1192 = vst.msk [vmem:[#allocation2 + $0x2c] sm:$0xf] %vm1180, %v1175
          %1193 = vst.msk [vmem:[#allocation2 + $0x30] sm:$0xf] %vm1180, %v1176
          %1194 = vst.msk [vmem:[#allocation2 + $0x34] sm:$0xf] %vm1180, %v1177
          %1195 = vst.msk [vmem:[#allocation2 + $0x38] sm:$0xf] %vm1180, %v1178
          %1196 = vst.msk [vmem:[#allocation2 + $0x3c] sm:$0xf] %vm1180, %v1179
          %vm1197 = vcmask 7168
          %1198 = vst.msk [vmem:[#allocation3] sm:$0xff] %vm1197, -inf
          %1199 = vst.msk [vmem:[#allocation3 + $0x8] sm:$0xff] %vm1197, -inf
          %1200 = vst.msk [vmem:[#allocation3 + $0x10] sm:$0xff] %vm1197, -inf
          %1201 = vst.msk [vmem:[#allocation3 + $0x18] sm:$0xff] %vm1197, -inf
          %1202 = vst.msk [vmem:[#allocation3 + $0x20] sm:$0xff] %vm1197, -inf
          %1203 = vst.msk [vmem:[#allocation3 + $0x28] sm:$0xff] %vm1197, -inf
          %1204 = vst.msk [vmem:[#allocation3 + $0x30] sm:$0xff] %vm1197, -inf
          %1205 = vst.msk [vmem:[#allocation3 + $0x38] sm:$0xff] %vm1197, -inf
          %1206 = vst.msk [vmem:[#allocation3 + $0x40] sm:$0xff] %vm1197, -inf
          %1207 = vst.msk [vmem:[#allocation3 + $0x48] sm:$0xff] %vm1197, -inf
          %1208 = vst.msk [vmem:[#allocation3 + $0x50] sm:$0xff] %vm1197, -inf
          %1209 = vst.msk [vmem:[#allocation3 + $0x58] sm:$0xff] %vm1197, -inf
          %1210 = vst.msk [vmem:[#allocation3 + $0x60] sm:$0xff] %vm1197, -inf
          %1211 = vst.msk [vmem:[#allocation3 + $0x68] sm:$0xff] %vm1197, -inf
          %1212 = vst.msk [vmem:[#allocation3 + $0x70] sm:$0xff] %vm1197, -inf
          %1213 = vst.msk [vmem:[#allocation3 + $0x78] sm:$0xff] %vm1197, -inf
          %1214 = vst.msk [vmem:[#allocation4] sm:$0xff] %vm1197, 0.0
          %1215 = vst.msk [vmem:[#allocation4 + $0x8] sm:$0xff] %vm1197, 0.0
          %1216 = vst.msk [vmem:[#allocation4 + $0x10] sm:$0xff] %vm1197, 0.0
          %1217 = vst.msk [vmem:[#allocation4 + $0x18] sm:$0xff] %vm1197, 0.0
          %1218 = vst.msk [vmem:[#allocation4 + $0x20] sm:$0xff] %vm1197, 0.0
          %1219 = vst.msk [vmem:[#allocation4 + $0x28] sm:$0xff] %vm1197, 0.0
          %1220 = vst.msk [vmem:[#allocation4 + $0x30] sm:$0xff] %vm1197, 0.0
          %1221 = vst.msk [vmem:[#allocation4 + $0x38] sm:$0xff] %vm1197, 0.0
          %1222 = vst.msk [vmem:[#allocation4 + $0x40] sm:$0xff] %vm1197, 0.0
          %1223 = vst.msk [vmem:[#allocation4 + $0x48] sm:$0xff] %vm1197, 0.0
          %1224 = vst.msk [vmem:[#allocation4 + $0x50] sm:$0xff] %vm1197, 0.0
          %1225 = vst.msk [vmem:[#allocation4 + $0x58] sm:$0xff] %vm1197, 0.0
          %1226 = vst.msk [vmem:[#allocation4 + $0x60] sm:$0xff] %vm1197, 0.0
          %1227 = vst.msk [vmem:[#allocation4 + $0x68] sm:$0xff] %vm1197, 0.0
          %1228 = vst.msk [vmem:[#allocation4 + $0x70] sm:$0xff] %vm1197, 0.0
          %1229 = vst.msk [vmem:[#allocation4 + $0x78] sm:$0xff] %vm1197, 0.0
          %vm1230 = vcmask 130048
          %1231 = vst.msk [vmem:[#allocation5] sm:$0xff] %vm1230, 0.0
          %1232 = vst.msk [vmem:[#allocation5 + $0x8] sm:$0xff] %vm1230, 0.0
          %1233 = vst.msk [vmem:[#allocation5 + $0x10] sm:$0xff] %vm1230, 0.0
          %1234 = vst.msk [vmem:[#allocation5 + $0x18] sm:$0xff] %vm1230, 0.0
          %1235 = vst.msk [vmem:[#allocation5 + $0x20] sm:$0xff] %vm1230, 0.0
          %1236 = vst.msk [vmem:[#allocation5 + $0x28] sm:$0xff] %vm1230, 0.0
          %1237 = vst.msk [vmem:[#allocation5 + $0x30] sm:$0xff] %vm1230, 0.0
          %1238 = vst.msk [vmem:[#allocation5 + $0x38] sm:$0xff] %vm1230, 0.0
          %1239 = vst.msk [vmem:[#allocation5 + $0x40] sm:$0xff] %vm1230, 0.0
          %1240 = vst.msk [vmem:[#allocation5 + $0x48] sm:$0xff] %vm1230, 0.0
          %1241 = vst.msk [vmem:[#allocation5 + $0x50] sm:$0xff] %vm1230, 0.0
          %1242 = vst.msk [vmem:[#allocation5 + $0x58] sm:$0xff] %vm1230, 0.0
          %1243 = vst.msk [vmem:[#allocation5 + $0x60] sm:$0xff] %vm1230, 0.0
          %1244 = vst.msk [vmem:[#allocation5 + $0x68] sm:$0xff] %vm1230, 0.0
          %1245 = vst.msk [vmem:[#allocation5 + $0x70] sm:$0xff] %vm1230, 0.0
          %1246 = vst.msk [vmem:[#allocation5 + $0x78] sm:$0xff] %vm1230, 0.0
        $region112: #{tpu_custom_call.1} parent=79 // pred_fallthru
          _
        %v1247 = vld [vmem:[%s599] sm:$0xff]
        %v1248 = vld [vmem:[%s599 + $0x8] sm:$0xff]
        %v1249 = vld [vmem:[%s5] sm:$0x1]
        %v1250 = vld [vmem:[%s6] sm:$0x1]
        %1251 = vadd.xlane.f32.xlu0 %v1247
        %v1252 = vpop.xlane.xlu0 %1251
        %1253 = vadd.xlane.f32.xlu0 %v1248
        %v1254 = vpop.xlane.xlu0 %1253
        %v1255 = vrcp.pop 128.0
        %v1256 = vmul.f32 %v1252, %v1255
        %v1257 = vmul.f32 %v1254, %v1255
        %v1258 = vsub.f32 %v1247, %v1256
        %v1259 = vsub.f32 %v1248, %v1257
        %v1260 = vmul.f32 %v1258, %v1258
        %v1261 = vmul.f32 %v1259, %v1259
        %1262 = vadd.xlane.f32.xlu0 %v1260
        %v1263 = vpop.xlane.xlu0 %1262
        %1264 = vadd.xlane.f32.xlu0 %v1261
        %v1265 = vpop.xlane.xlu0 %1264
        %v1266 = vmul.f32 %v1263, %v1255
        %v1267 = vmul.f32 %v1265, %v1255
        %v1268 = vadd.f32 %v1266, 1e-05
        %v1269 = vadd.f32 %v1267, 1e-05
        %v1270 = vrsqrt.pop %v1268
        %v1271 = vrsqrt.pop %v1269
        %v1272 = vmul.f32 %v1258, %v1270
        %v1273 = vmul.f32 %v1259, %v1271
        %v1275 = vlaneseq
        %v1276 = vshrl.u32 %v1275, 7
        %v1277 = vsub.s32 0, %v1276
        %v1278 = vrot.slane %v1249, %v1277
        %v1280 = vmul.f32 %v1272, %v1278
        %v1281 = vmul.f32 %v1273, %v1278
        %v1283 = vlaneseq
        %v1284 = vshrl.u32 %v1283, 7
        %v1285 = vsub.s32 0, %v1284
        %v1286 = vrot.slane %v1250, %v1285
        %v1288 = vadd.f32 %v1280, %v1286
        %v1289 = vadd.f32 %v1281, %v1286
        %v1290 = vpack.c.bf16 %v1289, %v1288
        %v1291 = vld [vmem:[#allocation14] sm:$0xf]
        %v1292 = vld [vmem:[#allocation14 + $0x4] sm:$0xf]
        %v1293 = vld [vmem:[#allocation14 + $0x8] sm:$0xf]
        %v1294 = vld [vmem:[#allocation14 + $0xc] sm:$0xf]
        %v1295 = vld [vmem:[#allocation14 + $0x10] sm:$0xf]
        %v1296 = vld [vmem:[#allocation14 + $0x14] sm:$0xf]
        %v1297 = vld [vmem:[#allocation14 + $0x18] sm:$0xf]
        %v1298 = vld [vmem:[#allocation14 + $0x1c] sm:$0xf]
        %v1299 = vld [vmem:[#allocation14 + $0x20] sm:$0xf]
        %v1300 = vld [vmem:[#allocation14 + $0x24] sm:$0xf]
        %v1301 = vld [vmem:[#allocation14 + $0x28] sm:$0xf]
        %v1302 = vld [vmem:[#allocation14 + $0x2c] sm:$0xf]
        %v1303 = vld [vmem:[#allocation14 + $0x30] sm:$0xf]
        %v1304 = vld [vmem:[#allocation14 + $0x34] sm:$0xf]
        %v1305 = vld [vmem:[#allocation14 + $0x38] sm:$0xf]
        %v1306 = vld [vmem:[#allocation14 + $0x3c] sm:$0xf]
        %v1307 = vld [vmem:[%s10] sm:$0x1]
        %v1309 = vlaneseq
        %v1310 = vshrl.u32 %v1309, 7
        %v1311 = vsub.s32 0, %v1310
        %v1312 = vrot.slane %v1307, %v1311
        %v1330 = vunpack.c.l.b16 %v1291
        %v1331 = vunpack.c.l.b16 %v1292
        %v1332 = vunpack.c.l.b16 %v1293
        %v1333 = vunpack.c.l.b16 %v1294
        %v1334 = vunpack.c.l.b16 %v1295
        %v1335 = vunpack.c.l.b16 %v1296
        %v1336 = vunpack.c.l.b16 %v1297
        %v1337 = vunpack.c.l.b16 %v1298
        %v1338 = vunpack.c.l.b16 %v1299
        %v1339 = vunpack.c.l.b16 %v1300
        %v1340 = vunpack.c.l.b16 %v1301
        %v1341 = vunpack.c.l.b16 %v1302
        %v1342 = vunpack.c.l.b16 %v1303
        %v1343 = vunpack.c.l.b16 %v1304
        %v1344 = vunpack.c.l.b16 %v1305
        %v1345 = vunpack.c.l.b16 %v1306
        %v1346 = vpack.c.b16 %v1331, %v1330
        %v1347 = vpack.c.b16 %v1333, %v1332
        %v1348 = vpack.c.b16 %v1335, %v1334
        %v1349 = vpack.c.b16 %v1337, %v1336
        %v1350 = vpack.c.b16 %v1339, %v1338
        %v1351 = vpack.c.b16 %v1341, %v1340
        %v1352 = vpack.c.b16 %v1343, %v1342
        %v1353 = vpack.c.b16 %v1345, %v1344
        %1362 = vmatprep.subr.bf16.mxu0 0
        %1363 = vmatpush1.bf16.msra.mxu0 %v1346
        %1364 = vmatprep.subr.bf16.mxu0 0
        %1365 = vmatpush1.bf16.msra.mxu0 %v1347
        %1366 = vmatprep.subr.bf16.mxu0 0
        %1367 = vmatpush1.bf16.msra.mxu0 %v1348
        %1368 = vmatprep.subr.bf16.mxu0 0
        %1369 = vmatpush1.bf16.msra.mxu0 %v1349
        %1370 = vmatprep.subr.bf16.mxu0 0
        %1371 = vmatpush1.bf16.msra.mxu0 %v1350
        %1372 = vmatprep.subr.bf16.mxu0 0
        %1373 = vmatpush1.bf16.msra.mxu0 %v1351
        %1374 = vmatprep.subr.bf16.mxu0 0
        %1375 = vmatpush1.bf16.msra.mxu0 %v1352
        %1376 = vmatprep.subr.bf16.mxu0 0
        %1377 = vmatpush1.bf16.msra.mxu0 %v1353
        %1378 = vmatprep.subr.bf16.mxu0 0
        %1379 = vmatpush1.bf16.msra.mxu0 0
        %1380 = vmatprep.subr.bf16.mxu0 0
        %1381 = vmatpush1.bf16.msra.mxu0 0
        %1382 = vmatprep.subr.bf16.mxu0 0
        %1383 = vmatpush1.bf16.msra.mxu0 0
        %1384 = vmatprep.subr.bf16.mxu0 0
        %1385 = vmatpush1.bf16.msra.mxu0 0
        %1386 = vmatprep.subr.bf16.mxu0 0
        %1387 = vmatpush1.bf16.msra.mxu0 0
        %1388 = vmatprep.subr.bf16.mxu0 0
        %1389 = vmatpush1.bf16.msra.mxu0 0
        %1390 = vmatprep.subr.bf16.mxu0 0
        %1391 = vmatpush1.bf16.msra.mxu0 0
        %1392 = vmatprep.subr.bf16.mxu0 0
        %1393 = vmatpush1.bf16.msra.mxu0 0
        %1394 = vmatprep.mubr.bf16.mxu0 0
        %1395 = vmatmul.mubr.bf16.gmra.mrb[0].mxu0 %v1290
        %v1396 = vpop.f32.mrb[0].mxu0
        %v1397 = vadd.f32 %v1312, %v1396
        %v1398 = vpop.f32.mrb[0].mxu0
        %v1399 = vpop.f32.mrb[0].mxu0
        %v1400 = vadd.f32 %v1312, %v1399
        %v1401 = vpop.f32.mrb[0].mxu0
        %1402 = vdwg.mxu0
        %v1403 = vld [vmem:[#allocation15] sm:$0xf]
        %v1404 = vld [vmem:[#allocation15 + $0x4] sm:$0xf]
        %v1405 = vld [vmem:[#allocation15 + $0x8] sm:$0xf]
        %v1406 = vld [vmem:[#allocation15 + $0xc] sm:$0xf]
        %v1407 = vld [vmem:[#allocation15 + $0x10] sm:$0xf]
        %v1408 = vld [vmem:[#allocation15 + $0x14] sm:$0xf]
        %v1409 = vld [vmem:[#allocation15 + $0x18] sm:$0xf]
        %v1410 = vld [vmem:[#allocation15 + $0x1c] sm:$0xf]
        %v1411 = vld [vmem:[#allocation15 + $0x20] sm:$0xf]
        %v1412 = vld [vmem:[#allocation15 + $0x24] sm:$0xf]
        %v1413 = vld [vmem:[#allocation15 + $0x28] sm:$0xf]
        %v1414 = vld [vmem:[#allocation15 + $0x2c] sm:$0xf]
        %v1415 = vld [vmem:[#allocation15 + $0x30] sm:$0xf]
        %v1416 = vld [vmem:[#allocation15 + $0x34] sm:$0xf]
        %v1417 = vld [vmem:[#allocation15 + $0x38] sm:$0xf]
        %v1418 = vld [vmem:[#allocation15 + $0x3c] sm:$0xf]
        %v1419 = vld [vmem:[%s12] sm:$0x1]
        %v1421 = vlaneseq
        %v1422 = vshrl.u32 %v1421, 7
        %v1423 = vsub.s32 0, %v1422
        %v1424 = vrot.slane %v1419, %v1423
        %v1442 = vunpack.c.l.b16 %v1403
        %v1443 = vunpack.c.l.b16 %v1404
        %v1444 = vunpack.c.l.b16 %v1405
        %v1445 = vunpack.c.l.b16 %v1406
        %v1446 = vunpack.c.l.b16 %v1407
        %v1447 = vunpack.c.l.b16 %v1408
        %v1448 = vunpack.c.l.b16 %v1409
        %v1449 = vunpack.c.l.b16 %v1410
        %v1450 = vunpack.c.l.b16 %v1411
        %v1451 = vunpack.c.l.b16 %v1412
        %v1452 = vunpack.c.l.b16 %v1413
        %v1453 = vunpack.c.l.b16 %v1414
        %v1454 = vunpack.c.l.b16 %v1415
        %v1455 = vunpack.c.l.b16 %v1416
        %v1456 = vunpack.c.l.b16 %v1417
        %v1457 = vunpack.c.l.b16 %v1418
        %v1458 = vpack.c.b16 %v1443, %v1442
        %v1459 = vpack.c.b16 %v1445, %v1444
        %v1460 = vpack.c.b16 %v1447, %v1446
        %v1461 = vpack.c.b16 %v1449, %v1448
        %v1462 = vpack.c.b16 %v1451, %v1450
        %v1463 = vpack.c.b16 %v1453, %v1452
        %v1464 = vpack.c.b16 %v1455, %v1454
        %v1465 = vpack.c.b16 %v1457, %v1456
        %1474 = vmatprep.subr.bf16.mxu0 0
        %1475 = vmatpush1.bf16.msra.mxu0 %v1458
        %1476 = vmatprep.subr.bf16.mxu0 0
        %1477 = vmatpush1.bf16.msra.mxu0 %v1459
        %1478 = vmatprep.subr.bf16.mxu0 0
        %1479 = vmatpush1.bf16.msra.mxu0 %v1460
        %1480 = vmatprep.subr.bf16.mxu0 0
        %1481 = vmatpush1.bf16.msra.mxu0 %v1461
        %1482 = vmatprep.subr.bf16.mxu0 0
        %1483 = vmatpush1.bf16.msra.mxu0 %v1462
        %1484 = vmatprep.subr.bf16.mxu0 0
        %1485 = vmatpush1.bf16.msra.mxu0 %v1463
        %1486 = vmatprep.subr.bf16.mxu0 0
        %1487 = vmatpush1.bf16.msra.mxu0 %v1464
        %1488 = vmatprep.subr.bf16.mxu0 0
        %1489 = vmatpush1.bf16.msra.mxu0 %v1465
        %1490 = vmatprep.subr.bf16.mxu0 0
        %1491 = vmatpush1.bf16.msra.mxu0 0
        %1492 = vmatprep.subr.bf16.mxu0 0
        %1493 = vmatpush1.bf16.msra.mxu0 0
        %1494 = vmatprep.subr.bf16.mxu0 0
        %1495 = vmatpush1.bf16.msra.mxu0 0
        %1496 = vmatprep.subr.bf16.mxu0 0
        %1497 = vmatpush1.bf16.msra.mxu0 0
        %1498 = vmatprep.subr.bf16.mxu0 0
        %1499 = vmatpush1.bf16.msra.mxu0 0
        %1500 = vmatprep.subr.bf16.mxu0 0
        %1501 = vmatpush1.bf16.msra.mxu0 0
        %1502 = vmatprep.subr.bf16.mxu0 0
        %1503 = vmatpush1.bf16.msra.mxu0 0
        %1504 = vmatprep.subr.bf16.mxu0 0
        %1505 = vmatpush1.bf16.msra.mxu0 0
        %1506 = vmatprep.mubr.bf16.mxu0 0
        %1507 = vmatmul.mubr.bf16.gmra.mrb[0].mxu0 %v1290
        %v1508 = vpop.f32.mrb[0].mxu0
        %v1509 = vadd.f32 %v1424, %v1508
        %v1510 = vpop.f32.mrb[0].mxu0
        %v1511 = vpop.f32.mrb[0].mxu0
        %v1512 = vadd.f32 %v1424, %v1511
        %v1513 = vpop.f32.mrb[0].mxu0
        %1514 = vdwg.mxu0
        %1517 = vrot.lane.b32.xlu0 %v1397, 112
        %v1518 = vpop.permute.xlu0 %1517
        %1519 = vrot.lane.b32.xlu0 %v1400, 112
        %v1520 = vpop.permute.xlu0 %1519
        %1523 = vrot.lane.b32.xlu0 %v1397, 96
        %v1524 = vpop.permute.xlu0 %1523
        %1525 = vrot.lane.b32.xlu0 %v1400, 96
        %v1526 = vpop.permute.xlu0 %1525
        %1529 = vrot.lane.b32.xlu0 %v1397, 80
        %v1530 = vpop.permute.xlu0 %1529
        %1531 = vrot.lane.b32.xlu0 %v1400, 80
        %v1532 = vpop.permute.xlu0 %1531
        %1535 = vrot.lane.b32.xlu0 %v1397, 64
        %v1536 = vpop.permute.xlu0 %1535
        %1537 = vrot.lane.b32.xlu0 %v1400, 64
        %v1538 = vpop.permute.xlu0 %1537
        %1541 = vrot.lane.b32.xlu0 %v1397, 48
        %v1542 = vpop.permute.xlu0 %1541
        %1543 = vrot.lane.b32.xlu0 %v1400, 48
        %v1544 = vpop.permute.xlu0 %1543
        %1547 = vrot.lane.b32.xlu0 %v1397, 32
        %v1548 = vpop.permute.xlu0 %1547
        %1549 = vrot.lane.b32.xlu0 %v1400, 32
        %v1550 = vpop.permute.xlu0 %1549
        %1553 = vrot.lane.b32.xlu0 %v1397, 16
        %v1554 = vpop.permute.xlu0 %1553
        %1555 = vrot.lane.b32.xlu0 %v1400, 16
        %v1556 = vpop.permute.xlu0 %1555
        %v1559 = vcombine.low %v1397, %v1524
        %v1560 = vcombine.high %v1397, %v1524
        %v1562 = vunpack.c.l.s4 1983009808
        %v1563 = vunpack.c.0.s8 %v1562
        %v1564 = vlaneseq
        %v1565 = vshrl.u32 %v1564, 7
        %v1566 = vsub.s32 %v1563, %v1565
        %v1567 = vrot.slane %v1559, %v1566
        %v1569 = vunpack.c.l.s4 1983009808
        %v1570 = vunpack.c.0.s8 %v1569
        %v1571 = vlaneseq
        %v1572 = vshrl.u32 %v1571, 7
        %v1573 = vsub.s32 %v1570, %v1572
        %v1574 = vrot.slane %v1560, %v1573
        %v1575 = vcombine.low %v1518, %v1530
        %v1576 = vcombine.high %v1518, %v1530
        %v1578 = vunpack.c.l.s4 1983009808
        %v1579 = vunpack.c.0.s8 %v1578
        %v1580 = vlaneseq
        %v1581 = vshrl.u32 %v1580, 7
        %v1582 = vsub.s32 %v1579, %v1581
        %v1583 = vrot.slane %v1575, %v1582
        %v1585 = vunpack.c.l.s4 1983009808
        %v1586 = vunpack.c.0.s8 %v1585
        %v1587 = vlaneseq
        %v1588 = vshrl.u32 %v1587, 7
        %v1589 = vsub.s32 %v1586, %v1588
        %v1590 = vrot.slane %v1576, %v1589
        %v1591 = vcombine.low %v1536, %v1548
        %v1592 = vcombine.high %v1536, %v1548
        %v1594 = vunpack.c.l.s4 1983009808
        %v1595 = vunpack.c.0.s8 %v1594
        %v1596 = vlaneseq
        %v1597 = vshrl.u32 %v1596, 7
        %v1598 = vsub.s32 %v1595, %v1597
        %v1599 = vrot.slane %v1591, %v1598
        %v1601 = vunpack.c.l.s4 1983009808
        %v1602 = vunpack.c.0.s8 %v1601
        %v1603 = vlaneseq
        %v1604 = vshrl.u32 %v1603, 7
        %v1605 = vsub.s32 %v1602, %v1604
        %v1606 = vrot.slane %v1592, %v1605
        %v1607 = vcombine.low %v1542, %v1554
        %v1608 = vcombine.high %v1542, %v1554
        %v1610 = vunpack.c.l.s4 1983009808
        %v1611 = vunpack.c.0.s8 %v1610
        %v1612 = vlaneseq
        %v1613 = vshrl.u32 %v1612, 7
        %v1614 = vsub.s32 %v1611, %v1613
        %v1615 = vrot.slane %v1607, %v1614
        %v1617 = vunpack.c.l.s4 1983009808
        %v1618 = vunpack.c.0.s8 %v1617
        %v1619 = vlaneseq
        %v1620 = vshrl.u32 %v1619, 7
        %v1621 = vsub.s32 %v1618, %v1620
        %v1622 = vrot.slane %v1608, %v1621
        %v1623 = vcombine.low %v1567, %v1583
        %v1624 = vcombine.high %v1567, %v1583
        %v1626 = vunpack.c.l.s4 1934713408
        %v1627 = vunpack.c.0.s8 %v1626
        %v1628 = vlaneseq
        %v1629 = vshrl.u32 %v1628, 7
        %v1630 = vsub.s32 %v1627, %v1629
        %v1631 = vrot.slane %v1623, %v1630
        %v1633 = vunpack.c.l.s4 1934713408
        %v1634 = vunpack.c.0.s8 %v1633
        %v1635 = vlaneseq
        %v1636 = vshrl.u32 %v1635, 7
        %v1637 = vsub.s32 %v1634, %v1636
        %v1638 = vrot.slane %v1624, %v1637
        %v1639 = vcombine.low %v1574, %v1590
        %v1640 = vcombine.high %v1574, %v1590
        %v1642 = vunpack.c.l.s4 1934713408
        %v1643 = vunpack.c.0.s8 %v1642
        %v1644 = vlaneseq
        %v1645 = vshrl.u32 %v1644, 7
        %v1646 = vsub.s32 %v1643, %v1645
        %v1647 = vrot.slane %v1639, %v1646
        %v1649 = vunpack.c.l.s4 1934713408
        %v1650 = vunpack.c.0.s8 %v1649
        %v1651 = vlaneseq
        %v1652 = vshrl.u32 %v1651, 7
        %v1653 = vsub.s32 %v1650, %v1652
        %v1654 = vrot.slane %v1640, %v1653
        %v1655 = vcombine.low %v1599, %v1615
        %v1656 = vcombine.high %v1599, %v1615
        %v1658 = vunpack.c.l.s4 1934713408
        %v1659 = vunpack.c.0.s8 %v1658
        %v1660 = vlaneseq
        %v1661 = vshrl.u32 %v1660, 7
        %v1662 = vsub.s32 %v1659, %v1661
        %v1663 = vrot.slane %v1655, %v1662
        %v1665 = vunpack.c.l.s4 1934713408
        %v1666 = vunpack.c.0.s8 %v1665
        %v1667 = vlaneseq
        %v1668 = vshrl.u32 %v1667, 7
        %v1669 = vsub.s32 %v1666, %v1668
        %v1670 = vrot.slane %v1656, %v1669
        %v1671 = vcombine.low %v1606, %v1622
        %v1672 = vcombine.high %v1606, %v1622
        %v1674 = vunpack.c.l.s4 1934713408
        %v1675 = vunpack.c.0.s8 %v1674
        %v1676 = vlaneseq
        %v1677 = vshrl.u32 %v1676, 7
        %v1678 = vsub.s32 %v1675, %v1677
        %v1679 = vrot.slane %v1671, %v1678
        %v1681 = vunpack.c.l.s4 1934713408
        %v1682 = vunpack.c.0.s8 %v1681
        %v1683 = vlaneseq
        %v1684 = vshrl.u32 %v1683, 7
        %v1685 = vsub.s32 %v1682, %v1684
        %v1686 = vrot.slane %v1672, %v1685
        %v1687 = vcombine.low %v1631, %v1663
        %v1688 = vcombine.high %v1631, %v1663
        %v1689 = vcombine.low %v1638, %v1670
        %v1690 = vcombine.high %v1638, %v1670
        %v1691 = vcombine.low %v1647, %v1679
        %v1692 = vcombine.high %v1647, %v1679
        %v1693 = vcombine.low %v1654, %v1686
        %v1694 = vcombine.high %v1654, %v1686
        %v1695 = vcombine.low %v1400, %v1526
        %v1696 = vcombine.high %v1400, %v1526
        %v1698 = vunpack.c.l.s4 1983009808
        %v1699 = vunpack.c.0.s8 %v1698
        %v1700 = vlaneseq
        %v1701 = vshrl.u32 %v1700, 7
        %v1702 = vsub.s32 %v1699, %v1701
        %v1703 = vrot.slane %v1695, %v1702
        %v1705 = vunpack.c.l.s4 1983009808
        %v1706 = vunpack.c.0.s8 %v1705
        %v1707 = vlaneseq
        %v1708 = vshrl.u32 %v1707, 7
        %v1709 = vsub.s32 %v1706, %v1708
        %v1710 = vrot.slane %v1696, %v1709
        %v1711 = vcombine.low %v1520, %v1532
        %v1712 = vcombine.high %v1520, %v1532
        %v1714 = vunpack.c.l.s4 1983009808
        %v1715 = vunpack.c.0.s8 %v1714
        %v1716 = vlaneseq
        %v1717 = vshrl.u32 %v1716, 7
        %v1718 = vsub.s32 %v1715, %v1717
        %v1719 = vrot.slane %v1711, %v1718
        %v1721 = vunpack.c.l.s4 1983009808
        %v1722 = vunpack.c.0.s8 %v1721
        %v1723 = vlaneseq
        %v1724 = vshrl.u32 %v1723, 7
        %v1725 = vsub.s32 %v1722, %v1724
        %v1726 = vrot.slane %v1712, %v1725
        %v1727 = vcombine.low %v1538, %v1550
        %v1728 = vcombine.high %v1538, %v1550
        %v1730 = vunpack.c.l.s4 1983009808
        %v1731 = vunpack.c.0.s8 %v1730
        %v1732 = vlaneseq
        %v1733 = vshrl.u32 %v1732, 7
        %v1734 = vsub.s32 %v1731, %v1733
        %v1735 = vrot.slane %v1727, %v1734
        %v1737 = vunpack.c.l.s4 1983009808
        %v1738 = vunpack.c.0.s8 %v1737
        %v1739 = vlaneseq
        %v1740 = vshrl.u32 %v1739, 7
        %v1741 = vsub.s32 %v1738, %v1740
        %v1742 = vrot.slane %v1728, %v1741
        %v1743 = vcombine.low %v1544, %v1556
        %v1744 = vcombine.high %v1544, %v1556
        %v1746 = vunpack.c.l.s4 1983009808
        %v1747 = vunpack.c.0.s8 %v1746
        %v1748 = vlaneseq
        %v1749 = vshrl.u32 %v1748, 7
        %v1750 = vsub.s32 %v1747, %v1749
        %v1751 = vrot.slane %v1743, %v1750
        %v1753 = vunpack.c.l.s4 1983009808
        %v1754 = vunpack.c.0.s8 %v1753
        %v1755 = vlaneseq
        %v1756 = vshrl.u32 %v1755, 7
        %v1757 = vsub.s32 %v1754, %v1756
        %v1758 = vrot.slane %v1744, %v1757
        %v1759 = vcombine.low %v1703, %v1719
        %v1760 = vcombine.high %v1703, %v1719
        %v1762 = vunpack.c.l.s4 1934713408
        %v1763 = vunpack.c.0.s8 %v1762
        %v1764 = vlaneseq
        %v1765 = vshrl.u32 %v1764, 7
        %v1766 = vsub.s32 %v1763, %v1765
        %v1767 = vrot.slane %v1759, %v1766
        %v1769 = vunpack.c.l.s4 1934713408
        %v1770 = vunpack.c.0.s8 %v1769
        %v1771 = vlaneseq
        %v1772 = vshrl.u32 %v1771, 7
        %v1773 = vsub.s32 %v1770, %v1772
        %v1774 = vrot.slane %v1760, %v1773
        %v1775 = vcombine.low %v1710, %v1726
        %v1776 = vcombine.high %v1710, %v1726
        %v1778 = vunpack.c.l.s4 1934713408
        %v1779 = vunpack.c.0.s8 %v1778
        %v1780 = vlaneseq
        %v1781 = vshrl.u32 %v1780, 7
        %v1782 = vsub.s32 %v1779, %v1781
        %v1783 = vrot.slane %v1775, %v1782
        %v1785 = vunpack.c.l.s4 1934713408
        %v1786 = vunpack.c.0.s8 %v1785
        %v1787 = vlaneseq
        %v1788 = vshrl.u32 %v1787, 7
        %v1789 = vsub.s32 %v1786, %v1788
        %v1790 = vrot.slane %v1776, %v1789
        %v1791 = vcombine.low %v1735, %v1751
        %v1792 = vcombine.high %v1735, %v1751
        %v1794 = vunpack.c.l.s4 1934713408
        %v1795 = vunpack.c.0.s8 %v1794
        %v1796 = vlaneseq
        %v1797 = vshrl.u32 %v1796, 7
        %v1798 = vsub.s32 %v1795, %v1797
        %v1799 = vrot.slane %v1791, %v1798
        %v1801 = vunpack.c.l.s4 1934713408
        %v1802 = vunpack.c.0.s8 %v1801
        %v1803 = vlaneseq
        %v1804 = vshrl.u32 %v1803, 7
        %v1805 = vsub.s32 %v1802, %v1804
        %v1806 = vrot.slane %v1792, %v1805
        %v1807 = vcombine.low %v1742, %v1758
        %v1808 = vcombine.high %v1742, %v1758
        %v1810 = vunpack.c.l.s4 1934713408
        %v1811 = vunpack.c.0.s8 %v1810
        %v1812 = vlaneseq
        %v1813 = vshrl.u32 %v1812, 7
        %v1814 = vsub.s32 %v1811, %v1813
        %v1815 = vrot.slane %v1807, %v1814
        %v1817 = vunpack.c.l.s4 1934713408
        %v1818 = vunpack.c.0.s8 %v1817
        %v1819 = vlaneseq
        %v1820 = vshrl.u32 %v1819, 7
        %v1821 = vsub.s32 %v1818, %v1820
        %v1822 = vrot.slane %v1808, %v1821
        %v1823 = vcombine.low %v1767, %v1799
        %v1824 = vcombine.high %v1767, %v1799
        %v1825 = vcombine.low %v1774, %v1806
        %v1826 = vcombine.high %v1774, %v1806
        %v1827 = vcombine.low %v1783, %v1815
        %v1828 = vcombine.high %v1783, %v1815
        %v1829 = vcombine.low %v1790, %v1822
        %v1830 = vcombine.high %v1790, %v1822
        %v1831 = vpack.c.bf16 %v1687, %v1687
        %v1832 = vpack.c.bf16 %v1688, %v1688
        %v1833 = vpack.c.bf16 %v1689, %v1689
        %v1834 = vpack.c.bf16 %v1690, %v1690
        %v1835 = vpack.c.bf16 %v1691, %v1691
        %v1836 = vpack.c.bf16 %v1692, %v1692
        %v1837 = vpack.c.bf16 %v1693, %v1693
        %v1838 = vpack.c.bf16 %v1694, %v1694
        %v1839 = vpack.c.bf16 %v1823, %v1823
        %v1840 = vpack.c.bf16 %v1824, %v1824
        %v1841 = vpack.c.bf16 %v1825, %v1825
        %v1842 = vpack.c.bf16 %v1826, %v1826
        %v1843 = vpack.c.bf16 %v1827, %v1827
        %v1844 = vpack.c.bf16 %v1828, %v1828
        %v1845 = vpack.c.bf16 %v1829, %v1829
        %v1846 = vpack.c.bf16 %v1830, %v1830
        %1849 = vrot.lane.b32.xlu0 %v1509, 112
        %v1850 = vpop.permute.xlu0 %1849
        %1851 = vrot.lane.b32.xlu0 %v1512, 112
        %v1852 = vpop.permute.xlu0 %1851
        %1855 = vrot.lane.b32.xlu0 %v1509, 96
        %v1856 = vpop.permute.xlu0 %1855
        %1857 = vrot.lane.b32.xlu0 %v1512, 96
        %v1858 = vpop.permute.xlu0 %1857
        %1861 = vrot.lane.b32.xlu0 %v1509, 80
        %v1862 = vpop.permute.xlu0 %1861
        %1863 = vrot.lane.b32.xlu0 %v1512, 80
        %v1864 = vpop.permute.xlu0 %1863
        %1867 = vrot.lane.b32.xlu0 %v1509, 64
        %v1868 = vpop.permute.xlu0 %1867
        %1869 = vrot.lane.b32.xlu0 %v1512, 64
        %v1870 = vpop.permute.xlu0 %1869
        %1873 = vrot.lane.b32.xlu0 %v1509, 48
        %v1874 = vpop.permute.xlu0 %1873
        %1875 = vrot.lane.b32.xlu0 %v1512, 48
        %v1876 = vpop.permute.xlu0 %1875
        %1879 = vrot.lane.b32.xlu0 %v1509, 32
        %v1880 = vpop.permute.xlu0 %1879
        %1881 = vrot.lane.b32.xlu0 %v1512, 32
        %v1882 = vpop.permute.xlu0 %1881
        %1885 = vrot.lane.b32.xlu0 %v1509, 16
        %v1886 = vpop.permute.xlu0 %1885
        %1887 = vrot.lane.b32.xlu0 %v1512, 16
        %v1888 = vpop.permute.xlu0 %1887
        %v1891 = vcombine.low %v1509, %v1856
        %v1892 = vcombine.high %v1509, %v1856
        %v1894 = vunpack.c.l.s4 1983009808
        %v1895 = vunpack.c.0.s8 %v1894
        %v1896 = vlaneseq
        %v1897 = vshrl.u32 %v1896, 7
        %v1898 = vsub.s32 %v1895, %v1897
        %v1899 = vrot.slane %v1891, %v1898
        %v1901 = vunpack.c.l.s4 1983009808
        %v1902 = vunpack.c.0.s8 %v1901
        %v1903 = vlaneseq
        %v1904 = vshrl.u32 %v1903, 7
        %v1905 = vsub.s32 %v1902, %v1904
        %v1906 = vrot.slane %v1892, %v1905
        %v1907 = vcombine.low %v1850, %v1862
        %v1908 = vcombine.high %v1850, %v1862
        %v1910 = vunpack.c.l.s4 1983009808
        %v1911 = vunpack.c.0.s8 %v1910
        %v1912 = vlaneseq
        %v1913 = vshrl.u32 %v1912, 7
        %v1914 = vsub.s32 %v1911, %v1913
        %v1915 = vrot.slane %v1907, %v1914
        %v1917 = vunpack.c.l.s4 1983009808
        %v1918 = vunpack.c.0.s8 %v1917
        %v1919 = vlaneseq
        %v1920 = vshrl.u32 %v1919, 7
        %v1921 = vsub.s32 %v1918, %v1920
        %v1922 = vrot.slane %v1908, %v1921
        %v1923 = vcombine.low %v1868, %v1880
        %v1924 = vcombine.high %v1868, %v1880
        %v1926 = vunpack.c.l.s4 1983009808
        %v1927 = vunpack.c.0.s8 %v1926
        %v1928 = vlaneseq
        %v1929 = vshrl.u32 %v1928, 7
        %v1930 = vsub.s32 %v1927, %v1929
        %v1931 = vrot.slane %v1923, %v1930
        %v1933 = vunpack.c.l.s4 1983009808
        %v1934 = vunpack.c.0.s8 %v1933
        %v1935 = vlaneseq
        %v1936 = vshrl.u32 %v1935, 7
        %v1937 = vsub.s32 %v1934, %v1936
        %v1938 = vrot.slane %v1924, %v1937
        %v1939 = vcombine.low %v1874, %v1886
        %v1940 = vcombine.high %v1874, %v1886
        %v1942 = vunpack.c.l.s4 1983009808
        %v1943 = vunpack.c.0.s8 %v1942
        %v1944 = vlaneseq
        %v1945 = vshrl.u32 %v1944, 7
        %v1946 = vsub.s32 %v1943, %v1945
        %v1947 = vrot.slane %v1939, %v1946
        %v1949 = vunpack.c.l.s4 1983009808
        %v1950 = vunpack.c.0.s8 %v1949
        %v1951 = vlaneseq
        %v1952 = vshrl.u32 %v1951, 7
        %v1953 = vsub.s32 %v1950, %v1952
        %v1954 = vrot.slane %v1940, %v1953
        %v1955 = vcombine.low %v1899, %v1915
        %v1956 = vcombine.high %v1899, %v1915
        %v1958 = vunpack.c.l.s4 1934713408
        %v1959 = vunpack.c.0.s8 %v1958
        %v1960 = vlaneseq
        %v1961 = vshrl.u32 %v1960, 7
        %v1962 = vsub.s32 %v1959, %v1961
        %v1963 = vrot.slane %v1955, %v1962
        %v1965 = vunpack.c.l.s4 1934713408
        %v1966 = vunpack.c.0.s8 %v1965
        %v1967 = vlaneseq
        %v1968 = vshrl.u32 %v1967, 7
        %v1969 = vsub.s32 %v1966, %v1968
        %v1970 = vrot.slane %v1956, %v1969
        %v1971 = vcombine.low %v1906, %v1922
        %v1972 = vcombine.high %v1906, %v1922
        %v1974 = vunpack.c.l.s4 1934713408
        %v1975 = vunpack.c.0.s8 %v1974
        %v1976 = vlaneseq
        %v1977 = vshrl.u32 %v1976, 7
        %v1978 = vsub.s32 %v1975, %v1977
        %v1979 = vrot.slane %v1971, %v1978
        %v1981 = vunpack.c.l.s4 1934713408
        %v1982 = vunpack.c.0.s8 %v1981
        %v1983 = vlaneseq
        %v1984 = vshrl.u32 %v1983, 7
        %v1985 = vsub.s32 %v1982, %v1984
        %v1986 = vrot.slane %v1972, %v1985
        %v1987 = vcombine.low %v1931, %v1947
        %v1988 = vcombine.high %v1931, %v1947
        %v1990 = vunpack.c.l.s4 1934713408
        %v1991 = vunpack.c.0.s8 %v1990
        %v1992 = vlaneseq
        %v1993 = vshrl.u32 %v1992, 7
        %v1994 = vsub.s32 %v1991, %v1993
        %v1995 = vrot.slane %v1987, %v1994
        %v1997 = vunpack.c.l.s4 1934713408
        %v1998 = vunpack.c.0.s8 %v1997
        %v1999 = vlaneseq
        %v2000 = vshrl.u32 %v1999, 7
        %v2001 = vsub.s32 %v1998, %v2000
        %v2002 = vrot.slane %v1988, %v2001
        %v2003 = vcombine.low %v1938, %v1954
        %v2004 = vcombine.high %v1938, %v1954
        %v2006 = vunpack.c.l.s4 1934713408
        %v2007 = vunpack.c.0.s8 %v2006
        %v2008 = vlaneseq
        %v2009 = vshrl.u32 %v2008, 7
        %v2010 = vsub.s32 %v2007, %v2009
        %v2011 = vrot.slane %v2003, %v2010
        %v2013 = vunpack.c.l.s4 1934713408
        %v2014 = vunpack.c.0.s8 %v2013
        %v2015 = vlaneseq
        %v2016 = vshrl.u32 %v2015, 7
        %v2017 = vsub.s32 %v2014, %v2016
        %v2018 = vrot.slane %v2004, %v2017
        %v2019 = vcombine.low %v1963, %v1995
        %v2020 = vcombine.high %v1963, %v1995
        %v2021 = vcombine.low %v1970, %v2002
        %v2022 = vcombine.high %v1970, %v2002
        %v2023 = vcombine.low %v1979, %v2011
        %v2024 = vcombine.high %v1979, %v2011
        %v2025 = vcombine.low %v1986, %v2018
        %v2026 = vcombine.high %v1986, %v2018
        %v2027 = vcombine.low %v1512, %v1858
        %v2028 = vcombine.high %v1512, %v1858
        %v2030 = vunpack.c.l.s4 1983009808
        %v2031 = vunpack.c.0.s8 %v2030
        %v2032 = vlaneseq
        %v2033 = vshrl.u32 %v2032, 7
        %v2034 = vsub.s32 %v2031, %v2033
        %v2035 = vrot.slane %v2027, %v2034
        %v2037 = vunpack.c.l.s4 1983009808
        %v2038 = vunpack.c.0.s8 %v2037
        %v2039 = vlaneseq
        %v2040 = vshrl.u32 %v2039, 7
        %v2041 = vsub.s32 %v2038, %v2040
        %v2042 = vrot.slane %v2028, %v2041
        %v2043 = vcombine.low %v1852, %v1864
        %v2044 = vcombine.high %v1852, %v1864
        %v2046 = vunpack.c.l.s4 1983009808
        %v2047 = vunpack.c.0.s8 %v2046
        %v2048 = vlaneseq
        %v2049 = vshrl.u32 %v2048, 7
        %v2050 = vsub.s32 %v2047, %v2049
        %v2051 = vrot.slane %v2043, %v2050
        %v2053 = vunpack.c.l.s4 1983009808
        %v2054 = vunpack.c.0.s8 %v2053
        %v2055 = vlaneseq
        %v2056 = vshrl.u32 %v2055, 7
        %v2057 = vsub.s32 %v2054, %v2056
        %v2058 = vrot.slane %v2044, %v2057
        %v2059 = vcombine.low %v1870, %v1882
        %v2060 = vcombine.high %v1870, %v1882
        %v2062 = vunpack.c.l.s4 1983009808
        %v2063 = vunpack.c.0.s8 %v2062
        %v2064 = vlaneseq
        %v2065 = vshrl.u32 %v2064, 7
        %v2066 = vsub.s32 %v2063, %v2065
        %v2067 = vrot.slane %v2059, %v2066
        %v2069 = vunpack.c.l.s4 1983009808
        %v2070 = vunpack.c.0.s8 %v2069
        %v2071 = vlaneseq
        %v2072 = vshrl.u32 %v2071, 7
        %v2073 = vsub.s32 %v2070, %v2072
        %v2074 = vrot.slane %v2060, %v2073
        %v2075 = vcombine.low %v1876, %v1888
        %v2076 = vcombine.high %v1876, %v1888
        %v2078 = vunpack.c.l.s4 1983009808
        %v2079 = vunpack.c.0.s8 %v2078
        %v2080 = vlaneseq
        %v2081 = vshrl.u32 %v2080, 7
        %v2082 = vsub.s32 %v2079, %v2081
        %v2083 = vrot.slane %v2075, %v2082
        %v2085 = vunpack.c.l.s4 1983009808
        %v2086 = vunpack.c.0.s8 %v2085
        %v2087 = vlaneseq
        %v2088 = vshrl.u32 %v2087, 7
        %v2089 = vsub.s32 %v2086, %v2088
        %v2090 = vrot.slane %v2076, %v2089
        %v2091 = vcombine.low %v2035, %v2051
        %v2092 = vcombine.high %v2035, %v2051
        %v2094 = vunpack.c.l.s4 1934713408
        %v2095 = vunpack.c.0.s8 %v2094
        %v2096 = vlaneseq
        %v2097 = vshrl.u32 %v2096, 7
        %v2098 = vsub.s32 %v2095, %v2097
        %v2099 = vrot.slane %v2091, %v2098
        %v2101 = vunpack.c.l.s4 1934713408
        %v2102 = vunpack.c.0.s8 %v2101
        %v2103 = vlaneseq
        %v2104 = vshrl.u32 %v2103, 7
        %v2105 = vsub.s32 %v2102, %v2104
        %v2106 = vrot.slane %v2092, %v2105
        %v2107 = vcombine.low %v2042, %v2058
        %v2108 = vcombine.high %v2042, %v2058
        %v2110 = vunpack.c.l.s4 1934713408
        %v2111 = vunpack.c.0.s8 %v2110
        %v2112 = vlaneseq
        %v2113 = vshrl.u32 %v2112, 7
        %v2114 = vsub.s32 %v2111, %v2113
        %v2115 = vrot.slane %v2107, %v2114
        %v2117 = vunpack.c.l.s4 1934713408
        %v2118 = vunpack.c.0.s8 %v2117
        %v2119 = vlaneseq
        %v2120 = vshrl.u32 %v2119, 7
        %v2121 = vsub.s32 %v2118, %v2120
        %v2122 = vrot.slane %v2108, %v2121
        %v2123 = vcombine.low %v2067, %v2083
        %v2124 = vcombine.high %v2067, %v2083
        %v2126 = vunpack.c.l.s4 1934713408
        %v2127 = vunpack.c.0.s8 %v2126
        %v2128 = vlaneseq
        %v2129 = vshrl.u32 %v2128, 7
        %v2130 = vsub.s32 %v2127, %v2129
        %v2131 = vrot.slane %v2123, %v2130
        %v2133 = vunpack.c.l.s4 1934713408
        %v2134 = vunpack.c.0.s8 %v2133
        %v2135 = vlaneseq
        %v2136 = vshrl.u32 %v2135, 7
        %v2137 = vsub.s32 %v2134, %v2136
        %v2138 = vrot.slane %v2124, %v2137
        %v2139 = vcombine.low %v2074, %v2090
        %v2140 = vcombine.high %v2074, %v2090
        %v2142 = vunpack.c.l.s4 1934713408
        %v2143 = vunpack.c.0.s8 %v2142
        %v2144 = vlaneseq
        %v2145 = vshrl.u32 %v2144, 7
        %v2146 = vsub.s32 %v2143, %v2145
        %v2147 = vrot.slane %v2139, %v2146
        %v2149 = vunpack.c.l.s4 1934713408
        %v2150 = vunpack.c.0.s8 %v2149
        %v2151 = vlaneseq
        %v2152 = vshrl.u32 %v2151, 7
        %v2153 = vsub.s32 %v2150, %v2152
        %v2154 = vrot.slane %v2140, %v2153
        %v2155 = vcombine.low %v2099, %v2131
        %v2156 = vcombine.high %v2099, %v2131
        %v2157 = vcombine.low %v2106, %v2138
        %v2158 = vcombine.high %v2106, %v2138
        %v2159 = vcombine.low %v2115, %v2147
        %v2160 = vcombine.high %v2115, %v2147
        %v2161 = vcombine.low %v2122, %v2154
        %v2162 = vcombine.high %v2122, %v2154
        %v2163 = vpack.c.bf16 %v2019, %v2019
        %v2164 = vpack.c.bf16 %v2020, %v2020
        %v2165 = vpack.c.bf16 %v2021, %v2021
        %v2166 = vpack.c.bf16 %v2022, %v2022
        %v2167 = vpack.c.bf16 %v2023, %v2023
        %v2168 = vpack.c.bf16 %v2024, %v2024
        %v2169 = vpack.c.bf16 %v2025, %v2025
        %v2170 = vpack.c.bf16 %v2026, %v2026
        %v2171 = vpack.c.bf16 %v2155, %v2155
        %v2172 = vpack.c.bf16 %v2156, %v2156
        %v2173 = vpack.c.bf16 %v2157, %v2157
        %v2174 = vpack.c.bf16 %v2158, %v2158
        %v2175 = vpack.c.bf16 %v2159, %v2159
        %v2176 = vpack.c.bf16 %v2160, %v2160
        %v2177 = vpack.c.bf16 %v2161, %v2161
        %v2178 = vpack.c.bf16 %v2162, %v2162
        %v2179 = vld [vmem:[#allocation2] sm:$0xf]
        %v2180 = vld [vmem:[#allocation2 + $0x4] sm:$0xf]
        %v2181 = vld [vmem:[#allocation2 + $0x8] sm:$0xf]
        %v2182 = vld [vmem:[#allocation2 + $0xc] sm:$0xf]
        %v2183 = vld [vmem:[#allocation2 + $0x10] sm:$0xf]
        %v2184 = vld [vmem:[#allocation2 + $0x14] sm:$0xf]
        %v2185 = vld [vmem:[#allocation2 + $0x18] sm:$0xf]
        %v2186 = vld [vmem:[#allocation2 + $0x1c] sm:$0xf]
        %v2187 = vld [vmem:[#allocation2 + $0x20] sm:$0xf]
        %v2188 = vld [vmem:[#allocation2 + $0x24] sm:$0xf]
        %v2189 = vld [vmem:[#allocation2 + $0x28] sm:$0xf]
        %v2190 = vld [vmem:[#allocation2 + $0x2c] sm:$0xf]
        %v2191 = vld [vmem:[#allocation2 + $0x30] sm:$0xf]
        %v2192 = vld [vmem:[#allocation2 + $0x34] sm:$0xf]
        %v2193 = vld [vmem:[#allocation2 + $0x38] sm:$0xf]
        %v2194 = vld [vmem:[#allocation2 + $0x3c] sm:$0xf]
        %v2195 = vcombine.low %v2179, %v2183
        %v2197 = vunpack.c.l.s4 1983009808
        %v2198 = vunpack.c.0.s8 %v2197
        %v2199 = vlaneseq
        %v2200 = vshrl.u32 %v2199, 7
        %v2201 = vsub.s32 %v2198, %v2200
        %v2202 = vrot.slane %v2195, %v2201
        %v2203 = vcombine.low %v2181, %v2185
        %v2205 = vunpack.c.l.s4 1983009808
        %v2206 = vunpack.c.0.s8 %v2205
        %v2207 = vlaneseq
        %v2208 = vshrl.u32 %v2207, 7
        %v2209 = vsub.s32 %v2206, %v2208
        %v2210 = vrot.slane %v2203, %v2209
        %v2211 = vcombine.low %v2202, %v2210
        %v2212 = vcombine.high %v2202, %v2210
        %v2214 = vunpack.c.l.s4 1934713408
        %v2215 = vunpack.c.0.s8 %v2214
        %v2216 = vlaneseq
        %v2217 = vshrl.u32 %v2216, 7
        %v2218 = vsub.s32 %v2215, %v2217
        %v2219 = vrot.slane %v2211, %v2218
        %v2221 = vunpack.c.l.s4 1934713408
        %v2222 = vunpack.c.0.s8 %v2221
        %v2223 = vlaneseq
        %v2224 = vshrl.u32 %v2223, 7
        %v2225 = vsub.s32 %v2222, %v2224
        %v2226 = vrot.slane %v2212, %v2225
        %v2227 = vcombine.high %v2219, 0
        %v2228 = vcombine.high %v2226, 0
        %v2229 = vcombine.low %v2180, %v2184
        %v2231 = vunpack.c.l.s4 1983009808
        %v2232 = vunpack.c.0.s8 %v2231
        %v2233 = vlaneseq
        %v2234 = vshrl.u32 %v2233, 7
        %v2235 = vsub.s32 %v2232, %v2234
        %v2236 = vrot.slane %v2229, %v2235
        %v2237 = vcombine.low %v2182, %v2186
        %v2239 = vunpack.c.l.s4 1983009808
        %v2240 = vunpack.c.0.s8 %v2239
        %v2241 = vlaneseq
        %v2242 = vshrl.u32 %v2241, 7
        %v2243 = vsub.s32 %v2240, %v2242
        %v2244 = vrot.slane %v2237, %v2243
        %v2245 = vcombine.low %v2236, %v2244
        %v2246 = vcombine.high %v2236, %v2244
        %v2248 = vunpack.c.l.s4 1934713408
        %v2249 = vunpack.c.0.s8 %v2248
        %v2250 = vlaneseq
        %v2251 = vshrl.u32 %v2250, 7
        %v2252 = vsub.s32 %v2249, %v2251
        %v2253 = vrot.slane %v2245, %v2252
        %v2255 = vunpack.c.l.s4 1934713408
        %v2256 = vunpack.c.0.s8 %v2255
        %v2257 = vlaneseq
        %v2258 = vshrl.u32 %v2257, 7
        %v2259 = vsub.s32 %v2256, %v2258
        %v2260 = vrot.slane %v2246, %v2259
        %v2261 = vcombine.high %v2253, 0
        %v2262 = vcombine.high %v2260, 0
        %v2263 = vcombine.low %v2187, %v2191
        %v2265 = vunpack.c.l.s4 1983009808
        %v2266 = vunpack.c.0.s8 %v2265
        %v2267 = vlaneseq
        %v2268 = vshrl.u32 %v2267, 7
        %v2269 = vsub.s32 %v2266, %v2268
        %v2270 = vrot.slane %v2263, %v2269
        %v2271 = vcombine.low %v2189, %v2193
        %v2273 = vunpack.c.l.s4 1983009808
        %v2274 = vunpack.c.0.s8 %v2273
        %v2275 = vlaneseq
        %v2276 = vshrl.u32 %v2275, 7
        %v2277 = vsub.s32 %v2274, %v2276
        %v2278 = vrot.slane %v2271, %v2277
        %v2279 = vcombine.low %v2270, %v2278
        %v2280 = vcombine.high %v2270, %v2278
        %v2282 = vunpack.c.l.s4 1934713408
        %v2283 = vunpack.c.0.s8 %v2282
        %v2284 = vlaneseq
        %v2285 = vshrl.u32 %v2284, 7
        %v2286 = vsub.s32 %v2283, %v2285
        %v2287 = vrot.slane %v2279, %v2286
        %v2289 = vunpack.c.l.s4 1934713408
        %v2290 = vunpack.c.0.s8 %v2289
        %v2291 = vlaneseq
        %v2292 = vshrl.u32 %v2291, 7
        %v2293 = vsub.s32 %v2290, %v2292
        %v2294 = vrot.slane %v2280, %v2293
        %v2295 = vcombine.high %v2287, 0
        %v2296 = vcombine.high %v2294, 0
        %v2297 = vcombine.low %v2188, %v2192
        %v2299 = vunpack.c.l.s4 1983009808
        %v2300 = vunpack.c.0.s8 %v2299
        %v2301 = vlaneseq
        %v2302 = vshrl.u32 %v2301, 7
        %v2303 = vsub.s32 %v2300, %v2302
        %v2304 = vrot.slane %v2297, %v2303
        %v2305 = vcombine.low %v2190, %v2194
        %v2307 = vunpack.c.l.s4 1983009808
        %v2308 = vunpack.c.0.s8 %v2307
        %v2309 = vlaneseq
        %v2310 = vshrl.u32 %v2309, 7
        %v2311 = vsub.s32 %v2308, %v2310
        %v2312 = vrot.slane %v2305, %v2311
        %v2313 = vcombine.low %v2304, %v2312
        %v2314 = vcombine.high %v2304, %v2312
        %v2316 = vunpack.c.l.s4 1934713408
        %v2317 = vunpack.c.0.s8 %v2316
        %v2318 = vlaneseq
        %v2319 = vshrl.u32 %v2318, 7
        %v2320 = vsub.s32 %v2317, %v2319
        %v2321 = vrot.slane %v2313, %v2320
        %v2323 = vunpack.c.l.s4 1934713408
        %v2324 = vunpack.c.0.s8 %v2323
        %v2325 = vlaneseq
        %v2326 = vshrl.u32 %v2325, 7
        %v2327 = vsub.s32 %v2324, %v2326
        %v2328 = vrot.slane %v2314, %v2327
        %v2329 = vcombine.high %v2321, 0
        %v2330 = vcombine.high %v2328, 0
        %v2333 = vpack.i.b16 %v2253, %v2219
        %v2334 = vshrl.u32 %v2219, 16
        %v2335 = vshrl.u32 %v2253, 16
        %v2336 = vpack.i.b16 %v2335, %v2334
        %v2339 = vpack.i.b16 %v2261, %v2227
        %v2340 = vshrl.u32 %v2227, 16
        %v2341 = vshrl.u32 %v2261, 16
        %v2342 = vpack.i.b16 %v2341, %v2340
        %v2345 = vpack.i.b16 %v2260, %v2226
        %v2346 = vshrl.u32 %v2226, 16
        %v2347 = vshrl.u32 %v2260, 16
        %v2348 = vpack.i.b16 %v2347, %v2346
        %v2351 = vpack.i.b16 %v2262, %v2228
        %v2352 = vshrl.u32 %v2228, 16
        %v2353 = vshrl.u32 %v2262, 16
        %v2354 = vpack.i.b16 %v2353, %v2352
        %v2357 = vpack.i.b16 %v2321, %v2287
        %v2358 = vshrl.u32 %v2287, 16
        %v2359 = vshrl.u32 %v2321, 16
        %v2360 = vpack.i.b16 %v2359, %v2358
        %v2363 = vpack.i.b16 %v2329, %v2295
        %v2364 = vshrl.u32 %v2295, 16
        %v2365 = vshrl.u32 %v2329, 16
        %v2366 = vpack.i.b16 %v2365, %v2364
        %v2369 = vpack.i.b16 %v2328, %v2294
        %v2370 = vshrl.u32 %v2294, 16
        %v2371 = vshrl.u32 %v2328, 16
        %v2372 = vpack.i.b16 %v2371, %v2370
        %v2375 = vpack.i.b16 %v2330, %v2296
        %v2376 = vshrl.u32 %v2296, 16
        %v2377 = vshrl.u32 %v2330, 16
        %v2378 = vpack.i.b16 %v2377, %v2376
        %2379 = vxpose.xlu0.c.b16.start [1/8] %v1831, 128
        %2380 = vxpose.xlu0.c.b16.cont [2/8] 0, 128
        %2381 = vxpose.xlu0.c.b16.cont [3/8] 0, 128
        %2382 = vxpose.xlu0.c.b16.cont [4/8] 0, 128
        %2383 = vxpose.xlu0.c.b16.cont [5/8] 0, 128
        %2384 = vxpose.xlu0.c.b16.cont [6/8] 0, 128
        %2385 = vxpose.xlu0.c.b16.cont [7/8] 0, 128
        %2386 = vxpose.xlu0.c.b16.end [8/8] 0, 128
        %v2387 = vpop.trf.xlu0
        %v2388 = vpop.trf.xlu0
        %v2389 = vpop.trf.xlu0
        %v2390 = vpop.trf.xlu0
        %v2391 = vpop.trf.xlu0
        %v2392 = vpop.trf.xlu0
        %v2393 = vpop.trf.xlu0
        %v2394 = vpop.trf.xlu0
        %2395 = vxpose.xlu0.c.b16.start [1/8] %v1832, 128
        %2396 = vxpose.xlu0.c.b16.cont [2/8] 0, 128
        %2397 = vxpose.xlu0.c.b16.cont [3/8] 0, 128
        %2398 = vxpose.xlu0.c.b16.cont [4/8] 0, 128
        %2399 = vxpose.xlu0.c.b16.cont [5/8] 0, 128
        %2400 = vxpose.xlu0.c.b16.cont [6/8] 0, 128
        %2401 = vxpose.xlu0.c.b16.cont [7/8] 0, 128
        %2402 = vxpose.xlu0.c.b16.end [8/8] 0, 128
        %v2403 = vpop.trf.xlu0
        %v2404 = vpop.trf.xlu0
        %v2405 = vpop.trf.xlu0
        %v2406 = vpop.trf.xlu0
        %v2407 = vpop.trf.xlu0
        %v2408 = vpop.trf.xlu0
        %v2409 = vpop.trf.xlu0
        %v2410 = vpop.trf.xlu0
        %2411 = vxpose.xlu0.c.b16.start [1/8] %v1833, 128
        %2412 = vxpose.xlu0.c.b16.cont [2/8] 0, 128
        %2413 = vxpose.xlu0.c.b16.cont [3/8] 0, 128
        %2414 = vxpose.xlu0.c.b16.cont [4/8] 0, 128
        %2415 = vxpose.xlu0.c.b16.cont [5/8] 0, 128
        %2416 = vxpose.xlu0.c.b16.cont [6/8] 0, 128
        %2417 = vxpose.xlu0.c.b16.cont [7/8] 0, 128
        %2418 = vxpose.xlu0.c.b16.end [8/8] 0, 128
        %v2419 = vpop.trf.xlu0
        %v2420 = vpop.trf.xlu0
        %v2421 = vpop.trf.xlu0
        %v2422 = vpop.trf.xlu0
        %v2423 = vpop.trf.xlu0
        %v2424 = vpop.trf.xlu0
        %v2425 = vpop.trf.xlu0
        %v2426 = vpop.trf.xlu0
        %2427 = vxpose.xlu0.c.b16.start [1/8] %v1834, 128
        %2428 = vxpose.xlu0.c.b16.cont [2/8] 0, 128
        %2429 = vxpose.xlu0.c.b16.cont [3/8] 0, 128
        %2430 = vxpose.xlu0.c.b16.cont [4/8] 0, 128
        %2431 = vxpose.xlu0.c.b16.cont [5/8] 0, 128
        %2432 = vxpose.xlu0.c.b16.cont [6/8] 0, 128
        %2433 = vxpose.xlu0.c.b16.cont [7/8] 0, 128
        %2434 = vxpose.xlu0.c.b16.end [8/8] 0, 128
        %v2435 = vpop.trf.xlu0
        %v2436 = vpop.trf.xlu0
        %v2437 = vpop.trf.xlu0
        %v2438 = vpop.trf.xlu0
        %v2439 = vpop.trf.xlu0
        %v2440 = vpop.trf.xlu0
        %v2441 = vpop.trf.xlu0
        %v2442 = vpop.trf.xlu0
        %2443 = vxpose.xlu0.c.b16.start [1/8] %v1835, 128
        %2444 = vxpose.xlu0.c.b16.cont [2/8] 0, 128
        %2445 = vxpose.xlu0.c.b16.cont [3/8] 0, 128
        %2446 = vxpose.xlu0.c.b16.cont [4/8] 0, 128
        %2447 = vxpose.xlu0.c.b16.cont [5/8] 0, 128
        %2448 = vxpose.xlu0.c.b16.cont [6/8] 0, 128
        %2449 = vxpose.xlu0.c.b16.cont [7/8] 0, 128
        %2450 = vxpose.xlu0.c.b16.end [8/8] 0, 128
        %v2451 = vpop.trf.xlu0
        %v2452 = vpop.trf.xlu0
        %v2453 = vpop.trf.xlu0
        %v2454 = vpop.trf.xlu0
        %v2455 = vpop.trf.xlu0
        %v2456 = vpop.trf.xlu0
        %v2457 = vpop.trf.xlu0
        %v2458 = vpop.trf.xlu0
        %2459 = vxpose.xlu0.c.b16.start [1/8] %v1836, 128
        %2460 = vxpose.xlu0.c.b16.cont [2/8] 0, 128
        %2461 = vxpose.xlu0.c.b16.cont [3/8] 0, 128
        %2462 = vxpose.xlu0.c.b16.cont [4/8] 0, 128
        %2463 = vxpose.xlu0.c.b16.cont [5/8] 0, 128
        %2464 = vxpose.xlu0.c.b16.cont [6/8] 0, 128
        %2465 = vxpose.xlu0.c.b16.cont [7/8] 0, 128
        %2466 = vxpose.xlu0.c.b16.end [8/8] 0, 128
        %v2467 = vpop.trf.xlu0
        %v2468 = vpop.trf.xlu0
        %v2469 = vpop.trf.xlu0
        %v2470 = vpop.trf.xlu0
        %v2471 = vpop.trf.xlu0
        %v2472 = vpop.trf.xlu0
        %v2473 = vpop.trf.xlu0
        %v2474 = vpop.trf.xlu0
        %2475 = vxpose.xlu0.c.b16.start [1/8] %v1837, 128
        %2476 = vxpose.xlu0.c.b16.cont [2/8] 0, 128
        %2477 = vxpose.xlu0.c.b16.cont [3/8] 0, 128
        %2478 = vxpose.xlu0.c.b16.cont [4/8] 0, 128
        %2479 = vxpose.xlu0.c.b16.cont [5/8] 0, 128
        %2480 = vxpose.xlu0.c.b16.cont [6/8] 0, 128
        %2481 = vxpose.xlu0.c.b16.cont [7/8] 0, 128
        %2482 = vxpose.xlu0.c.b16.end [8/8] 0, 128
        %v2483 = vpop.trf.xlu0
        %v2484 = vpop.trf.xlu0
        %v2485 = vpop.trf.xlu0
        %v2486 = vpop.trf.xlu0
        %v2487 = vpop.trf.xlu0
        %v2488 = vpop.trf.xlu0
        %v2489 = vpop.trf.xlu0
        %v2490 = vpop.trf.xlu0
        %2491 = vxpose.xlu0.c.b16.start [1/8] %v1838, 128
        %2492 = vxpose.xlu0.c.b16.cont [2/8] 0, 128
        %2493 = vxpose.xlu0.c.b16.cont [3/8] 0, 128
        %2494 = vxpose.xlu0.c.b16.cont [4/8] 0, 128
        %2495 = vxpose.xlu0.c.b16.cont [5/8] 0, 128
        %2496 = vxpose.xlu0.c.b16.cont [6/8] 0, 128
        %2497 = vxpose.xlu0.c.b16.cont [7/8] 0, 128
        %2498 = vxpose.xlu0.c.b16.end [8/8] 0, 128
        %v2499 = vpop.trf.xlu0
        %v2500 = vpop.trf.xlu0
        %v2501 = vpop.trf.xlu0
        %v2502 = vpop.trf.xlu0
        %v2503 = vpop.trf.xlu0
        %v2504 = vpop.trf.xlu0
        %v2505 = vpop.trf.xlu0
        %v2506 = vpop.trf.xlu0
        %2507 = vxpose.xlu0.c.b16.start [1/8] %v1839, 128
        %2508 = vxpose.xlu0.c.b16.cont [2/8] 0, 128
        %2509 = vxpose.xlu0.c.b16.cont [3/8] 0, 128
        %2510 = vxpose.xlu0.c.b16.cont [4/8] 0, 128
        %2511 = vxpose.xlu0.c.b16.cont [5/8] 0, 128
        %2512 = vxpose.xlu0.c.b16.cont [6/8] 0, 128
        %2513 = vxpose.xlu0.c.b16.cont [7/8] 0, 128
        %2514 = vxpose.xlu0.c.b16.end [8/8] 0, 128
        %v2515 = vpop.trf.xlu0
        %v2516 = vpop.trf.xlu0
        %v2517 = vpop.trf.xlu0
        %v2518 = vpop.trf.xlu0
        %v2519 = vpop.trf.xlu0
        %v2520 = vpop.trf.xlu0
        %v2521 = vpop.trf.xlu0
        %v2522 = vpop.trf.xlu0
        %2523 = vxpose.xlu0.c.b16.start [1/8] %v1840, 128
        %2524 = vxpose.xlu0.c.b16.cont [2/8] 0, 128
        %2525 = vxpose.xlu0.c.b16.cont [3/8] 0, 128
        %2526 = vxpose.xlu0.c.b16.cont [4/8] 0, 128
        %2527 = vxpose.xlu0.c.b16.cont [5/8] 0, 128
        %2528 = vxpose.xlu0.c.b16.cont [6/8] 0, 128
        %2529 = vxpose.xlu0.c.b16.cont [7/8] 0, 128
        %2530 = vxpose.xlu0.c.b16.end [8/8] 0, 128
        %v2531 = vpop.trf.xlu0
        %v2532 = vpop.trf.xlu0
        %v2533 = vpop.trf.xlu0
        %v2534 = vpop.trf.xlu0
        %v2535 = vpop.trf.xlu0
        %v2536 = vpop.trf.xlu0
        %v2537 = vpop.trf.xlu0
        %v2538 = vpop.trf.xlu0
        %2539 = vxpose.xlu0.c.b16.start [1/8] %v1841, 128
        %2540 = vxpose.xlu0.c.b16.cont [2/8] 0, 128
        %2541 = vxpose.xlu0.c.b16.cont [3/8] 0, 128
        %2542 = vxpose.xlu0.c.b16.cont [4/8] 0, 128
        %2543 = vxpose.xlu0.c.b16.cont [5/8] 0, 128
        %2544 = vxpose.xlu0.c.b16.cont [6/8] 0, 128
        %2545 = vxpose.xlu0.c.b16.cont [7/8] 0, 128
        %2546 = vxpose.xlu0.c.b16.end [8/8] 0, 128
        %v2547 = vpop.trf.xlu0
        %v2548 = vpop.trf.xlu0
        %v2549 = vpop.trf.xlu0
        %v2550 = vpop.trf.xlu0
        %v2551 = vpop.trf.xlu0
        %v2552 = vpop.trf.xlu0
        %v2553 = vpop.trf.xlu0
        %v2554 = vpop.trf.xlu0
        %2555 = vxpose.xlu0.c.b16.start [1/8] %v1842, 128
        %2556 = vxpose.xlu0.c.b16.cont [2/8] 0, 128
        %2557 = vxpose.xlu0.c.b16.cont [3/8] 0, 128
        %2558 = vxpose.xlu0.c.b16.cont [4/8] 0, 128
        %2559 = vxpose.xlu0.c.b16.cont [5/8] 0, 128
        %2560 = vxpose.xlu0.c.b16.cont [6/8] 0, 128
        %2561 = vxpose.xlu0.c.b16.cont [7/8] 0, 128
        %2562 = vxpose.xlu0.c.b16.end [8/8] 0, 128
        %v2563 = vpop.trf.xlu0
        %v2564 = vpop.trf.xlu0
        %v2565 = vpop.trf.xlu0
        %v2566 = vpop.trf.xlu0
        %v2567 = vpop.trf.xlu0
        %v2568 = vpop.trf.xlu0
        %v2569 = vpop.trf.xlu0
        %v2570 = vpop.trf.xlu0
        %2571 = vxpose.xlu0.c.b16.start [1/8] %v1843, 128
        %2572 = vxpose.xlu0.c.b16.cont [2/8] 0, 128
        %2573 = vxpose.xlu0.c.b16.cont [3/8] 0, 128
        %2574 = vxpose.xlu0.c.b16.cont [4/8] 0, 128
        %2575 = vxpose.xlu0.c.b16.cont [5/8] 0, 128
        %2576 = vxpose.xlu0.c.b16.cont [6/8] 0, 128
        %2577 = vxpose.xlu0.c.b16.cont [7/8] 0, 128
        %2578 = vxpose.xlu0.c.b16.end [8/8] 0, 128
        %v2579 = vpop.trf.xlu0
        %v2580 = vpop.trf.xlu0
        %v2581 = vpop.trf.xlu0
        %v2582 = vpop.trf.xlu0
        %v2583 = vpop.trf.xlu0
        %v2584 = vpop.trf.xlu0
        %v2585 = vpop.trf.xlu0
        %v2586 = vpop.trf.xlu0
        %2587 = vxpose.xlu0.c.b16.start [1/8] %v1844, 128
        %2588 = vxpose.xlu0.c.b16.cont [2/8] 0, 128
        %2589 = vxpose.xlu0.c.b16.cont [3/8] 0, 128
        %2590 = vxpose.xlu0.c.b16.cont [4/8] 0, 128
        %2591 = vxpose.xlu0.c.b16.cont [5/8] 0, 128
        %2592 = vxpose.xlu0.c.b16.cont [6/8] 0, 128
        %2593 = vxpose.xlu0.c.b16.cont [7/8] 0, 128
        %2594 = vxpose.xlu0.c.b16.end [8/8] 0, 128
        %v2595 = vpop.trf.xlu0
        %v2596 = vpop.trf.xlu0
        %v2597 = vpop.trf.xlu0
        %v2598 = vpop.trf.xlu0
        %v2599 = vpop.trf.xlu0
        %v2600 = vpop.trf.xlu0
        %v2601 = vpop.trf.xlu0
        %v2602 = vpop.trf.xlu0
        %2603 = vxpose.xlu0.c.b16.start [1/8] %v1845, 128
        %2604 = vxpose.xlu0.c.b16.cont [2/8] 0, 128
        %2605 = vxpose.xlu0.c.b16.cont [3/8] 0, 128
        %2606 = vxpose.xlu0.c.b16.cont [4/8] 0, 128
        %2607 = vxpose.xlu0.c.b16.cont [5/8] 0, 128
        %2608 = vxpose.xlu0.c.b16.cont [6/8] 0, 128
        %2609 = vxpose.xlu0.c.b16.cont [7/8] 0, 128
        %2610 = vxpose.xlu0.c.b16.end [8/8] 0, 128
        %v2611 = vpop.trf.xlu0
        %v2612 = vpop.trf.xlu0
        %v2613 = vpop.trf.xlu0
        %v2614 = vpop.trf.xlu0
        %v2615 = vpop.trf.xlu0
        %v2616 = vpop.trf.xlu0
        %v2617 = vpop.trf.xlu0
        %v2618 = vpop.trf.xlu0
        %2619 = vxpose.xlu0.c.b16.start [1/8] %v1846, 128
        %2620 = vxpose.xlu0.c.b16.cont [2/8] 0, 128
        %2621 = vxpose.xlu0.c.b16.cont [3/8] 0, 128
        %2622 = vxpose.xlu0.c.b16.cont [4/8] 0, 128
        %2623 = vxpose.xlu0.c.b16.cont [5/8] 0, 128
        %2624 = vxpose.xlu0.c.b16.cont [6/8] 0, 128
        %2625 = vxpose.xlu0.c.b16.cont [7/8] 0, 128
        %2626 = vxpose.xlu0.c.b16.end [8/8] 0, 128
        %v2627 = vpop.trf.xlu0
        %v2628 = vpop.trf.xlu0
        %v2629 = vpop.trf.xlu0
        %v2630 = vpop.trf.xlu0
        %v2631 = vpop.trf.xlu0
        %v2632 = vpop.trf.xlu0
        %v2633 = vpop.trf.xlu0
        %v2634 = vpop.trf.xlu0
        %v2635 = vcombine.low %v2387, %v2451
        %v2636 = vcombine.high %v2387, %v2451
        %v2638 = vunpack.c.l.s4 1983009808
        %v2639 = vunpack.c.0.s8 %v2638
        %v2640 = vlaneseq
        %v2641 = vshrl.u32 %v2640, 7
        %v2642 = vsub.s32 %v2639, %v2641
        %v2643 = vrot.slane %v2635, %v2642
        %v2645 = vunpack.c.l.s4 1983009808
        %v2646 = vunpack.c.0.s8 %v2645
        %v2647 = vlaneseq
        %v2648 = vshrl.u32 %v2647, 7
        %v2649 = vsub.s32 %v2646, %v2648
        %v2650 = vrot.slane %v2636, %v2649
        %v2651 = vcombine.low %v2419, %v2483
        %v2652 = vcombine.high %v2419, %v2483
        %v2654 = vunpack.c.l.s4 1983009808
        %v2655 = vunpack.c.0.s8 %v2654
        %v2656 = vlaneseq
        %v2657 = vshrl.u32 %v2656, 7
        %v2658 = vsub.s32 %v2655, %v2657
        %v2659 = vrot.slane %v2651, %v2658
        %v2661 = vunpack.c.l.s4 1983009808
        %v2662 = vunpack.c.0.s8 %v2661
        %v2663 = vlaneseq
        %v2664 = vshrl.u32 %v2663, 7
        %v2665 = vsub.s32 %v2662, %v2664
        %v2666 = vrot.slane %v2652, %v2665
        %v2667 = vcombine.low %v2515, %v2579
        %v2668 = vcombine.high %v2515, %v2579
        %v2670 = vunpack.c.l.s4 1983009808
        %v2671 = vunpack.c.0.s8 %v2670
        %v2672 = vlaneseq
        %v2673 = vshrl.u32 %v2672, 7
        %v2674 = vsub.s32 %v2671, %v2673
        %v2675 = vrot.slane %v2667, %v2674
        %v2677 = vunpack.c.l.s4 1983009808
        %v2678 = vunpack.c.0.s8 %v2677
        %v2679 = vlaneseq
        %v2680 = vshrl.u32 %v2679, 7
        %v2681 = vsub.s32 %v2678, %v2680
        %v2682 = vrot.slane %v2668, %v2681
        %v2683 = vcombine.low %v2547, %v2611
        %v2684 = vcombine.high %v2547, %v2611
        %v2686 = vunpack.c.l.s4 1983009808
        %v2687 = vunpack.c.0.s8 %v2686
        %v2688 = vlaneseq
        %v2689 = vshrl.u32 %v2688, 7
        %v2690 = vsub.s32 %v2687, %v2689
        %v2691 = vrot.slane %v2683, %v2690
        %v2693 = vunpack.c.l.s4 1983009808
        %v2694 = vunpack.c.0.s8 %v2693
        %v2695 = vlaneseq
        %v2696 = vshrl.u32 %v2695, 7
        %v2697 = vsub.s32 %v2694, %v2696
        %v2698 = vrot.slane %v2684, %v2697
        %v2699 = vcombine.low %v2643, %v2659
        %v2700 = vcombine.high %v2643, %v2659
        %v2702 = vunpack.c.l.s4 1934713408
        %v2703 = vunpack.c.0.s8 %v2702
        %v2704 = vlaneseq
        %v2705 = vshrl.u32 %v2704, 7
        %v2706 = vsub.s32 %v2703, %v2705
        %v2707 = vrot.slane %v2699, %v2706
        %v2709 = vunpack.c.l.s4 1934713408
        %v2710 = vunpack.c.0.s8 %v2709
        %v2711 = vlaneseq
        %v2712 = vshrl.u32 %v2711, 7
        %v2713 = vsub.s32 %v2710, %v2712
        %v2714 = vrot.slane %v2700, %v2713
        %v2715 = vcombine.low %v2650, %v2666
        %v2716 = vcombine.high %v2650, %v2666
        %v2718 = vunpack.c.l.s4 1934713408
        %v2719 = vunpack.c.0.s8 %v2718
        %v2720 = vlaneseq
        %v2721 = vshrl.u32 %v2720, 7
        %v2722 = vsub.s32 %v2719, %v2721
        %v2723 = vrot.slane %v2715, %v2722
        %v2725 = vunpack.c.l.s4 1934713408
        %v2726 = vunpack.c.0.s8 %v2725
        %v2727 = vlaneseq
        %v2728 = vshrl.u32 %v2727, 7
        %v2729 = vsub.s32 %v2726, %v2728
        %v2730 = vrot.slane %v2716, %v2729
        %v2731 = vcombine.low %v2675, %v2691
        %v2732 = vcombine.high %v2675, %v2691
        %v2734 = vunpack.c.l.s4 1934713408
        %v2735 = vunpack.c.0.s8 %v2734
        %v2736 = vlaneseq
        %v2737 = vshrl.u32 %v2736, 7
        %v2738 = vsub.s32 %v2735, %v2737
        %v2739 = vrot.slane %v2731, %v2738
        %v2741 = vunpack.c.l.s4 1934713408
        %v2742 = vunpack.c.0.s8 %v2741
        %v2743 = vlaneseq
        %v2744 = vshrl.u32 %v2743, 7
        %v2745 = vsub.s32 %v2742, %v2744
        %v2746 = vrot.slane %v2732, %v2745
        %v2747 = vcombine.low %v2682, %v2698
        %v2748 = vcombine.high %v2682, %v2698
        %v2750 = vunpack.c.l.s4 1934713408
        %v2751 = vunpack.c.0.s8 %v2750
        %v2752 = vlaneseq
        %v2753 = vshrl.u32 %v2752, 7
        %v2754 = vsub.s32 %v2751, %v2753
        %v2755 = vrot.slane %v2747, %v2754
        %v2757 = vunpack.c.l.s4 1934713408
        %v2758 = vunpack.c.0.s8 %v2757
        %v2759 = vlaneseq
        %v2760 = vshrl.u32 %v2759, 7
        %v2761 = vsub.s32 %v2758, %v2760
        %v2762 = vrot.slane %v2748, %v2761
        %v2763 = vcombine.low %v2707, %v2739
        %v2764 = vcombine.high %v2707, %v2739
        %v2765 = vcombine.low %v2714, %v2746
        %v2766 = vcombine.high %v2714, %v2746
        %v2767 = vcombine.low %v2723, %v2755
        %v2768 = vcombine.high %v2723, %v2755
        %v2769 = vcombine.low %v2730, %v2762
        %v2770 = vcombine.high %v2730, %v2762
        %v2771 = vcombine.low %v2403, %v2467
        %v2772 = vcombine.high %v2403, %v2467
        %v2774 = vunpack.c.l.s4 1983009808
        %v2775 = vunpack.c.0.s8 %v2774
        %v2776 = vlaneseq
        %v2777 = vshrl.u32 %v2776, 7
        %v2778 = vsub.s32 %v2775, %v2777
        %v2779 = vrot.slane %v2771, %v2778
        %v2781 = vunpack.c.l.s4 1983009808
        %v2782 = vunpack.c.0.s8 %v2781
        %v2783 = vlaneseq
        %v2784 = vshrl.u32 %v2783, 7
        %v2785 = vsub.s32 %v2782, %v2784
        %v2786 = vrot.slane %v2772, %v2785
        %v2787 = vcombine.low %v2435, %v2499
        %v2788 = vcombine.high %v2435, %v2499
        %v2790 = vunpack.c.l.s4 1983009808
        %v2791 = vunpack.c.0.s8 %v2790
        %v2792 = vlaneseq
        %v2793 = vshrl.u32 %v2792, 7
        %v2794 = vsub.s32 %v2791, %v2793
        %v2795 = vrot.slane %v2787, %v2794
        %v2797 = vunpack.c.l.s4 1983009808
        %v2798 = vunpack.c.0.s8 %v2797
        %v2799 = vlaneseq
        %v2800 = vshrl.u32 %v2799, 7
        %v2801 = vsub.s32 %v2798, %v2800
        %v2802 = vrot.slane %v2788, %v2801
        %v2803 = vcombine.low %v2531, %v2595
        %v2804 = vcombine.high %v2531, %v2595
        %v2806 = vunpack.c.l.s4 1983009808
        %v2807 = vunpack.c.0.s8 %v2806
        %v2808 = vlaneseq
        %v2809 = vshrl.u32 %v2808, 7
        %v2810 = vsub.s32 %v2807, %v2809
        %v2811 = vrot.slane %v2803, %v2810
        %v2813 = vunpack.c.l.s4 1983009808
        %v2814 = vunpack.c.0.s8 %v2813
        %v2815 = vlaneseq
        %v2816 = vshrl.u32 %v2815, 7
        %v2817 = vsub.s32 %v2814, %v2816
        %v2818 = vrot.slane %v2804, %v2817
        %v2819 = vcombine.low %v2563, %v2627
        %v2820 = vcombine.high %v2563, %v2627
        %v2822 = vunpack.c.l.s4 1983009808
        %v2823 = vunpack.c.0.s8 %v2822
        %v2824 = vlaneseq
        %v2825 = vshrl.u32 %v2824, 7
        %v2826 = vsub.s32 %v2823, %v2825
        %v2827 = vrot.slane %v2819, %v2826
        %v2829 = vunpack.c.l.s4 1983009808
        %v2830 = vunpack.c.0.s8 %v2829
        %v2831 = vlaneseq
        %v2832 = vshrl.u32 %v2831, 7
        %v2833 = vsub.s32 %v2830, %v2832
        %v2834 = vrot.slane %v2820, %v2833
        %v2835 = vcombine.low %v2779, %v2795
        %v2836 = vcombine.high %v2779, %v2795
        %v2838 = vunpack.c.l.s4 1934713408
        %v2839 = vunpack.c.0.s8 %v2838
        %v2840 = vlaneseq
        %v2841 = vshrl.u32 %v2840, 7
        %v2842 = vsub.s32 %v2839, %v2841
        %v2843 = vrot.slane %v2835, %v2842
        %v2845 = vunpack.c.l.s4 1934713408
        %v2846 = vunpack.c.0.s8 %v2845
        %v2847 = vlaneseq
        %v2848 = vshrl.u32 %v2847, 7
        %v2849 = vsub.s32 %v2846, %v2848
        %v2850 = vrot.slane %v2836, %v2849
        %v2851 = vcombine.low %v2786, %v2802
        %v2852 = vcombine.high %v2786, %v2802
        %v2854 = vunpack.c.l.s4 1934713408
        %v2855 = vunpack.c.0.s8 %v2854
        %v2856 = vlaneseq
        %v2857 = vshrl.u32 %v2856, 7
        %v2858 = vsub.s32 %v2855, %v2857
        %v2859 = vrot.slane %v2851, %v2858
        %v2861 = vunpack.c.l.s4 1934713408
        %v2862 = vunpack.c.0.s8 %v2861
        %v2863 = vlaneseq
        %v2864 = vshrl.u32 %v2863, 7
        %v2865 = vsub.s32 %v2862, %v2864
        %v2866 = vrot.slane %v2852, %v2865
        %v2867 = vcombine.low %v2811, %v2827
        %v2868 = vcombine.high %v2811, %v2827
        %v2870 = vunpack.c.l.s4 1934713408
        %v2871 = vunpack.c.0.s8 %v2870
        %v2872 = vlaneseq
        %v2873 = vshrl.u32 %v2872, 7
        %v2874 = vsub.s32 %v2871, %v2873
        %v2875 = vrot.slane %v2867, %v2874
        %v2877 = vunpack.c.l.s4 1934713408
        %v2878 = vunpack.c.0.s8 %v2877
        %v2879 = vlaneseq
        %v2880 = vshrl.u32 %v2879, 7
        %v2881 = vsub.s32 %v2878, %v2880
        %v2882 = vrot.slane %v2868, %v2881
        %v2883 = vcombine.low %v2818, %v2834
        %v2884 = vcombine.high %v2818, %v2834
        %v2886 = vunpack.c.l.s4 1934713408
        %v2887 = vunpack.c.0.s8 %v2886
        %v2888 = vlaneseq
        %v2889 = vshrl.u32 %v2888, 7
        %v2890 = vsub.s32 %v2887, %v2889
        %v2891 = vrot.slane %v2883, %v2890
        %v2893 = vunpack.c.l.s4 1934713408
        %v2894 = vunpack.c.0.s8 %v2893
        %v2895 = vlaneseq
        %v2896 = vshrl.u32 %v2895, 7
        %v2897 = vsub.s32 %v2894, %v2896
        %v2898 = vrot.slane %v2884, %v2897
        %v2899 = vcombine.low %v2843, %v2875
        %v2900 = vcombine.high %v2843, %v2875
        %v2901 = vcombine.low %v2850, %v2882
        %v2902 = vcombine.high %v2850, %v2882
        %v2903 = vcombine.low %v2859, %v2891
        %v2904 = vcombine.high %v2859, %v2891
        %v2905 = vcombine.low %v2866, %v2898
        %v2906 = vcombine.high %v2866, %v2898
        %v2909 = vpack.i.b16 %v2899, %v2763
        %v2911 = vshrl.u32 %v2763, 16
        %v2912 = vshrl.u32 %v2899, 16
        %v2913 = vpack.i.b16 %v2912, %v2911
        %v2917 = vpack.i.b16 %v2900, %v2764
        %v2919 = vshrl.u32 %v2764, 16
        %v2920 = vshrl.u32 %v2900, 16
        %v2921 = vpack.i.b16 %v2920, %v2919
        %v2925 = vpack.i.b16 %v2901, %v2765
        %v2927 = vshrl.u32 %v2765, 16
        %v2928 = vshrl.u32 %v2901, 16
        %v2929 = vpack.i.b16 %v2928, %v2927
        %v2933 = vpack.i.b16 %v2902, %v2766
        %v2935 = vshrl.u32 %v2766, 16
        %v2936 = vshrl.u32 %v2902, 16
        %v2937 = vpack.i.b16 %v2936, %v2935
        %v2941 = vpack.i.b16 %v2903, %v2767
        %v2943 = vshrl.u32 %v2767, 16
        %v2944 = vshrl.u32 %v2903, 16
        %v2945 = vpack.i.b16 %v2944, %v2943
        %v2949 = vpack.i.b16 %v2904, %v2768
        %v2951 = vshrl.u32 %v2768, 16
        %v2952 = vshrl.u32 %v2904, 16
        %v2953 = vpack.i.b16 %v2952, %v2951
        %v2957 = vpack.i.b16 %v2905, %v2769
        %v2959 = vshrl.u32 %v2769, 16
        %v2960 = vshrl.u32 %v2905, 16
        %v2961 = vpack.i.b16 %v2960, %v2959
        %v2965 = vpack.i.b16 %v2906, %v2770
        %v2967 = vshrl.u32 %v2770, 16
        %v2968 = vshrl.u32 %v2906, 16
        %v2969 = vpack.i.b16 %v2968, %v2967
        %2971 = vxpose.xlu0.c.b16.start [1/8] %v2909, 128
        %2972 = vxpose.xlu0.c.b16.cont [2/8] 0, 128
        %2973 = vxpose.xlu0.c.b16.cont [3/8] 0, 128
        %2974 = vxpose.xlu0.c.b16.cont [4/8] 0, 128
        %2975 = vxpose.xlu0.c.b16.cont [5/8] 0, 128
        %2976 = vxpose.xlu0.c.b16.cont [6/8] 0, 128
        %2977 = vxpose.xlu0.c.b16.cont [7/8] 0, 128
        %2978 = vxpose.xlu0.c.b16.end [8/8] 0, 128
        %v2979 = vpop.trf.xlu0
        %v2980 = vpop.trf.xlu0
        %v2981 = vpop.trf.xlu0
        %v2982 = vpop.trf.xlu0
        %v2983 = vpop.trf.xlu0
        %v2984 = vpop.trf.xlu0
        %v2985 = vpop.trf.xlu0
        %v2986 = vpop.trf.xlu0
        %2987 = vxpose.xlu0.c.b16.start [1/8] %v2913, 128
        %2988 = vxpose.xlu0.c.b16.cont [2/8] 0, 128
        %2989 = vxpose.xlu0.c.b16.cont [3/8] 0, 128
        %2990 = vxpose.xlu0.c.b16.cont [4/8] 0, 128
        %2991 = vxpose.xlu0.c.b16.cont [5/8] 0, 128
        %2992 = vxpose.xlu0.c.b16.cont [6/8] 0, 128
        %2993 = vxpose.xlu0.c.b16.cont [7/8] 0, 128
        %2994 = vxpose.xlu0.c.b16.end [8/8] 0, 128
        %v2995 = vpop.trf.xlu0
        %v2996 = vpop.trf.xlu0
        %v2997 = vpop.trf.xlu0
        %v2998 = vpop.trf.xlu0
        %v2999 = vpop.trf.xlu0
        %v3000 = vpop.trf.xlu0
        %v3001 = vpop.trf.xlu0
        %v3002 = vpop.trf.xlu0
        %3003 = vxpose.xlu0.c.b16.start [1/8] %v2917, 128
        %3004 = vxpose.xlu0.c.b16.cont [2/8] 0, 128
        %3005 = vxpose.xlu0.c.b16.cont [3/8] 0, 128
        %3006 = vxpose.xlu0.c.b16.cont [4/8] 0, 128
        %3007 = vxpose.xlu0.c.b16.cont [5/8] 0, 128
        %3008 = vxpose.xlu0.c.b16.cont [6/8] 0, 128
        %3009 = vxpose.xlu0.c.b16.cont [7/8] 0, 128
        %3010 = vxpose.xlu0.c.b16.end [8/8] 0, 128
        %v3011 = vpop.trf.xlu0
        %v3012 = vpop.trf.xlu0
        %v3013 = vpop.trf.xlu0
        %v3014 = vpop.trf.xlu0
        %v3015 = vpop.trf.xlu0
        %v3016 = vpop.trf.xlu0
        %v3017 = vpop.trf.xlu0
        %v3018 = vpop.trf.xlu0
        %3019 = vxpose.xlu0.c.b16.start [1/8] %v2921, 128
        %3020 = vxpose.xlu0.c.b16.cont [2/8] 0, 128
        %3021 = vxpose.xlu0.c.b16.cont [3/8] 0, 128
        %3022 = vxpose.xlu0.c.b16.cont [4/8] 0, 128
        %3023 = vxpose.xlu0.c.b16.cont [5/8] 0, 128
        %3024 = vxpose.xlu0.c.b16.cont [6/8] 0, 128
        %3025 = vxpose.xlu0.c.b16.cont [7/8] 0, 128
        %3026 = vxpose.xlu0.c.b16.end [8/8] 0, 128
        %v3027 = vpop.trf.xlu0
        %v3028 = vpop.trf.xlu0
        %v3029 = vpop.trf.xlu0
        %v3030 = vpop.trf.xlu0
        %v3031 = vpop.trf.xlu0
        %v3032 = vpop.trf.xlu0
        %v3033 = vpop.trf.xlu0
        %v3034 = vpop.trf.xlu0
        %3035 = vxpose.xlu0.c.b16.start [1/8] %v2925, 128
        %3036 = vxpose.xlu0.c.b16.cont [2/8] 0, 128
        %3037 = vxpose.xlu0.c.b16.cont [3/8] 0, 128
        %3038 = vxpose.xlu0.c.b16.cont [4/8] 0, 128
        %3039 = vxpose.xlu0.c.b16.cont [5/8] 0, 128
        %3040 = vxpose.xlu0.c.b16.cont [6/8] 0, 128
        %3041 = vxpose.xlu0.c.b16.cont [7/8] 0, 128
        %3042 = vxpose.xlu0.c.b16.end [8/8] 0, 128
        %v3043 = vpop.trf.xlu0
        %v3044 = vpop.trf.xlu0
        %v3045 = vpop.trf.xlu0
        %v3046 = vpop.trf.xlu0
        %v3047 = vpop.trf.xlu0
        %v3048 = vpop.trf.xlu0
        %v3049 = vpop.trf.xlu0
        %v3050 = vpop.trf.xlu0
        %3051 = vxpose.xlu0.c.b16.start [1/8] %v2929, 128
        %3052 = vxpose.xlu0.c.b16.cont [2/8] 0, 128
        %3053 = vxpose.xlu0.c.b16.cont [3/8] 0, 128
        %3054 = vxpose.xlu0.c.b16.cont [4/8] 0, 128
        %3055 = vxpose.xlu0.c.b16.cont [5/8] 0, 128
        %3056 = vxpose.xlu0.c.b16.cont [6/8] 0, 128
        %3057 = vxpose.xlu0.c.b16.cont [7/8] 0, 128
        %3058 = vxpose.xlu0.c.b16.end [8/8] 0, 128
        %v3059 = vpop.trf.xlu0
        %v3060 = vpop.trf.xlu0
        %v3061 = vpop.trf.xlu0
        %v3062 = vpop.trf.xlu0
        %v3063 = vpop.trf.xlu0
        %v3064 = vpop.trf.xlu0
        %v3065 = vpop.trf.xlu0
        %v3066 = vpop.trf.xlu0
        %3067 = vxpose.xlu0.c.b16.start [1/8] %v2933, 128
        %3068 = vxpose.xlu0.c.b16.cont [2/8] 0, 128
        %3069 = vxpose.xlu0.c.b16.cont [3/8] 0, 128
        %3070 = vxpose.xlu0.c.b16.cont [4/8] 0, 128
        %3071 = vxpose.xlu0.c.b16.cont [5/8] 0, 128
        %3072 = vxpose.xlu0.c.b16.cont [6/8] 0, 128
        %3073 = vxpose.xlu0.c.b16.cont [7/8] 0, 128
        %3074 = vxpose.xlu0.c.b16.end [8/8] 0, 128
        %v3075 = vpop.trf.xlu0
        %v3076 = vpop.trf.xlu0
        %v3077 = vpop.trf.xlu0
        %v3078 = vpop.trf.xlu0
        %v3079 = vpop.trf.xlu0
        %v3080 = vpop.trf.xlu0
        %v3081 = vpop.trf.xlu0
        %v3082 = vpop.trf.xlu0
        %3083 = vxpose.xlu0.c.b16.start [1/8] %v2937, 128
        %3084 = vxpose.xlu0.c.b16.cont [2/8] 0, 128
        %3085 = vxpose.xlu0.c.b16.cont [3/8] 0, 128
        %3086 = vxpose.xlu0.c.b16.cont [4/8] 0, 128
        %3087 = vxpose.xlu0.c.b16.cont [5/8] 0, 128
        %3088 = vxpose.xlu0.c.b16.cont [6/8] 0, 128
        %3089 = vxpose.xlu0.c.b16.cont [7/8] 0, 128
        %3090 = vxpose.xlu0.c.b16.end [8/8] 0, 128
        %v3091 = vpop.trf.xlu0
        %v3092 = vpop.trf.xlu0
        %v3093 = vpop.trf.xlu0
        %v3094 = vpop.trf.xlu0
        %v3095 = vpop.trf.xlu0
        %v3096 = vpop.trf.xlu0
        %v3097 = vpop.trf.xlu0
        %v3098 = vpop.trf.xlu0
        %3099 = vxpose.xlu0.c.b16.start [1/8] %v2941, 128
        %3100 = vxpose.xlu0.c.b16.cont [2/8] 0, 128
        %3101 = vxpose.xlu0.c.b16.cont [3/8] 0, 128
        %3102 = vxpose.xlu0.c.b16.cont [4/8] 0, 128
        %3103 = vxpose.xlu0.c.b16.cont [5/8] 0, 128
        %3104 = vxpose.xlu0.c.b16.cont [6/8] 0, 128
        %3105 = vxpose.xlu0.c.b16.cont [7/8] 0, 128
        %3106 = vxpose.xlu0.c.b16.end [8/8] 0, 128
        %v3107 = vpop.trf.xlu0
        %v3108 = vpop.trf.xlu0
        %v3109 = vpop.trf.xlu0
        %v3110 = vpop.trf.xlu0
        %v3111 = vpop.trf.xlu0
        %v3112 = vpop.trf.xlu0
        %v3113 = vpop.trf.xlu0
        %v3114 = vpop.trf.xlu0
        %3115 = vxpose.xlu0.c.b16.start [1/8] %v2945, 128
        %3116 = vxpose.xlu0.c.b16.cont [2/8] 0, 128
        %3117 = vxpose.xlu0.c.b16.cont [3/8] 0, 128
        %3118 = vxpose.xlu0.c.b16.cont [4/8] 0, 128
        %3119 = vxpose.xlu0.c.b16.cont [5/8] 0, 128
        %3120 = vxpose.xlu0.c.b16.cont [6/8] 0, 128
        %3121 = vxpose.xlu0.c.b16.cont [7/8] 0, 128
        %3122 = vxpose.xlu0.c.b16.end [8/8] 0, 128
        %v3123 = vpop.trf.xlu0
        %v3124 = vpop.trf.xlu0
        %v3125 = vpop.trf.xlu0
        %v3126 = vpop.trf.xlu0
        %v3127 = vpop.trf.xlu0
        %v3128 = vpop.trf.xlu0
        %v3129 = vpop.trf.xlu0
        %v3130 = vpop.trf.xlu0
        %3131 = vxpose.xlu0.c.b16.start [1/8] %v2949, 128
        %3132 = vxpose.xlu0.c.b16.cont [2/8] 0, 128
        %3133 = vxpose.xlu0.c.b16.cont [3/8] 0, 128
        %3134 = vxpose.xlu0.c.b16.cont [4/8] 0, 128
        %3135 = vxpose.xlu0.c.b16.cont [5/8] 0, 128
        %3136 = vxpose.xlu0.c.b16.cont [6/8] 0, 128
        %3137 = vxpose.xlu0.c.b16.cont [7/8] 0, 128
        %3138 = vxpose.xlu0.c.b16.end [8/8] 0, 128
        %v3139 = vpop.trf.xlu0
        %v3140 = vpop.trf.xlu0
        %v3141 = vpop.trf.xlu0
        %v3142 = vpop.trf.xlu0
        %v3143 = vpop.trf.xlu0
        %v3144 = vpop.trf.xlu0
        %v3145 = vpop.trf.xlu0
        %v3146 = vpop.trf.xlu0
        %3147 = vxpose.xlu0.c.b16.start [1/8] %v2953, 128
        %3148 = vxpose.xlu0.c.b16.cont [2/8] 0, 128
        %3149 = vxpose.xlu0.c.b16.cont [3/8] 0, 128
        %3150 = vxpose.xlu0.c.b16.cont [4/8] 0, 128
        %3151 = vxpose.xlu0.c.b16.cont [5/8] 0, 128
        %3152 = vxpose.xlu0.c.b16.cont [6/8] 0, 128
        %3153 = vxpose.xlu0.c.b16.cont [7/8] 0, 128
        %3154 = vxpose.xlu0.c.b16.end [8/8] 0, 128
        %v3155 = vpop.trf.xlu0
        %v3156 = vpop.trf.xlu0
        %v3157 = vpop.trf.xlu0
        %v3158 = vpop.trf.xlu0
        %v3159 = vpop.trf.xlu0
        %v3160 = vpop.trf.xlu0
        %v3161 = vpop.trf.xlu0
        %v3162 = vpop.trf.xlu0
        %3163 = vxpose.xlu0.c.b16.start [1/8] %v2957, 128
        %3164 = vxpose.xlu0.c.b16.cont [2/8] 0, 128
        %3165 = vxpose.xlu0.c.b16.cont [3/8] 0, 128
        %3166 = vxpose.xlu0.c.b16.cont [4/8] 0, 128
        %3167 = vxpose.xlu0.c.b16.cont [5/8] 0, 128
        %3168 = vxpose.xlu0.c.b16.cont [6/8] 0, 128
        %3169 = vxpose.xlu0.c.b16.cont [7/8] 0, 128
        %3170 = vxpose.xlu0.c.b16.end [8/8] 0, 128
        %v3171 = vpop.trf.xlu0
        %v3172 = vpop.trf.xlu0
        %v3173 = vpop.trf.xlu0
        %v3174 = vpop.trf.xlu0
        %v3175 = vpop.trf.xlu0
        %v3176 = vpop.trf.xlu0
        %v3177 = vpop.trf.xlu0
        %v3178 = vpop.trf.xlu0
        %3179 = vxpose.xlu0.c.b16.start [1/8] %v2961, 128
        %3180 = vxpose.xlu0.c.b16.cont [2/8] 0, 128
        %3181 = vxpose.xlu0.c.b16.cont [3/8] 0, 128
        %3182 = vxpose.xlu0.c.b16.cont [4/8] 0, 128
        %3183 = vxpose.xlu0.c.b16.cont [5/8] 0, 128
        %3184 = vxpose.xlu0.c.b16.cont [6/8] 0, 128
        %3185 = vxpose.xlu0.c.b16.cont [7/8] 0, 128
        %3186 = vxpose.xlu0.c.b16.end [8/8] 0, 128
        %v3187 = vpop.trf.xlu0
        %v3188 = vpop.trf.xlu0
        %v3189 = vpop.trf.xlu0
        %v3190 = vpop.trf.xlu0
        %v3191 = vpop.trf.xlu0
        %v3192 = vpop.trf.xlu0
        %v3193 = vpop.trf.xlu0
        %v3194 = vpop.trf.xlu0
        %3195 = vxpose.xlu0.c.b16.start [1/8] %v2965, 128
        %3196 = vxpose.xlu0.c.b16.cont [2/8] 0, 128
        %3197 = vxpose.xlu0.c.b16.cont [3/8] 0, 128
        %3198 = vxpose.xlu0.c.b16.cont [4/8] 0, 128
        %3199 = vxpose.xlu0.c.b16.cont [5/8] 0, 128
        %3200 = vxpose.xlu0.c.b16.cont [6/8] 0, 128
        %3201 = vxpose.xlu0.c.b16.cont [7/8] 0, 128
        %3202 = vxpose.xlu0.c.b16.end [8/8] 0, 128
        %v3203 = vpop.trf.xlu0
        %v3204 = vpop.trf.xlu0
        %v3205 = vpop.trf.xlu0
        %v3206 = vpop.trf.xlu0
        %v3207 = vpop.trf.xlu0
        %v3208 = vpop.trf.xlu0
        %v3209 = vpop.trf.xlu0
        %v3210 = vpop.trf.xlu0
        %3211 = vxpose.xlu0.c.b16.start [1/8] %v2969, 128
        %3212 = vxpose.xlu0.c.b16.cont [2/8] 0, 128
        %3213 = vxpose.xlu0.c.b16.cont [3/8] 0, 128
        %3214 = vxpose.xlu0.c.b16.cont [4/8] 0, 128
        %3215 = vxpose.xlu0.c.b16.cont [5/8] 0, 128
        %3216 = vxpose.xlu0.c.b16.cont [6/8] 0, 128
        %3217 = vxpose.xlu0.c.b16.cont [7/8] 0, 128
        %3218 = vxpose.xlu0.c.b16.end [8/8] 0, 128
        %v3219 = vpop.trf.xlu0
        %v3220 = vpop.trf.xlu0
        %v3221 = vpop.trf.xlu0
        %v3222 = vpop.trf.xlu0
        %v3223 = vpop.trf.xlu0
        %v3224 = vpop.trf.xlu0
        %v3225 = vpop.trf.xlu0
        %v3226 = vpop.trf.xlu0
        %v3227 = vcombine.low %v2979, %v3043
        %v3229 = vunpack.c.l.s4 1983009808
        %v3230 = vunpack.c.0.s8 %v3229
        %v3231 = vlaneseq
        %v3232 = vshrl.u32 %v3231, 7
        %v3233 = vsub.s32 %v3230, %v3232
        %v3234 = vrot.slane %v3227, %v3233
        %v3235 = vcombine.low %v3011, %v3075
        %v3237 = vunpack.c.l.s4 1983009808
        %v3238 = vunpack.c.0.s8 %v3237
        %v3239 = vlaneseq
        %v3240 = vshrl.u32 %v3239, 7
        %v3241 = vsub.s32 %v3238, %v3240
        %v3242 = vrot.slane %v3235, %v3241
        %v3243 = vcombine.low %v3107, %v3171
        %v3245 = vunpack.c.l.s4 1983009808
        %v3246 = vunpack.c.0.s8 %v3245
        %v3247 = vlaneseq
        %v3248 = vshrl.u32 %v3247, 7
        %v3249 = vsub.s32 %v3246, %v3248
        %v3250 = vrot.slane %v3243, %v3249
        %v3251 = vcombine.low %v3139, %v3203
        %v3253 = vunpack.c.l.s4 1983009808
        %v3254 = vunpack.c.0.s8 %v3253
        %v3255 = vlaneseq
        %v3256 = vshrl.u32 %v3255, 7
        %v3257 = vsub.s32 %v3254, %v3256
        %v3258 = vrot.slane %v3251, %v3257
        %v3259 = vcombine.low %v3234, %v3242
        %v3260 = vcombine.high %v3234, %v3242
        %v3262 = vunpack.c.l.s4 1934713408
        %v3263 = vunpack.c.0.s8 %v3262
        %v3264 = vlaneseq
        %v3265 = vshrl.u32 %v3264, 7
        %v3266 = vsub.s32 %v3263, %v3265
        %v3267 = vrot.slane %v3259, %v3266
        %v3269 = vunpack.c.l.s4 1934713408
        %v3270 = vunpack.c.0.s8 %v3269
        %v3271 = vlaneseq
        %v3272 = vshrl.u32 %v3271, 7
        %v3273 = vsub.s32 %v3270, %v3272
        %v3274 = vrot.slane %v3260, %v3273
        %v3275 = vcombine.low %v3250, %v3258
        %v3276 = vcombine.high %v3250, %v3258
        %v3278 = vunpack.c.l.s4 1934713408
        %v3279 = vunpack.c.0.s8 %v3278
        %v3280 = vlaneseq
        %v3281 = vshrl.u32 %v3280, 7
        %v3282 = vsub.s32 %v3279, %v3281
        %v3283 = vrot.slane %v3275, %v3282
        %v3285 = vunpack.c.l.s4 1934713408
        %v3286 = vunpack.c.0.s8 %v3285
        %v3287 = vlaneseq
        %v3288 = vshrl.u32 %v3287, 7
        %v3289 = vsub.s32 %v3286, %v3288
        %v3290 = vrot.slane %v3276, %v3289
        %v3291 = vcombine.low %v3267, %v3283
        %v3292 = vcombine.high %v3267, %v3283
        %v3293 = vcombine.low %v3274, %v3290
        %v3294 = vcombine.high %v3274, %v3290
        %v3295 = vcombine.low %v2995, %v3059
        %v3297 = vunpack.c.l.s4 1983009808
        %v3298 = vunpack.c.0.s8 %v3297
        %v3299 = vlaneseq
        %v3300 = vshrl.u32 %v3299, 7
        %v3301 = vsub.s32 %v3298, %v3300
        %v3302 = vrot.slane %v3295, %v3301
        %v3303 = vcombine.low %v3027, %v3091
        %v3305 = vunpack.c.l.s4 1983009808
        %v3306 = vunpack.c.0.s8 %v3305
        %v3307 = vlaneseq
        %v3308 = vshrl.u32 %v3307, 7
        %v3309 = vsub.s32 %v3306, %v3308
        %v3310 = vrot.slane %v3303, %v3309
        %v3311 = vcombine.low %v3123, %v3187
        %v3313 = vunpack.c.l.s4 1983009808
        %v3314 = vunpack.c.0.s8 %v3313
        %v3315 = vlaneseq
        %v3316 = vshrl.u32 %v3315, 7
        %v3317 = vsub.s32 %v3314, %v3316
        %v3318 = vrot.slane %v3311, %v3317
        %v3319 = vcombine.low %v3155, %v3219
        %v3321 = vunpack.c.l.s4 1983009808
        %v3322 = vunpack.c.0.s8 %v3321
        %v3323 = vlaneseq
        %v3324 = vshrl.u32 %v3323, 7
        %v3325 = vsub.s32 %v3322, %v3324
        %v3326 = vrot.slane %v3319, %v3325
        %v3327 = vcombine.low %v3302, %v3310
        %v3328 = vcombine.high %v3302, %v3310
        %v3330 = vunpack.c.l.s4 1934713408
        %v3331 = vunpack.c.0.s8 %v3330
        %v3332 = vlaneseq
        %v3333 = vshrl.u32 %v3332, 7
        %v3334 = vsub.s32 %v3331, %v3333
        %v3335 = vrot.slane %v3327, %v3334
        %v3337 = vunpack.c.l.s4 1934713408
        %v3338 = vunpack.c.0.s8 %v3337
        %v3339 = vlaneseq
        %v3340 = vshrl.u32 %v3339, 7
        %v3341 = vsub.s32 %v3338, %v3340
        %v3342 = vrot.slane %v3328, %v3341
        %v3343 = vcombine.low %v3318, %v3326
        %v3344 = vcombine.high %v3318, %v3326
        %v3346 = vunpack.c.l.s4 1934713408
        %v3347 = vunpack.c.0.s8 %v3346
        %v3348 = vlaneseq
        %v3349 = vshrl.u32 %v3348, 7
        %v3350 = vsub.s32 %v3347, %v3349
        %v3351 = vrot.slane %v3343, %v3350
        %v3353 = vunpack.c.l.s4 1934713408
        %v3354 = vunpack.c.0.s8 %v3353
        %v3355 = vlaneseq
        %v3356 = vshrl.u32 %v3355, 7
        %v3357 = vsub.s32 %v3354, %v3356
        %v3358 = vrot.slane %v3344, %v3357
        %v3359 = vcombine.low %v3335, %v3351
        %v3360 = vcombine.high %v3335, %v3351
        %v3361 = vcombine.low %v3342, %v3358
        %v3362 = vcombine.high %v3342, %v3358
        %v3365 = vpack.i.b16 %v3359, %v3291
        %v3367 = vshrl.u32 %v3291, 16
        %v3368 = vshrl.u32 %v3359, 16
        %v3369 = vpack.i.b16 %v3368, %v3367
        %v3373 = vpack.i.b16 %v3360, %v3292
        %v3375 = vshrl.u32 %v3292, 16
        %v3376 = vshrl.u32 %v3360, 16
        %v3377 = vpack.i.b16 %v3376, %v3375
        %v3381 = vpack.i.b16 %v3361, %v3293
        %v3383 = vshrl.u32 %v3293, 16
        %v3384 = vshrl.u32 %v3361, 16
        %v3385 = vpack.i.b16 %v3384, %v3383
        %v3389 = vpack.i.b16 %v3362, %v3294
        %v3391 = vshrl.u32 %v3294, 16
        %v3392 = vshrl.u32 %v3362, 16
        %v3393 = vpack.i.b16 %v3392, %v3391
        %v3395 = vunpack.c.l.b16 %v2333
        %v3396 = vunpack.c.l.b16 %v2357
        %v3397 = vpack.c.b16 %v3396, %v3395
        %vm3398 = vcmask 130048
        %v3400 = vsel %vm3398, %v3397, 0
        %3402 = vmatprep.subr.bf16.mxu0 0
        %3403 = vmatpush1.bf16.msra.mxu0 %v3365
        %3404 = vmatprep.subr.bf16.mxu0 0
        %3405 = vmatpush1.bf16.msra.mxu0 0
        %3406 = vmatprep.subr.bf16.mxu0 0
        %3407 = vmatpush1.bf16.msra.mxu0 0
        %3408 = vmatprep.subr.bf16.mxu0 0
        %3409 = vmatpush1.bf16.msra.mxu0 0
        %3410 = vmatprep.subr.bf16.mxu0 0
        %3411 = vmatpush1.bf16.msra.mxu0 0
        %3412 = vmatprep.subr.bf16.mxu0 0
        %3413 = vmatpush1.bf16.msra.mxu0 0
        %3414 = vmatprep.subr.bf16.mxu0 0
        %3415 = vmatpush1.bf16.msra.mxu0 0
        %3416 = vmatprep.subr.bf16.mxu0 0
        %3417 = vmatpush1.bf16.msra.mxu0 0
        %3418 = vmatprep.subr.bf16.mxu0 0
        %3419 = vmatpush1.bf16.msra.mxu0 0
        %3420 = vmatprep.subr.bf16.mxu0 0
        %3421 = vmatpush1.bf16.msra.mxu0 0
        %3422 = vmatprep.subr.bf16.mxu0 0
        %3423 = vmatpush1.bf16.msra.mxu0 0
        %3424 = vmatprep.subr.bf16.mxu0 0
        %3425 = vmatpush1.bf16.msra.mxu0 0
        %3426 = vmatprep.subr.bf16.mxu0 0
        %3427 = vmatpush1.bf16.msra.mxu0 0
        %3428 = vmatprep.subr.bf16.mxu0 0
        %3429 = vmatpush1.bf16.msra.mxu0 0
        %3430 = vmatprep.subr.bf16.mxu0 0
        %3431 = vmatpush1.bf16.msra.mxu0 0
        %3432 = vmatprep.subr.bf16.mxu0 0
        %3433 = vmatpush1.bf16.msra.mxu0 0
        %3434 = vmatprep.mubr.bf16.mxu0 0
        %3435 = vmatmul.mubr.bf16.gmra.mrb[0].mxu0 %v3400
        %v3436 = vpop.f32.mrb[0].mxu0
        %v3437 = vadd.f32 0.0, %v3436
        %v3438 = vpop.f32.mrb[0].mxu0
        %v3439 = vpop.f32.mrb[0].mxu0
        %v3440 = vadd.f32 0.0, %v3439
        %v3441 = vpop.f32.mrb[0].mxu0
        %3442 = vdwg.mxu0
        %v3443 = vunpack.c.l.b16 %v2336
        %v3444 = vunpack.c.l.b16 %v2360
        %v3445 = vpack.c.b16 %v3444, %v3443
        %v3447 = vsel %vm3398, %v3445, 0
        %3449 = vmatprep.subr.bf16.mxu0 0
        %3450 = vmatpush1.bf16.msra.mxu0 %v3369
        %3451 = vmatprep.subr.bf16.mxu0 0
        %3452 = vmatpush1.bf16.msra.mxu0 0
        %3453 = vmatprep.subr.bf16.mxu0 0
        %3454 = vmatpush1.bf16.msra.mxu0 0
        %3455 = vmatprep.subr.bf16.mxu0 0
        %3456 = vmatpush1.bf16.msra.mxu0 0
        %3457 = vmatprep.subr.bf16.mxu0 0
        %3458 = vmatpush1.bf16.msra.mxu0 0
        %3459 = vmatprep.subr.bf16.mxu0 0
        %3460 = vmatpush1.bf16.msra.mxu0 0
        %3461 = vmatprep.subr.bf16.mxu0 0
        %3462 = vmatpush1.bf16.msra.mxu0 0
        %3463 = vmatprep.subr.bf16.mxu0 0
        %3464 = vmatpush1.bf16.msra.mxu0 0
        %3465 = vmatprep.subr.bf16.mxu0 0
        %3466 = vmatpush1.bf16.msra.mxu0 0
        %3467 = vmatprep.subr.bf16.mxu0 0
        %3468 = vmatpush1.bf16.msra.mxu0 0
        %3469 = vmatprep.subr.bf16.mxu0 0
        %3470 = vmatpush1.bf16.msra.mxu0 0
        %3471 = vmatprep.subr.bf16.mxu0 0
        %3472 = vmatpush1.bf16.msra.mxu0 0
        %3473 = vmatprep.subr.bf16.mxu0 0
        %3474 = vmatpush1.bf16.msra.mxu0 0
        %3475 = vmatprep.subr.bf16.mxu0 0
        %3476 = vmatpush1.bf16.msra.mxu0 0
        %3477 = vmatprep.subr.bf16.mxu0 0
        %3478 = vmatpush1.bf16.msra.mxu0 0
        %3479 = vmatprep.subr.bf16.mxu0 0
        %3480 = vmatpush1.bf16.msra.mxu0 0
        %3481 = vmatprep.mubr.bf16.mxu0 0
        %3482 = vmatmul.mubr.bf16.gmra.mrb[0].mxu0 %v3447
        %v3483 = vpop.f32.mrb[0].mxu0
        %v3484 = vadd.f32 0.0, %v3483
        %v3485 = vpop.f32.mrb[0].mxu0
        %v3486 = vpop.f32.mrb[0].mxu0
        %v3487 = vadd.f32 0.0, %v3486
        %v3488 = vpop.f32.mrb[0].mxu0
        %3489 = vdwg.mxu0
        %v3490 = vunpack.c.l.b16 %v2339
        %v3491 = vunpack.c.l.b16 %v2363
        %v3492 = vpack.c.b16 %v3491, %v3490
        %v3494 = vsel %vm3398, %v3492, 0
        %3496 = vmatprep.subr.bf16.mxu0 0
        %3497 = vmatpush1.bf16.msra.mxu0 %v3373
        %3498 = vmatprep.subr.bf16.mxu0 0
        %3499 = vmatpush1.bf16.msra.mxu0 0
        %3500 = vmatprep.subr.bf16.mxu0 0
        %3501 = vmatpush1.bf16.msra.mxu0 0
        %3502 = vmatprep.subr.bf16.mxu0 0
        %3503 = vmatpush1.bf16.msra.mxu0 0
        %3504 = vmatprep.subr.bf16.mxu0 0
        %3505 = vmatpush1.bf16.msra.mxu0 0
        %3506 = vmatprep.subr.bf16.mxu0 0
        %3507 = vmatpush1.bf16.msra.mxu0 0
        %3508 = vmatprep.subr.bf16.mxu0 0
        %3509 = vmatpush1.bf16.msra.mxu0 0
        %3510 = vmatprep.subr.bf16.mxu0 0
        %3511 = vmatpush1.bf16.msra.mxu0 0
        %3512 = vmatprep.subr.bf16.mxu0 0
        %3513 = vmatpush1.bf16.msra.mxu0 0
        %3514 = vmatprep.subr.bf16.mxu0 0
        %3515 = vmatpush1.bf16.msra.mxu0 0
        %3516 = vmatprep.subr.bf16.mxu0 0
        %3517 = vmatpush1.bf16.msra.mxu0 0
        %3518 = vmatprep.subr.bf16.mxu0 0
        %3519 = vmatpush1.bf16.msra.mxu0 0
        %3520 = vmatprep.subr.bf16.mxu0 0
        %3521 = vmatpush1.bf16.msra.mxu0 0
        %3522 = vmatprep.subr.bf16.mxu0 0
        %3523 = vmatpush1.bf16.msra.mxu0 0
        %3524 = vmatprep.subr.bf16.mxu0 0
        %3525 = vmatpush1.bf16.msra.mxu0 0
        %3526 = vmatprep.subr.bf16.mxu0 0
        %3527 = vmatpush1.bf16.msra.mxu0 0
        %3528 = vmatprep.mubr.bf16.mxu0 0
        %3529 = vmatmul.mubr.bf16.gmra.mrb[0].mxu0 %v3494
        %v3530 = vpop.f32.mrb[0].mxu0
        %v3531 = vadd.f32 0.0, %v3530
        %v3532 = vpop.f32.mrb[0].mxu0
        %v3533 = vpop.f32.mrb[0].mxu0
        %v3534 = vadd.f32 0.0, %v3533
        %v3535 = vpop.f32.mrb[0].mxu0
        %3536 = vdwg.mxu0
        %v3537 = vunpack.c.l.b16 %v2342
        %v3538 = vunpack.c.l.b16 %v2366
        %v3539 = vpack.c.b16 %v3538, %v3537
        %v3541 = vsel %vm3398, %v3539, 0
        %3543 = vmatprep.subr.bf16.mxu0 0
        %3544 = vmatpush1.bf16.msra.mxu0 %v3377
        %3545 = vmatprep.subr.bf16.mxu0 0
        %3546 = vmatpush1.bf16.msra.mxu0 0
        %3547 = vmatprep.subr.bf16.mxu0 0
        %3548 = vmatpush1.bf16.msra.mxu0 0
        %3549 = vmatprep.subr.bf16.mxu0 0
        %3550 = vmatpush1.bf16.msra.mxu0 0
        %3551 = vmatprep.subr.bf16.mxu0 0
        %3552 = vmatpush1.bf16.msra.mxu0 0
        %3553 = vmatprep.subr.bf16.mxu0 0
        %3554 = vmatpush1.bf16.msra.mxu0 0
        %3555 = vmatprep.subr.bf16.mxu0 0
        %3556 = vmatpush1.bf16.msra.mxu0 0
        %3557 = vmatprep.subr.bf16.mxu0 0
        %3558 = vmatpush1.bf16.msra.mxu0 0
        %3559 = vmatprep.subr.bf16.mxu0 0
        %3560 = vmatpush1.bf16.msra.mxu0 0
        %3561 = vmatprep.subr.bf16.mxu0 0
        %3562 = vmatpush1.bf16.msra.mxu0 0
        %3563 = vmatprep.subr.bf16.mxu0 0
        %3564 = vmatpush1.bf16.msra.mxu0 0
        %3565 = vmatprep.subr.bf16.mxu0 0
        %3566 = vmatpush1.bf16.msra.mxu0 0
        %3567 = vmatprep.subr.bf16.mxu0 0
        %3568 = vmatpush1.bf16.msra.mxu0 0
        %3569 = vmatprep.subr.bf16.mxu0 0
        %3570 = vmatpush1.bf16.msra.mxu0 0
        %3571 = vmatprep.subr.bf16.mxu0 0
        %3572 = vmatpush1.bf16.msra.mxu0 0
        %3573 = vmatprep.subr.bf16.mxu0 0
        %3574 = vmatpush1.bf16.msra.mxu0 0
        %3575 = vmatprep.mubr.bf16.mxu0 0
        %3576 = vmatmul.mubr.bf16.gmra.mrb[0].mxu0 %v3541
        %v3577 = vpop.f32.mrb[0].mxu0
        %v3578 = vadd.f32 0.0, %v3577
        %v3579 = vpop.f32.mrb[0].mxu0
        %v3580 = vpop.f32.mrb[0].mxu0
        %v3581 = vadd.f32 0.0, %v3580
        %v3582 = vpop.f32.mrb[0].mxu0
        %3583 = vdwg.mxu0
        %v3584 = vunpack.c.l.b16 %v2345
        %v3585 = vunpack.c.l.b16 %v2369
        %v3586 = vpack.c.b16 %v3585, %v3584
        %v3588 = vsel %vm3398, %v3586, 0
        %3590 = vmatprep.subr.bf16.mxu0 0
        %3591 = vmatpush1.bf16.msra.mxu0 %v3381
        %3592 = vmatprep.subr.bf16.mxu0 0
        %3593 = vmatpush1.bf16.msra.mxu0 0
        %3594 = vmatprep.subr.bf16.mxu0 0
        %3595 = vmatpush1.bf16.msra.mxu0 0
        %3596 = vmatprep.subr.bf16.mxu0 0
        %3597 = vmatpush1.bf16.msra.mxu0 0
        %3598 = vmatprep.subr.bf16.mxu0 0
        %3599 = vmatpush1.bf16.msra.mxu0 0
        %3600 = vmatprep.subr.bf16.mxu0 0
        %3601 = vmatpush1.bf16.msra.mxu0 0
        %3602 = vmatprep.subr.bf16.mxu0 0
        %3603 = vmatpush1.bf16.msra.mxu0 0
        %3604 = vmatprep.subr.bf16.mxu0 0
        %3605 = vmatpush1.bf16.msra.mxu0 0
        %3606 = vmatprep.subr.bf16.mxu0 0
        %3607 = vmatpush1.bf16.msra.mxu0 0
        %3608 = vmatprep.subr.bf16.mxu0 0
        %3609 = vmatpush1.bf16.msra.mxu0 0
        %3610 = vmatprep.subr.bf16.mxu0 0
        %3611 = vmatpush1.bf16.msra.mxu0 0
        %3612 = vmatprep.subr.bf16.mxu0 0
        %3613 = vmatpush1.bf16.msra.mxu0 0
        %3614 = vmatprep.subr.bf16.mxu0 0
        %3615 = vmatpush1.bf16.msra.mxu0 0
        %3616 = vmatprep.subr.bf16.mxu0 0
        %3617 = vmatpush1.bf16.msra.mxu0 0
        %3618 = vmatprep.subr.bf16.mxu0 0
        %3619 = vmatpush1.bf16.msra.mxu0 0
        %3620 = vmatprep.subr.bf16.mxu0 0
        %3621 = vmatpush1.bf16.msra.mxu0 0
        %3622 = vmatprep.mubr.bf16.mxu0 0
        %3623 = vmatmul.mubr.bf16.gmra.mrb[0].mxu0 %v3588
        %v3624 = vpop.f32.mrb[0].mxu0
        %v3625 = vadd.f32 0.0, %v3624
        %v3626 = vpop.f32.mrb[0].mxu0
        %v3627 = vpop.f32.mrb[0].mxu0
        %v3628 = vadd.f32 0.0, %v3627
        %v3629 = vpop.f32.mrb[0].mxu0
        %3630 = vdwg.mxu0
        %v3631 = vunpack.c.l.b16 %v2348
        %v3632 = vunpack.c.l.b16 %v2372
        %v3633 = vpack.c.b16 %v3632, %v3631
        %v3635 = vsel %vm3398, %v3633, 0
        %3637 = vmatprep.subr.bf16.mxu0 0
        %3638 = vmatpush1.bf16.msra.mxu0 %v3385
        %3639 = vmatprep.subr.bf16.mxu0 0
        %3640 = vmatpush1.bf16.msra.mxu0 0
        %3641 = vmatprep.subr.bf16.mxu0 0
        %3642 = vmatpush1.bf16.msra.mxu0 0
        %3643 = vmatprep.subr.bf16.mxu0 0
        %3644 = vmatpush1.bf16.msra.mxu0 0
        %3645 = vmatprep.subr.bf16.mxu0 0
        %3646 = vmatpush1.bf16.msra.mxu0 0
        %3647 = vmatprep.subr.bf16.mxu0 0
        %3648 = vmatpush1.bf16.msra.mxu0 0
        %3649 = vmatprep.subr.bf16.mxu0 0
        %3650 = vmatpush1.bf16.msra.mxu0 0
        %3651 = vmatprep.subr.bf16.mxu0 0
        %3652 = vmatpush1.bf16.msra.mxu0 0
        %3653 = vmatprep.subr.bf16.mxu0 0
        %3654 = vmatpush1.bf16.msra.mxu0 0
        %3655 = vmatprep.subr.bf16.mxu0 0
        %3656 = vmatpush1.bf16.msra.mxu0 0
        %3657 = vmatprep.subr.bf16.mxu0 0
        %3658 = vmatpush1.bf16.msra.mxu0 0
        %3659 = vmatprep.subr.bf16.mxu0 0
        %3660 = vmatpush1.bf16.msra.mxu0 0
        %3661 = vmatprep.subr.bf16.mxu0 0
        %3662 = vmatpush1.bf16.msra.mxu0 0
        %3663 = vmatprep.subr.bf16.mxu0 0
        %3664 = vmatpush1.bf16.msra.mxu0 0
        %3665 = vmatprep.subr.bf16.mxu0 0
        %3666 = vmatpush1.bf16.msra.mxu0 0
        %3667 = vmatprep.subr.bf16.mxu0 0
        %3668 = vmatpush1.bf16.msra.mxu0 0
        %3669 = vmatprep.mubr.bf16.mxu0 0
        %3670 = vmatmul.mubr.bf16.gmra.mrb[0].mxu0 %v3635
        %v3671 = vpop.f32.mrb[0].mxu0
        %v3672 = vadd.f32 0.0, %v3671
        %v3673 = vpop.f32.mrb[0].mxu0
        %v3674 = vpop.f32.mrb[0].mxu0
        %v3675 = vadd.f32 0.0, %v3674
        %v3676 = vpop.f32.mrb[0].mxu0
        %3677 = vdwg.mxu0
        %v3678 = vunpack.c.l.b16 %v2351
        %v3679 = vunpack.c.l.b16 %v2375
        %v3680 = vpack.c.b16 %v3679, %v3678
        %v3682 = vsel %vm3398, %v3680, 0
        %3684 = vmatprep.subr.bf16.mxu0 0
        %3685 = vmatpush1.bf16.msra.mxu0 %v3389
        %3686 = vmatprep.subr.bf16.mxu0 0
        %3687 = vmatpush1.bf16.msra.mxu0 0
        %3688 = vmatprep.subr.bf16.mxu0 0
        %3689 = vmatpush1.bf16.msra.mxu0 0
        %3690 = vmatprep.subr.bf16.mxu0 0
        %3691 = vmatpush1.bf16.msra.mxu0 0
        %3692 = vmatprep.subr.bf16.mxu0 0
        %3693 = vmatpush1.bf16.msra.mxu0 0
        %3694 = vmatprep.subr.bf16.mxu0 0
        %3695 = vmatpush1.bf16.msra.mxu0 0
        %3696 = vmatprep.subr.bf16.mxu0 0
        %3697 = vmatpush1.bf16.msra.mxu0 0
        %3698 = vmatprep.subr.bf16.mxu0 0
        %3699 = vmatpush1.bf16.msra.mxu0 0
        %3700 = vmatprep.subr.bf16.mxu0 0
        %3701 = vmatpush1.bf16.msra.mxu0 0
        %3702 = vmatprep.subr.bf16.mxu0 0
        %3703 = vmatpush1.bf16.msra.mxu0 0
        %3704 = vmatprep.subr.bf16.mxu0 0
        %3705 = vmatpush1.bf16.msra.mxu0 0
        %3706 = vmatprep.subr.bf16.mxu0 0
        %3707 = vmatpush1.bf16.msra.mxu0 0
        %3708 = vmatprep.subr.bf16.mxu0 0
        %3709 = vmatpush1.bf16.msra.mxu0 0
        %3710 = vmatprep.subr.bf16.mxu0 0
        %3711 = vmatpush1.bf16.msra.mxu0 0
        %3712 = vmatprep.subr.bf16.mxu0 0
        %3713 = vmatpush1.bf16.msra.mxu0 0
        %3714 = vmatprep.subr.bf16.mxu0 0
        %3715 = vmatpush1.bf16.msra.mxu0 0
        %3716 = vmatprep.mubr.bf16.mxu0 0
        %3717 = vmatmul.mubr.bf16.gmra.mrb[0].mxu0 %v3682
        %v3718 = vpop.f32.mrb[0].mxu0
        %v3719 = vadd.f32 0.0, %v3718
        %v3720 = vpop.f32.mrb[0].mxu0
        %v3721 = vpop.f32.mrb[0].mxu0
        %v3722 = vadd.f32 0.0, %v3721
        %v3723 = vpop.f32.mrb[0].mxu0
        %3724 = vdwg.mxu0
        %v3725 = vunpack.c.l.b16 %v2354
        %v3726 = vunpack.c.l.b16 %v2378
        %v3727 = vpack.c.b16 %v3726, %v3725
        %v3729 = vsel %vm3398, %v3727, 0
        %3731 = vmatprep.subr.bf16.mxu0 0
        %3732 = vmatpush1.bf16.msra.mxu0 %v3393
        %3733 = vmatprep.subr.bf16.mxu0 0
        %3734 = vmatpush1.bf16.msra.mxu0 0
        %3735 = vmatprep.subr.bf16.mxu0 0
        %3736 = vmatpush1.bf16.msra.mxu0 0
        %3737 = vmatprep.subr.bf16.mxu0 0
        %3738 = vmatpush1.bf16.msra.mxu0 0
        %3739 = vmatprep.subr.bf16.mxu0 0
        %3740 = vmatpush1.bf16.msra.mxu0 0
        %3741 = vmatprep.subr.bf16.mxu0 0
        %3742 = vmatpush1.bf16.msra.mxu0 0
        %3743 = vmatprep.subr.bf16.mxu0 0
        %3744 = vmatpush1.bf16.msra.mxu0 0
        %3745 = vmatprep.subr.bf16.mxu0 0
        %3746 = vmatpush1.bf16.msra.mxu0 0
        %3747 = vmatprep.subr.bf16.mxu0 0
        %3748 = vmatpush1.bf16.msra.mxu0 0
        %3749 = vmatprep.subr.bf16.mxu0 0
        %3750 = vmatpush1.bf16.msra.mxu0 0
        %3751 = vmatprep.subr.bf16.mxu0 0
        %3752 = vmatpush1.bf16.msra.mxu0 0
        %3753 = vmatprep.subr.bf16.mxu0 0
        %3754 = vmatpush1.bf16.msra.mxu0 0
        %3755 = vmatprep.subr.bf16.mxu0 0
        %3756 = vmatpush1.bf16.msra.mxu0 0
        %3757 = vmatprep.subr.bf16.mxu0 0
        %3758 = vmatpush1.bf16.msra.mxu0 0
        %3759 = vmatprep.subr.bf16.mxu0 0
        %3760 = vmatpush1.bf16.msra.mxu0 0
        %3761 = vmatprep.subr.bf16.mxu0 0
        %3762 = vmatpush1.bf16.msra.mxu0 0
        %3763 = vmatprep.mubr.bf16.mxu0 0
        %3764 = vmatmul.mubr.bf16.gmra.mrb[0].mxu0 %v3729
        %v3765 = vpop.f32.mrb[0].mxu0
        %v3766 = vadd.f32 0.0, %v3765
        %v3767 = vpop.f32.mrb[0].mxu0
        %v3768 = vpop.f32.mrb[0].mxu0
        %v3769 = vadd.f32 0.0, %v3768
        %v3770 = vpop.f32.mrb[0].mxu0
        %3771 = vdwg.mxu0
        %v3772 = vld [vmem:[#allocation3] sm:$0xff]
        %v3773 = vld [vmem:[#allocation3 + $0x8] sm:$0xff]
        %v3774 = vld [vmem:[#allocation3 + $0x10] sm:$0xff]
        %v3775 = vld [vmem:[#allocation3 + $0x18] sm:$0xff]
        %v3776 = vld [vmem:[#allocation3 + $0x20] sm:$0xff]
        %v3777 = vld [vmem:[#allocation3 + $0x28] sm:$0xff]
        %v3778 = vld [vmem:[#allocation3 + $0x30] sm:$0xff]
        %v3779 = vld [vmem:[#allocation3 + $0x38] sm:$0xff]
        %v3780 = vld [vmem:[#allocation3 + $0x40] sm:$0xff]
        %v3781 = vld [vmem:[#allocation3 + $0x48] sm:$0xff]
        %v3782 = vld [vmem:[#allocation3 + $0x50] sm:$0xff]
        %v3783 = vld [vmem:[#allocation3 + $0x58] sm:$0xff]
        %v3784 = vld [vmem:[#allocation3 + $0x60] sm:$0xff]
        %v3785 = vld [vmem:[#allocation3 + $0x68] sm:$0xff]
        %v3786 = vld [vmem:[#allocation3 + $0x70] sm:$0xff]
        %v3787 = vld [vmem:[#allocation3 + $0x78] sm:$0xff]
        %v3788 = vsel %vm3398, %v3437, -inf
        %3789 = vmax.xlane.f32.xlu0 %v3788
        %v3790 = vpop.xlane.xlu0 %3789
        %v3791 = vsel %vm3398, %v3440, -inf
        %3792 = vmax.xlane.f32.xlu0 %v3791
        %v3793 = vpop.xlane.xlu0 %3792
        %v3794 = vsel %vm3398, %v3484, -inf
        %3795 = vmax.xlane.f32.xlu0 %v3794
        %v3796 = vpop.xlane.xlu0 %3795
        %v3797 = vsel %vm3398, %v3487, -inf
        %3798 = vmax.xlane.f32.xlu0 %v3797
        %v3799 = vpop.xlane.xlu0 %3798
        %v3800 = vsel %vm3398, %v3531, -inf
        %3801 = vmax.xlane.f32.xlu0 %v3800
        %v3802 = vpop.xlane.xlu0 %3801
        %v3803 = vsel %vm3398, %v3534, -inf
        %3804 = vmax.xlane.f32.xlu0 %v3803
        %v3805 = vpop.xlane.xlu0 %3804
        %v3806 = vsel %vm3398, %v3578, -inf
        %3807 = vmax.xlane.f32.xlu0 %v3806
        %v3808 = vpop.xlane.xlu0 %3807
        %v3809 = vsel %vm3398, %v3581, -inf
        %3810 = vmax.xlane.f32.xlu0 %v3809
        %v3811 = vpop.xlane.xlu0 %3810
        %v3812 = vsel %vm3398, %v3625, -inf
        %3813 = vmax.xlane.f32.xlu0 %v3812
        %v3814 = vpop.xlane.xlu0 %3813
        %v3815 = vsel %vm3398, %v3628, -inf
        %3816 = vmax.xlane.f32.xlu0 %v3815
        %v3817 = vpop.xlane.xlu0 %3816
        %v3818 = vsel %vm3398, %v3672, -inf
        %3819 = vmax.xlane.f32.xlu0 %v3818
        %v3820 = vpop.xlane.xlu0 %3819
        %v3821 = vsel %vm3398, %v3675, -inf
        %3822 = vmax.xlane.f32.xlu0 %v3821
        %v3823 = vpop.xlane.xlu0 %3822
        %v3824 = vsel %vm3398, %v3719, -inf
        %3825 = vmax.xlane.f32.xlu0 %v3824
        %v3826 = vpop.xlane.xlu0 %3825
        %v3827 = vsel %vm3398, %v3722, -inf
        %3828 = vmax.xlane.f32.xlu0 %v3827
        %v3829 = vpop.xlane.xlu0 %3828
        %v3830 = vsel %vm3398, %v3766, -inf
        %3831 = vmax.xlane.f32.xlu0 %v3830
        %v3832 = vpop.xlane.xlu0 %3831
        %v3833 = vsel %vm3398, %v3769, -inf
        %3834 = vmax.xlane.f32.xlu0 %v3833
        %v3835 = vpop.xlane.xlu0 %3834
        %v3836 = vmax.f32 %v3772, %v3790
        %v3837 = vmax.f32 %v3773, %v3793
        %v3838 = vmax.f32 %v3774, %v3796
        %v3839 = vmax.f32 %v3775, %v3799
        %v3840 = vmax.f32 %v3776, %v3802
        %v3841 = vmax.f32 %v3777, %v3805
        %v3842 = vmax.f32 %v3778, %v3808
        %v3843 = vmax.f32 %v3779, %v3811
        %v3844 = vmax.f32 %v3780, %v3814
        %v3845 = vmax.f32 %v3781, %v3817
        %v3846 = vmax.f32 %v3782, %v3820
        %v3847 = vmax.f32 %v3783, %v3823
        %v3848 = vmax.f32 %v3784, %v3826
        %v3849 = vmax.f32 %v3785, %v3829
        %v3850 = vmax.f32 %v3786, %v3832
        %v3851 = vmax.f32 %v3787, %v3835
        %v3852 = vsub.f32 %v3772, %v3836
        %v3853 = vsub.f32 %v3773, %v3837
        %v3854 = vsub.f32 %v3774, %v3838
        %v3855 = vsub.f32 %v3775, %v3839
        %v3856 = vsub.f32 %v3776, %v3840
        %v3857 = vsub.f32 %v3777, %v3841
        %v3858 = vsub.f32 %v3778, %v3842
        %v3859 = vsub.f32 %v3779, %v3843
        %v3860 = vsub.f32 %v3780, %v3844
        %v3861 = vsub.f32 %v3781, %v3845
        %v3862 = vsub.f32 %v3782, %v3846
        %v3863 = vsub.f32 %v3783, %v3847
        %v3864 = vsub.f32 %v3784, %v3848
        %v3865 = vsub.f32 %v3785, %v3849
        %v3866 = vsub.f32 %v3786, %v3850
        %v3867 = vsub.f32 %v3787, %v3851
        %v3868 = vmul.f32 %v3852, 1.442695
        %v3869 = vpow.pop %v3868
        %v3870 = vmul.f32 %v3853, 1.442695
        %v3871 = vpow.pop %v3870
        %v3872 = vmul.f32 %v3854, 1.442695
        %v3873 = vpow.pop %v3872
        %v3874 = vmul.f32 %v3855, 1.442695
        %v3875 = vpow.pop %v3874
        %v3876 = vmul.f32 %v3856, 1.442695
        %v3877 = vpow.pop %v3876
        %v3878 = vmul.f32 %v3857, 1.442695
        %v3879 = vpow.pop %v3878
        %v3880 = vmul.f32 %v3858, 1.442695
        %v3881 = vpow.pop %v3880
        %v3882 = vmul.f32 %v3859, 1.442695
        %v3883 = vpow.pop %v3882
        %v3884 = vmul.f32 %v3860, 1.442695
        %v3885 = vpow.pop %v3884
        %v3886 = vmul.f32 %v3861, 1.442695
        %v3887 = vpow.pop %v3886
        %v3888 = vmul.f32 %v3862, 1.442695
        %v3889 = vpow.pop %v3888
        %v3890 = vmul.f32 %v3863, 1.442695
        %v3891 = vpow.pop %v3890
        %v3892 = vmul.f32 %v3864, 1.442695
        %v3893 = vpow.pop %v3892
        %v3894 = vmul.f32 %v3865, 1.442695
        %v3895 = vpow.pop %v3894
        %v3896 = vmul.f32 %v3866, 1.442695
        %v3897 = vpow.pop %v3896
        %v3898 = vmul.f32 %v3867, 1.442695
        %v3899 = vpow.pop %v3898
        %3901 = vset.pattern.permute.xlu0 0
        %3902 = vperm.xlu0 %3901, %v3836
        %v3903 = vpop.permute.xlu0 %3902
        %3906 = vset.pattern.permute.xlu0 0
        %3907 = vperm.xlu0 %3906, %v3837
        %v3908 = vpop.permute.xlu0 %3907
        %3911 = vset.pattern.permute.xlu0 0
        %3912 = vperm.xlu0 %3911, %v3838
        %v3913 = vpop.permute.xlu0 %3912
        %3916 = vset.pattern.permute.xlu0 0
        %3917 = vperm.xlu0 %3916, %v3839
        %v3918 = vpop.permute.xlu0 %3917
        %3921 = vset.pattern.permute.xlu0 0
        %3922 = vperm.xlu0 %3921, %v3840
        %v3923 = vpop.permute.xlu0 %3922
        %3926 = vset.pattern.permute.xlu0 0
        %3927 = vperm.xlu0 %3926, %v3841
        %v3928 = vpop.permute.xlu0 %3927
        %3931 = vset.pattern.permute.xlu0 0
        %3932 = vperm.xlu0 %3931, %v3842
        %v3933 = vpop.permute.xlu0 %3932
        %3936 = vset.pattern.permute.xlu0 0
        %3937 = vperm.xlu0 %3936, %v3843
        %v3938 = vpop.permute.xlu0 %3937
        %3941 = vset.pattern.permute.xlu0 0
        %3942 = vperm.xlu0 %3941, %v3844
        %v3943 = vpop.permute.xlu0 %3942
        %3946 = vset.pattern.permute.xlu0 0
        %3947 = vperm.xlu0 %3946, %v3845
        %v3948 = vpop.permute.xlu0 %3947
        %3951 = vset.pattern.permute.xlu0 0
        %3952 = vperm.xlu0 %3951, %v3846
        %v3953 = vpop.permute.xlu0 %3952
        %3956 = vset.pattern.permute.xlu0 0
        %3957 = vperm.xlu0 %3956, %v3847
        %v3958 = vpop.permute.xlu0 %3957
        %3961 = vset.pattern.permute.xlu0 0
        %3962 = vperm.xlu0 %3961, %v3848
        %v3963 = vpop.permute.xlu0 %3962
        %3966 = vset.pattern.permute.xlu0 0
        %3967 = vperm.xlu0 %3966, %v3849
        %v3968 = vpop.permute.xlu0 %3967
        %3971 = vset.pattern.permute.xlu0 0
        %3972 = vperm.xlu0 %3971, %v3850
        %v3973 = vpop.permute.xlu0 %3972
        %3976 = vset.pattern.permute.xlu0 0
        %3977 = vperm.xlu0 %3976, %v3851
        %v3978 = vpop.permute.xlu0 %3977
        %v3980 = vsub.f32 %v3437, %v3903
        %v3981 = vsub.f32 %v3440, %v3908
        %v3982 = vsub.f32 %v3484, %v3913
        %v3983 = vsub.f32 %v3487, %v3918
        %v3984 = vsub.f32 %v3531, %v3923
        %v3985 = vsub.f32 %v3534, %v3928
        %v3986 = vsub.f32 %v3578, %v3933
        %v3987 = vsub.f32 %v3581, %v3938
        %v3988 = vsub.f32 %v3625, %v3943
        %v3989 = vsub.f32 %v3628, %v3948
        %v3990 = vsub.f32 %v3672, %v3953
        %v3991 = vsub.f32 %v3675, %v3958
        %v3992 = vsub.f32 %v3719, %v3963
        %v3993 = vsub.f32 %v3722, %v3968
        %v3994 = vsub.f32 %v3766, %v3973
        %v3995 = vsub.f32 %v3769, %v3978
        %v3996 = vmul.f32 %v3980, 1.442695
        %v3997 = vpow.pop %v3996
        %v3998 = vmul.f32 %v3981, 1.442695
        %v3999 = vpow.pop %v3998
        %v4000 = vmul.f32 %v3982, 1.442695
        %v4001 = vpow.pop %v4000
        %v4002 = vmul.f32 %v3983, 1.442695
        %v4003 = vpow.pop %v4002
        %v4004 = vmul.f32 %v3984, 1.442695
        %v4005 = vpow.pop %v4004
        %v4006 = vmul.f32 %v3985, 1.442695
        %v4007 = vpow.pop %v4006
        %v4008 = vmul.f32 %v3986, 1.442695
        %v4009 = vpow.pop %v4008
        %v4010 = vmul.f32 %v3987, 1.442695
        %v4011 = vpow.pop %v4010
        %v4012 = vmul.f32 %v3988, 1.442695
        %v4013 = vpow.pop %v4012
        %v4014 = vmul.f32 %v3989, 1.442695
        %v4015 = vpow.pop %v4014
        %v4016 = vmul.f32 %v3990, 1.442695
        %v4017 = vpow.pop %v4016
        %v4018 = vmul.f32 %v3991, 1.442695
        %v4019 = vpow.pop %v4018
        %v4020 = vmul.f32 %v3992, 1.442695
        %v4021 = vpow.pop %v4020
        %v4022 = vmul.f32 %v3993, 1.442695
        %v4023 = vpow.pop %v4022
        %v4024 = vmul.f32 %v3994, 1.442695
        %v4025 = vpow.pop %v4024
        %v4026 = vmul.f32 %v3995, 1.442695
        %v4027 = vpow.pop %v4026
        %v4028 = vld [vmem:[#allocation4] sm:$0xff]
        %v4029 = vld [vmem:[#allocation4 + $0x8] sm:$0xff]
        %v4030 = vld [vmem:[#allocation4 + $0x10] sm:$0xff]
        %v4031 = vld [vmem:[#allocation4 + $0x18] sm:$0xff]
        %v4032 = vld [vmem:[#allocation4 + $0x20] sm:$0xff]
        %v4033 = vld [vmem:[#allocation4 + $0x28] sm:$0xff]
        %v4034 = vld [vmem:[#allocation4 + $0x30] sm:$0xff]
        %v4035 = vld [vmem:[#allocation4 + $0x38] sm:$0xff]
        %v4036 = vld [vmem:[#allocation4 + $0x40] sm:$0xff]
        %v4037 = vld [vmem:[#allocation4 + $0x48] sm:$0xff]
        %v4038 = vld [vmem:[#allocation4 + $0x50] sm:$0xff]
        %v4039 = vld [vmem:[#allocation4 + $0x58] sm:$0xff]
        %v4040 = vld [vmem:[#allocation4 + $0x60] sm:$0xff]
        %v4041 = vld [vmem:[#allocation4 + $0x68] sm:$0xff]
        %v4042 = vld [vmem:[#allocation4 + $0x70] sm:$0xff]
        %v4043 = vld [vmem:[#allocation4 + $0x78] sm:$0xff]
        %v4044 = vmul.f32 %v3869, %v4028
        %v4045 = vmul.f32 %v3871, %v4029
        %v4046 = vmul.f32 %v3873, %v4030
        %v4047 = vmul.f32 %v3875, %v4031
        %v4048 = vmul.f32 %v3877, %v4032
        %v4049 = vmul.f32 %v3879, %v4033
        %v4050 = vmul.f32 %v3881, %v4034
        %v4051 = vmul.f32 %v3883, %v4035
        %v4052 = vmul.f32 %v3885, %v4036
        %v4053 = vmul.f32 %v3887, %v4037
        %v4054 = vmul.f32 %v3889, %v4038
        %v4055 = vmul.f32 %v3891, %v4039
        %v4056 = vmul.f32 %v3893, %v4040
        %v4057 = vmul.f32 %v3895, %v4041
        %v4058 = vmul.f32 %v3897, %v4042
        %v4059 = vmul.f32 %v3899, %v4043
        %v4060 = vsel %vm3398, %v3997, 0.0
        %4061 = vadd.xlane.f32.xlu0 %v4060
        %v4062 = vpop.xlane.xlu0 %4061
        %v4063 = vsel %vm3398, %v3999, 0.0
        %4064 = vadd.xlane.f32.xlu0 %v4063
        %v4065 = vpop.xlane.xlu0 %4064
        %v4066 = vsel %vm3398, %v4001, 0.0
        %4067 = vadd.xlane.f32.xlu0 %v4066
        %v4068 = vpop.xlane.xlu0 %4067
        %v4069 = vsel %vm3398, %v4003, 0.0
        %4070 = vadd.xlane.f32.xlu0 %v4069
        %v4071 = vpop.xlane.xlu0 %4070
        %v4072 = vsel %vm3398, %v4005, 0.0
        %4073 = vadd.xlane.f32.xlu0 %v4072
        %v4074 = vpop.xlane.xlu0 %4073
        %v4075 = vsel %vm3398, %v4007, 0.0
        %4076 = vadd.xlane.f32.xlu0 %v4075
        %v4077 = vpop.xlane.xlu0 %4076
        %v4078 = vsel %vm3398, %v4009, 0.0
        %4079 = vadd.xlane.f32.xlu0 %v4078
        %v4080 = vpop.xlane.xlu0 %4079
        %v4081 = vsel %vm3398, %v4011, 0.0
        %4082 = vadd.xlane.f32.xlu0 %v4081
        %v4083 = vpop.xlane.xlu0 %4082
        %v4084 = vsel %vm3398, %v4013, 0.0
        %4085 = vadd.xlane.f32.xlu0 %v4084
        %v4086 = vpop.xlane.xlu0 %4085
        %v4087 = vsel %vm3398, %v4015, 0.0
        %4088 = vadd.xlane.f32.xlu0 %v4087
        %v4089 = vpop.xlane.xlu0 %4088
        %v4090 = vsel %vm3398, %v4017, 0.0
        %4091 = vadd.xlane.f32.xlu0 %v4090
        %v4092 = vpop.xlane.xlu0 %4091
        %v4093 = vsel %vm3398, %v4019, 0.0
        %4094 = vadd.xlane.f32.xlu0 %v4093
        %v4095 = vpop.xlane.xlu0 %4094
        %v4096 = vsel %vm3398, %v4021, 0.0
        %4097 = vadd.xlane.f32.xlu0 %v4096
        %v4098 = vpop.xlane.xlu0 %4097
        %v4099 = vsel %vm3398, %v4023, 0.0
        %4100 = vadd.xlane.f32.xlu0 %v4099
        %v4101 = vpop.xlane.xlu0 %4100
        %v4102 = vsel %vm3398, %v4025, 0.0
        %4103 = vadd.xlane.f32.xlu0 %v4102
        %v4104 = vpop.xlane.xlu0 %4103
        %v4105 = vsel %vm3398, %v4027, 0.0
        %4106 = vadd.xlane.f32.xlu0 %v4105
        %v4107 = vpop.xlane.xlu0 %4106
        %v4108 = vadd.f32 %v4044, %v4062
        %v4109 = vadd.f32 %v4045, %v4065
        %v4110 = vadd.f32 %v4046, %v4068
        %v4111 = vadd.f32 %v4047, %v4071
        %v4112 = vadd.f32 %v4048, %v4074
        %v4113 = vadd.f32 %v4049, %v4077
        %v4114 = vadd.f32 %v4050, %v4080
        %v4115 = vadd.f32 %v4051, %v4083
        %v4116 = vadd.f32 %v4052, %v4086
        %v4117 = vadd.f32 %v4053, %v4089
        %v4118 = vadd.f32 %v4054, %v4092
        %v4119 = vadd.f32 %v4055, %v4095
        %v4120 = vadd.f32 %v4056, %v4098
        %v4121 = vadd.f32 %v4057, %v4101
        %v4122 = vadd.f32 %v4058, %v4104
        %v4123 = vadd.f32 %v4059, %v4107
        %vm4124 = vcmask 7168
        %4125 = vst.msk [vmem:[#allocation4] sm:$0xff] %vm4124, %v4108
        %4126 = vst.msk [vmem:[#allocation4 + $0x8] sm:$0xff] %vm4124, %v4109
        %4127 = vst.msk [vmem:[#allocation4 + $0x10] sm:$0xff] %vm4124, %v4110
        %4128 = vst.msk [vmem:[#allocation4 + $0x18] sm:$0xff] %vm4124, %v4111
        %4129 = vst.msk [vmem:[#allocation4 + $0x20] sm:$0xff] %vm4124, %v4112
        %4130 = vst.msk [vmem:[#allocation4 + $0x28] sm:$0xff] %vm4124, %v4113
        %4131 = vst.msk [vmem:[#allocation4 + $0x30] sm:$0xff] %vm4124, %v4114
        %4132 = vst.msk [vmem:[#allocation4 + $0x38] sm:$0xff] %vm4124, %v4115
        %4133 = vst.msk [vmem:[#allocation4 + $0x40] sm:$0xff] %vm4124, %v4116
        %4134 = vst.msk [vmem:[#allocation4 + $0x48] sm:$0xff] %vm4124, %v4117
        %4135 = vst.msk [vmem:[#allocation4 + $0x50] sm:$0xff] %vm4124, %v4118
        %4136 = vst.msk [vmem:[#allocation4 + $0x58] sm:$0xff] %vm4124, %v4119
        %4137 = vst.msk [vmem:[#allocation4 + $0x60] sm:$0xff] %vm4124, %v4120
        %4138 = vst.msk [vmem:[#allocation4 + $0x68] sm:$0xff] %vm4124, %v4121
        %4139 = vst.msk [vmem:[#allocation4 + $0x70] sm:$0xff] %vm4124, %v4122
        %4140 = vst.msk [vmem:[#allocation4 + $0x78] sm:$0xff] %vm4124, %v4123
        %v4141 = vld [vmem:[#allocation5] sm:$0xff]
        %v4142 = vld [vmem:[#allocation5 + $0x8] sm:$0xff]
        %v4143 = vld [vmem:[#allocation5 + $0x10] sm:$0xff]
        %v4144 = vld [vmem:[#allocation5 + $0x18] sm:$0xff]
        %v4145 = vld [vmem:[#allocation5 + $0x20] sm:$0xff]
        %v4146 = vld [vmem:[#allocation5 + $0x28] sm:$0xff]
        %v4147 = vld [vmem:[#allocation5 + $0x30] sm:$0xff]
        %v4148 = vld [vmem:[#allocation5 + $0x38] sm:$0xff]
        %v4149 = vld [vmem:[#allocation5 + $0x40] sm:$0xff]
        %v4150 = vld [vmem:[#allocation5 + $0x48] sm:$0xff]
        %v4151 = vld [vmem:[#allocation5 + $0x50] sm:$0xff]
        %v4152 = vld [vmem:[#allocation5 + $0x58] sm:$0xff]
        %v4153 = vld [vmem:[#allocation5 + $0x60] sm:$0xff]
        %v4154 = vld [vmem:[#allocation5 + $0x68] sm:$0xff]
        %v4155 = vld [vmem:[#allocation5 + $0x70] sm:$0xff]
        %v4156 = vld [vmem:[#allocation5 + $0x78] sm:$0xff]
        %4158 = vset.pattern.permute.xlu0 0
        %4159 = vperm.xlu0 %4158, %v3869
        %v4160 = vpop.permute.xlu0 %4159
        %4163 = vset.pattern.permute.xlu0 0
        %4164 = vperm.xlu0 %4163, %v3871
        %v4165 = vpop.permute.xlu0 %4164
        %4168 = vset.pattern.permute.xlu0 0
        %4169 = vperm.xlu0 %4168, %v3873
        %v4170 = vpop.permute.xlu0 %4169
        %4173 = vset.pattern.permute.xlu0 0
        %4174 = vperm.xlu0 %4173, %v3875
        %v4175 = vpop.permute.xlu0 %4174
        %4178 = vset.pattern.permute.xlu0 0
        %4179 = vperm.xlu0 %4178, %v3877
        %v4180 = vpop.permute.xlu0 %4179
        %4183 = vset.pattern.permute.xlu0 0
        %4184 = vperm.xlu0 %4183, %v3879
        %v4185 = vpop.permute.xlu0 %4184
        %4188 = vset.pattern.permute.xlu0 0
        %4189 = vperm.xlu0 %4188, %v3881
        %v4190 = vpop.permute.xlu0 %4189
        %4193 = vset.pattern.permute.xlu0 0
        %4194 = vperm.xlu0 %4193, %v3883
        %v4195 = vpop.permute.xlu0 %4194
        %4198 = vset.pattern.permute.xlu0 0
        %4199 = vperm.xlu0 %4198, %v3885
        %v4200 = vpop.permute.xlu0 %4199
        %4203 = vset.pattern.permute.xlu0 0
        %4204 = vperm.xlu0 %4203, %v3887
        %v4205 = vpop.permute.xlu0 %4204
        %4208 = vset.pattern.permute.xlu0 0
        %4209 = vperm.xlu0 %4208, %v3889
        %v4210 = vpop.permute.xlu0 %4209
        %4213 = vset.pattern.permute.xlu0 0
        %4214 = vperm.xlu0 %4213, %v3891
        %v4215 = vpop.permute.xlu0 %4214
        %4218 = vset.pattern.permute.xlu0 0
        %4219 = vperm.xlu0 %4218, %v3893
        %v4220 = vpop.permute.xlu0 %4219
        %4223 = vset.pattern.permute.xlu0 0
        %4224 = vperm.xlu0 %4223, %v3895
        %v4225 = vpop.permute.xlu0 %4224
        %4228 = vset.pattern.permute.xlu0 0
        %4229 = vperm.xlu0 %4228, %v3897
        %v4230 = vpop.permute.xlu0 %4229
        %4233 = vset.pattern.permute.xlu0 0
        %4234 = vperm.xlu0 %4233, %v3899
        %v4235 = vpop.permute.xlu0 %4234
        %v4237 = vmul.f32 %v4160, %v4141
        %v4238 = vmul.f32 %v4165, %v4142
        %v4239 = vmul.f32 %v4170, %v4143
        %v4240 = vmul.f32 %v4175, %v4144
        %v4241 = vmul.f32 %v4180, %v4145
        %v4242 = vmul.f32 %v4185, %v4146
        %v4243 = vmul.f32 %v4190, %v4147
        %v4244 = vmul.f32 %v4195, %v4148
        %v4245 = vmul.f32 %v4200, %v4149
        %v4246 = vmul.f32 %v4205, %v4150
        %v4247 = vmul.f32 %v4210, %v4151
        %v4248 = vmul.f32 %v4215, %v4152
        %v4249 = vmul.f32 %v4220, %v4153
        %v4250 = vmul.f32 %v4225, %v4154
        %v4251 = vmul.f32 %v4230, %v4155
        %v4252 = vmul.f32 %v4235, %v4156
        %v4253 = vpack.c.bf16 %v3999, %v3997
        %v4254 = vpack.c.bf16 %v4003, %v4001
        %v4255 = vpack.c.bf16 %v4007, %v4005
        %v4256 = vpack.c.bf16 %v4011, %v4009
        %v4257 = vpack.c.bf16 %v4015, %v4013
        %v4258 = vpack.c.bf16 %v4019, %v4017
        %v4259 = vpack.c.bf16 %v4023, %v4021
        %v4260 = vpack.c.bf16 %v4027, %v4025
        %v4261 = vcombine.low %v2163, %v2167
        %v4263 = vunpack.c.l.s4 1983009808
        %v4264 = vunpack.c.0.s8 %v4263
        %v4265 = vlaneseq
        %v4266 = vshrl.u32 %v4265, 7
        %v4267 = vsub.s32 %v4264, %v4266
        %v4268 = vrot.slane %v4261, %v4267
        %v4269 = vcombine.low %v2165, %v2169
        %v4271 = vunpack.c.l.s4 1983009808
        %v4272 = vunpack.c.0.s8 %v4271
        %v4273 = vlaneseq
        %v4274 = vshrl.u32 %v4273, 7
        %v4275 = vsub.s32 %v4272, %v4274
        %v4276 = vrot.slane %v4269, %v4275
        %v4277 = vcombine.low %v2171, %v2175
        %v4279 = vunpack.c.l.s4 1983009808
        %v4280 = vunpack.c.0.s8 %v4279
        %v4281 = vlaneseq
        %v4282 = vshrl.u32 %v4281, 7
        %v4283 = vsub.s32 %v4280, %v4282
        %v4284 = vrot.slane %v4277, %v4283
        %v4285 = vcombine.low %v2173, %v2177
        %v4287 = vunpack.c.l.s4 1983009808
        %v4288 = vunpack.c.0.s8 %v4287
        %v4289 = vlaneseq
        %v4290 = vshrl.u32 %v4289, 7
        %v4291 = vsub.s32 %v4288, %v4290
        %v4292 = vrot.slane %v4285, %v4291
        %v4293 = vcombine.low %v4268, %v4276
        %v4294 = vcombine.high %v4268, %v4276
        %v4296 = vunpack.c.l.s4 1934713408
        %v4297 = vunpack.c.0.s8 %v4296
        %v4298 = vlaneseq
        %v4299 = vshrl.u32 %v4298, 7
        %v4300 = vsub.s32 %v4297, %v4299
        %v4301 = vrot.slane %v4293, %v4300
        %v4303 = vunpack.c.l.s4 1934713408
        %v4304 = vunpack.c.0.s8 %v4303
        %v4305 = vlaneseq
        %v4306 = vshrl.u32 %v4305, 7
        %v4307 = vsub.s32 %v4304, %v4306
        %v4308 = vrot.slane %v4294, %v4307
        %v4309 = vcombine.low %v4284, %v4292
        %v4310 = vcombine.high %v4284, %v4292
        %v4312 = vunpack.c.l.s4 1934713408
        %v4313 = vunpack.c.0.s8 %v4312
        %v4314 = vlaneseq
        %v4315 = vshrl.u32 %v4314, 7
        %v4316 = vsub.s32 %v4313, %v4315
        %v4317 = vrot.slane %v4309, %v4316
        %v4319 = vunpack.c.l.s4 1934713408
        %v4320 = vunpack.c.0.s8 %v4319
        %v4321 = vlaneseq
        %v4322 = vshrl.u32 %v4321, 7
        %v4323 = vsub.s32 %v4320, %v4322
        %v4324 = vrot.slane %v4310, %v4323
        %v4325 = vcombine.low %v4301, %v4317
        %v4326 = vcombine.high %v4301, %v4317
        %v4327 = vcombine.low %v4308, %v4324
        %v4328 = vcombine.high %v4308, %v4324
        %v4329 = vcombine.low %v2164, %v2168
        %v4331 = vunpack.c.l.s4 1983009808
        %v4332 = vunpack.c.0.s8 %v4331
        %v4333 = vlaneseq
        %v4334 = vshrl.u32 %v4333, 7
        %v4335 = vsub.s32 %v4332, %v4334
        %v4336 = vrot.slane %v4329, %v4335
        %v4337 = vcombine.low %v2166, %v2170
        %v4339 = vunpack.c.l.s4 1983009808
        %v4340 = vunpack.c.0.s8 %v4339
        %v4341 = vlaneseq
        %v4342 = vshrl.u32 %v4341, 7
        %v4343 = vsub.s32 %v4340, %v4342
        %v4344 = vrot.slane %v4337, %v4343
        %v4345 = vcombine.low %v2172, %v2176
        %v4347 = vunpack.c.l.s4 1983009808
        %v4348 = vunpack.c.0.s8 %v4347
        %v4349 = vlaneseq
        %v4350 = vshrl.u32 %v4349, 7
        %v4351 = vsub.s32 %v4348, %v4350
        %v4352 = vrot.slane %v4345, %v4351
        %v4353 = vcombine.low %v2174, %v2178
        %v4355 = vunpack.c.l.s4 1983009808
        %v4356 = vunpack.c.0.s8 %v4355
        %v4357 = vlaneseq
        %v4358 = vshrl.u32 %v4357, 7
        %v4359 = vsub.s32 %v4356, %v4358
        %v4360 = vrot.slane %v4353, %v4359
        %v4361 = vcombine.low %v4336, %v4344
        %v4362 = vcombine.high %v4336, %v4344
        %v4364 = vunpack.c.l.s4 1934713408
        %v4365 = vunpack.c.0.s8 %v4364
        %v4366 = vlaneseq
        %v4367 = vshrl.u32 %v4366, 7
        %v4368 = vsub.s32 %v4365, %v4367
        %v4369 = vrot.slane %v4361, %v4368
        %v4371 = vunpack.c.l.s4 1934713408
        %v4372 = vunpack.c.0.s8 %v4371
        %v4373 = vlaneseq
        %v4374 = vshrl.u32 %v4373, 7
        %v4375 = vsub.s32 %v4372, %v4374
        %v4376 = vrot.slane %v4362, %v4375
        %v4377 = vcombine.low %v4352, %v4360
        %v4378 = vcombine.high %v4352, %v4360
        %v4380 = vunpack.c.l.s4 1934713408
        %v4381 = vunpack.c.0.s8 %v4380
        %v4382 = vlaneseq
        %v4383 = vshrl.u32 %v4382, 7
        %v4384 = vsub.s32 %v4381, %v4383
        %v4385 = vrot.slane %v4377, %v4384
        %v4387 = vunpack.c.l.s4 1934713408
        %v4388 = vunpack.c.0.s8 %v4387
        %v4389 = vlaneseq
        %v4390 = vshrl.u32 %v4389, 7
        %v4391 = vsub.s32 %v4388, %v4390
        %v4392 = vrot.slane %v4378, %v4391
        %v4393 = vcombine.low %v4369, %v4385
        %v4394 = vcombine.high %v4369, %v4385
        %v4395 = vcombine.low %v4376, %v4392
        %v4396 = vcombine.high %v4376, %v4392
        %v4399 = vpack.i.b16 %v4393, %v4325
        %v4401 = vshrl.u32 %v4325, 16
        %v4402 = vshrl.u32 %v4393, 16
        %v4403 = vpack.i.b16 %v4402, %v4401
        %v4407 = vpack.i.b16 %v4394, %v4326
        %v4409 = vshrl.u32 %v4326, 16
        %v4410 = vshrl.u32 %v4394, 16
        %v4411 = vpack.i.b16 %v4410, %v4409
        %v4415 = vpack.i.b16 %v4395, %v4327
        %v4417 = vshrl.u32 %v4327, 16
        %v4418 = vshrl.u32 %v4395, 16
        %v4419 = vpack.i.b16 %v4418, %v4417
        %v4423 = vpack.i.b16 %v4396, %v4328
        %v4425 = vshrl.u32 %v4328, 16
        %v4426 = vshrl.u32 %v4396, 16
        %v4427 = vpack.i.b16 %v4426, %v4425
        %v4430 = vsel %vm3398, %v4253, 0
        %4432 = vmatprep.subr.bf16.mxu0 0
        %4433 = vmatpush1.bf16.msra.mxu0 %v4399
        %4434 = vmatprep.subr.bf16.mxu0 0
        %4435 = vmatpush1.bf16.msra.mxu0 0
        %4436 = vmatprep.subr.bf16.mxu0 0
        %4437 = vmatpush1.bf16.msra.mxu0 0
        %4438 = vmatprep.subr.bf16.mxu0 0
        %4439 = vmatpush1.bf16.msra.mxu0 0
        %4440 = vmatprep.subr.bf16.mxu0 0
        %4441 = vmatpush1.bf16.msra.mxu0 0
        %4442 = vmatprep.subr.bf16.mxu0 0
        %4443 = vmatpush1.bf16.msra.mxu0 0
        %4444 = vmatprep.subr.bf16.mxu0 0
        %4445 = vmatpush1.bf16.msra.mxu0 0
        %4446 = vmatprep.subr.bf16.mxu0 0
        %4447 = vmatpush1.bf16.msra.mxu0 0
        %4448 = vmatprep.subr.bf16.mxu0 0
        %4449 = vmatpush1.bf16.msra.mxu0 0
        %4450 = vmatprep.subr.bf16.mxu0 0
        %4451 = vmatpush1.bf16.msra.mxu0 0
        %4452 = vmatprep.subr.bf16.mxu0 0
        %4453 = vmatpush1.bf16.msra.mxu0 0
        %4454 = vmatprep.subr.bf16.mxu0 0
        %4455 = vmatpush1.bf16.msra.mxu0 0
        %4456 = vmatprep.subr.bf16.mxu0 0
        %4457 = vmatpush1.bf16.msra.mxu0 0
        %4458 = vmatprep.subr.bf16.mxu0 0
        %4459 = vmatpush1.bf16.msra.mxu0 0
        %4460 = vmatprep.subr.bf16.mxu0 0
        %4461 = vmatpush1.bf16.msra.mxu0 0
        %4462 = vmatprep.subr.bf16.mxu0 0
        %4463 = vmatpush1.bf16.msra.mxu0 0
        %4464 = vmatprep.mubr.bf16.mxu0 0
        %4465 = vmatmul.mubr.bf16.gmra.mrb[0].mxu0 %v4430
        %v4466 = vpop.f32.mrb[0].mxu0
        %v4467 = vadd.f32 0.0, %v4466
        %v4468 = vpop.f32.mrb[0].mxu0
        %v4469 = vpop.f32.mrb[0].mxu0
        %v4470 = vadd.f32 0.0, %v4469
        %v4471 = vpop.f32.mrb[0].mxu0
        %4472 = vdwg.mxu0
        %v4474 = vsel %vm3398, %v4254, 0
        %4476 = vmatprep.subr.bf16.mxu0 0
        %4477 = vmatpush1.bf16.msra.mxu0 %v4403
        %4478 = vmatprep.subr.bf16.mxu0 0
        %4479 = vmatpush1.bf16.msra.mxu0 0
        %4480 = vmatprep.subr.bf16.mxu0 0
        %4481 = vmatpush1.bf16.msra.mxu0 0
        %4482 = vmatprep.subr.bf16.mxu0 0
        %4483 = vmatpush1.bf16.msra.mxu0 0
        %4484 = vmatprep.subr.bf16.mxu0 0
        %4485 = vmatpush1.bf16.msra.mxu0 0
        %4486 = vmatprep.subr.bf16.mxu0 0
        %4487 = vmatpush1.bf16.msra.mxu0 0
        %4488 = vmatprep.subr.bf16.mxu0 0
        %4489 = vmatpush1.bf16.msra.mxu0 0
        %4490 = vmatprep.subr.bf16.mxu0 0
        %4491 = vmatpush1.bf16.msra.mxu0 0
        %4492 = vmatprep.subr.bf16.mxu0 0
        %4493 = vmatpush1.bf16.msra.mxu0 0
        %4494 = vmatprep.subr.bf16.mxu0 0
        %4495 = vmatpush1.bf16.msra.mxu0 0
        %4496 = vmatprep.subr.bf16.mxu0 0
        %4497 = vmatpush1.bf16.msra.mxu0 0
        %4498 = vmatprep.subr.bf16.mxu0 0
        %4499 = vmatpush1.bf16.msra.mxu0 0
        %4500 = vmatprep.subr.bf16.mxu0 0
        %4501 = vmatpush1.bf16.msra.mxu0 0
        %4502 = vmatprep.subr.bf16.mxu0 0
        %4503 = vmatpush1.bf16.msra.mxu0 0
        %4504 = vmatprep.subr.bf16.mxu0 0
        %4505 = vmatpush1.bf16.msra.mxu0 0
        %4506 = vmatprep.subr.bf16.mxu0 0
        %4507 = vmatpush1.bf16.msra.mxu0 0
        %4508 = vmatprep.mubr.bf16.mxu0 0
        %4509 = vmatmul.mubr.bf16.gmra.mrb[0].mxu0 %v4474
        %v4510 = vpop.f32.mrb[0].mxu0
        %v4511 = vadd.f32 0.0, %v4510
        %v4512 = vpop.f32.mrb[0].mxu0
        %v4513 = vpop.f32.mrb[0].mxu0
        %v4514 = vadd.f32 0.0, %v4513
        %v4515 = vpop.f32.mrb[0].mxu0
        %4516 = vdwg.mxu0
        %v4518 = vsel %vm3398, %v4255, 0
        %4520 = vmatprep.subr.bf16.mxu0 0
        %4521 = vmatpush1.bf16.msra.mxu0 %v4407
        %4522 = vmatprep.subr.bf16.mxu0 0
        %4523 = vmatpush1.bf16.msra.mxu0 0
        %4524 = vmatprep.subr.bf16.mxu0 0
        %4525 = vmatpush1.bf16.msra.mxu0 0
        %4526 = vmatprep.subr.bf16.mxu0 0
        %4527 = vmatpush1.bf16.msra.mxu0 0
        %4528 = vmatprep.subr.bf16.mxu0 0
        %4529 = vmatpush1.bf16.msra.mxu0 0
        %4530 = vmatprep.subr.bf16.mxu0 0
        %4531 = vmatpush1.bf16.msra.mxu0 0
        %4532 = vmatprep.subr.bf16.mxu0 0
        %4533 = vmatpush1.bf16.msra.mxu0 0
        %4534 = vmatprep.subr.bf16.mxu0 0
        %4535 = vmatpush1.bf16.msra.mxu0 0
        %4536 = vmatprep.subr.bf16.mxu0 0
        %4537 = vmatpush1.bf16.msra.mxu0 0
        %4538 = vmatprep.subr.bf16.mxu0 0
        %4539 = vmatpush1.bf16.msra.mxu0 0
        %4540 = vmatprep.subr.bf16.mxu0 0
        %4541 = vmatpush1.bf16.msra.mxu0 0
        %4542 = vmatprep.subr.bf16.mxu0 0
        %4543 = vmatpush1.bf16.msra.mxu0 0
        %4544 = vmatprep.subr.bf16.mxu0 0
        %4545 = vmatpush1.bf16.msra.mxu0 0
        %4546 = vmatprep.subr.bf16.mxu0 0
        %4547 = vmatpush1.bf16.msra.mxu0 0
        %4548 = vmatprep.subr.bf16.mxu0 0
        %4549 = vmatpush1.bf16.msra.mxu0 0
        %4550 = vmatprep.subr.bf16.mxu0 0
        %4551 = vmatpush1.bf16.msra.mxu0 0
        %4552 = vmatprep.mubr.bf16.mxu0 0
        %4553 = vmatmul.mubr.bf16.gmra.mrb[0].mxu0 %v4518
        %v4554 = vpop.f32.mrb[0].mxu0
        %v4555 = vadd.f32 0.0, %v4554
        %v4556 = vpop.f32.mrb[0].mxu0
        %v4557 = vpop.f32.mrb[0].mxu0
        %v4558 = vadd.f32 0.0, %v4557
        %v4559 = vpop.f32.mrb[0].mxu0
        %4560 = vdwg.mxu0
        %v4562 = vsel %vm3398, %v4256, 0
        %4564 = vmatprep.subr.bf16.mxu0 0
        %4565 = vmatpush1.bf16.msra.mxu0 %v4411
        %4566 = vmatprep.subr.bf16.mxu0 0
        %4567 = vmatpush1.bf16.msra.mxu0 0
        %4568 = vmatprep.subr.bf16.mxu0 0
        %4569 = vmatpush1.bf16.msra.mxu0 0
        %4570 = vmatprep.subr.bf16.mxu0 0
        %4571 = vmatpush1.bf16.msra.mxu0 0
        %4572 = vmatprep.subr.bf16.mxu0 0
        %4573 = vmatpush1.bf16.msra.mxu0 0
        %4574 = vmatprep.subr.bf16.mxu0 0
        %4575 = vmatpush1.bf16.msra.mxu0 0
        %4576 = vmatprep.subr.bf16.mxu0 0
        %4577 = vmatpush1.bf16.msra.mxu0 0
        %4578 = vmatprep.subr.bf16.mxu0 0
        %4579 = vmatpush1.bf16.msra.mxu0 0
        %4580 = vmatprep.subr.bf16.mxu0 0
        %4581 = vmatpush1.bf16.msra.mxu0 0
        %4582 = vmatprep.subr.bf16.mxu0 0
        %4583 = vmatpush1.bf16.msra.mxu0 0
        %4584 = vmatprep.subr.bf16.mxu0 0
        %4585 = vmatpush1.bf16.msra.mxu0 0
        %4586 = vmatprep.subr.bf16.mxu0 0
        %4587 = vmatpush1.bf16.msra.mxu0 0
        %4588 = vmatprep.subr.bf16.mxu0 0
        %4589 = vmatpush1.bf16.msra.mxu0 0
        %4590 = vmatprep.subr.bf16.mxu0 0
        %4591 = vmatpush1.bf16.msra.mxu0 0
        %4592 = vmatprep.subr.bf16.mxu0 0
        %4593 = vmatpush1.bf16.msra.mxu0 0
        %4594 = vmatprep.subr.bf16.mxu0 0
        %4595 = vmatpush1.bf16.msra.mxu0 0
        %4596 = vmatprep.mubr.bf16.mxu0 0
        %4597 = vmatmul.mubr.bf16.gmra.mrb[0].mxu0 %v4562
        %v4598 = vpop.f32.mrb[0].mxu0
        %v4599 = vadd.f32 0.0, %v4598
        %v4600 = vpop.f32.mrb[0].mxu0
        %v4601 = vpop.f32.mrb[0].mxu0
        %v4602 = vadd.f32 0.0, %v4601
        %v4603 = vpop.f32.mrb[0].mxu0
        %4604 = vdwg.mxu0
        %v4606 = vsel %vm3398, %v4257, 0
        %4608 = vmatprep.subr.bf16.mxu0 0
        %4609 = vmatpush1.bf16.msra.mxu0 %v4415
        %4610 = vmatprep.subr.bf16.mxu0 0
        %4611 = vmatpush1.bf16.msra.mxu0 0
        %4612 = vmatprep.subr.bf16.mxu0 0
        %4613 = vmatpush1.bf16.msra.mxu0 0
        %4614 = vmatprep.subr.bf16.mxu0 0
        %4615 = vmatpush1.bf16.msra.mxu0 0
        %4616 = vmatprep.subr.bf16.mxu0 0
        %4617 = vmatpush1.bf16.msra.mxu0 0
        %4618 = vmatprep.subr.bf16.mxu0 0
        %4619 = vmatpush1.bf16.msra.mxu0 0
        %4620 = vmatprep.subr.bf16.mxu0 0
        %4621 = vmatpush1.bf16.msra.mxu0 0
        %4622 = vmatprep.subr.bf16.mxu0 0
        %4623 = vmatpush1.bf16.msra.mxu0 0
        %4624 = vmatprep.subr.bf16.mxu0 0
        %4625 = vmatpush1.bf16.msra.mxu0 0
        %4626 = vmatprep.subr.bf16.mxu0 0
        %4627 = vmatpush1.bf16.msra.mxu0 0
        %4628 = vmatprep.subr.bf16.mxu0 0
        %4629 = vmatpush1.bf16.msra.mxu0 0
        %4630 = vmatprep.subr.bf16.mxu0 0
        %4631 = vmatpush1.bf16.msra.mxu0 0
        %4632 = vmatprep.subr.bf16.mxu0 0
        %4633 = vmatpush1.bf16.msra.mxu0 0
        %4634 = vmatprep.subr.bf16.mxu0 0
        %4635 = vmatpush1.bf16.msra.mxu0 0
        %4636 = vmatprep.subr.bf16.mxu0 0
        %4637 = vmatpush1.bf16.msra.mxu0 0
        %4638 = vmatprep.subr.bf16.mxu0 0
        %4639 = vmatpush1.bf16.msra.mxu0 0
        %4640 = vmatprep.mubr.bf16.mxu0 0
        %4641 = vmatmul.mubr.bf16.gmra.mrb[0].mxu0 %v4606
        %v4642 = vpop.f32.mrb[0].mxu0
        %v4643 = vadd.f32 0.0, %v4642
        %v4644 = vpop.f32.mrb[0].mxu0
        %v4645 = vpop.f32.mrb[0].mxu0
        %v4646 = vadd.f32 0.0, %v4645
        %v4647 = vpop.f32.mrb[0].mxu0
        %4648 = vdwg.mxu0
        %v4650 = vsel %vm3398, %v4258, 0
        %4652 = vmatprep.subr.bf16.mxu0 0
        %4653 = vmatpush1.bf16.msra.mxu0 %v4419
        %4654 = vmatprep.subr.bf16.mxu0 0
        %4655 = vmatpush1.bf16.msra.mxu0 0
        %4656 = vmatprep.subr.bf16.mxu0 0
        %4657 = vmatpush1.bf16.msra.mxu0 0
        %4658 = vmatprep.subr.bf16.mxu0 0
        %4659 = vmatpush1.bf16.msra.mxu0 0
        %4660 = vmatprep.subr.bf16.mxu0 0
        %4661 = vmatpush1.bf16.msra.mxu0 0
        %4662 = vmatprep.subr.bf16.mxu0 0
        %4663 = vmatpush1.bf16.msra.mxu0 0
        %4664 = vmatprep.subr.bf16.mxu0 0
        %4665 = vmatpush1.bf16.msra.mxu0 0
        %4666 = vmatprep.subr.bf16.mxu0 0
        %4667 = vmatpush1.bf16.msra.mxu0 0
        %4668 = vmatprep.subr.bf16.mxu0 0
        %4669 = vmatpush1.bf16.msra.mxu0 0
        %4670 = vmatprep.subr.bf16.mxu0 0
        %4671 = vmatpush1.bf16.msra.mxu0 0
        %4672 = vmatprep.subr.bf16.mxu0 0
        %4673 = vmatpush1.bf16.msra.mxu0 0
        %4674 = vmatprep.subr.bf16.mxu0 0
        %4675 = vmatpush1.bf16.msra.mxu0 0
        %4676 = vmatprep.subr.bf16.mxu0 0
        %4677 = vmatpush1.bf16.msra.mxu0 0
        %4678 = vmatprep.subr.bf16.mxu0 0
        %4679 = vmatpush1.bf16.msra.mxu0 0
        %4680 = vmatprep.subr.bf16.mxu0 0
        %4681 = vmatpush1.bf16.msra.mxu0 0
        %4682 = vmatprep.subr.bf16.mxu0 0
        %4683 = vmatpush1.bf16.msra.mxu0 0
        %4684 = vmatprep.mubr.bf16.mxu0 0
        %4685 = vmatmul.mubr.bf16.gmra.mrb[0].mxu0 %v4650
        %v4686 = vpop.f32.mrb[0].mxu0
        %v4687 = vadd.f32 0.0, %v4686
        %v4688 = vpop.f32.mrb[0].mxu0
        %v4689 = vpop.f32.mrb[0].mxu0
        %v4690 = vadd.f32 0.0, %v4689
        %v4691 = vpop.f32.mrb[0].mxu0
        %4692 = vdwg.mxu0
        %v4694 = vsel %vm3398, %v4259, 0
        %4696 = vmatprep.subr.bf16.mxu0 0
        %4697 = vmatpush1.bf16.msra.mxu0 %v4423
        %4698 = vmatprep.subr.bf16.mxu0 0
        %4699 = vmatpush1.bf16.msra.mxu0 0
        %4700 = vmatprep.subr.bf16.mxu0 0
        %4701 = vmatpush1.bf16.msra.mxu0 0
        %4702 = vmatprep.subr.bf16.mxu0 0
        %4703 = vmatpush1.bf16.msra.mxu0 0
        %4704 = vmatprep.subr.bf16.mxu0 0
        %4705 = vmatpush1.bf16.msra.mxu0 0
        %4706 = vmatprep.subr.bf16.mxu0 0
        %4707 = vmatpush1.bf16.msra.mxu0 0
        %4708 = vmatprep.subr.bf16.mxu0 0
        %4709 = vmatpush1.bf16.msra.mxu0 0
        %4710 = vmatprep.subr.bf16.mxu0 0
        %4711 = vmatpush1.bf16.msra.mxu0 0
        %4712 = vmatprep.subr.bf16.mxu0 0
        %4713 = vmatpush1.bf16.msra.mxu0 0
        %4714 = vmatprep.subr.bf16.mxu0 0
        %4715 = vmatpush1.bf16.msra.mxu0 0
        %4716 = vmatprep.subr.bf16.mxu0 0
        %4717 = vmatpush1.bf16.msra.mxu0 0
        %4718 = vmatprep.subr.bf16.mxu0 0
        %4719 = vmatpush1.bf16.msra.mxu0 0
        %4720 = vmatprep.subr.bf16.mxu0 0
        %4721 = vmatpush1.bf16.msra.mxu0 0
        %4722 = vmatprep.subr.bf16.mxu0 0
        %4723 = vmatpush1.bf16.msra.mxu0 0
        %4724 = vmatprep.subr.bf16.mxu0 0
        %4725 = vmatpush1.bf16.msra.mxu0 0
        %4726 = vmatprep.subr.bf16.mxu0 0
        %4727 = vmatpush1.bf16.msra.mxu0 0
        %4728 = vmatprep.mubr.bf16.mxu0 0
        %4729 = vmatmul.mubr.bf16.gmra.mrb[0].mxu0 %v4694
        %v4730 = vpop.f32.mrb[0].mxu0
        %v4731 = vadd.f32 0.0, %v4730
        %v4732 = vpop.f32.mrb[0].mxu0
        %v4733 = vpop.f32.mrb[0].mxu0
        %v4734 = vadd.f32 0.0, %v4733
        %v4735 = vpop.f32.mrb[0].mxu0
        %4736 = vdwg.mxu0
        %v4738 = vsel %vm3398, %v4260, 0
        %4740 = vmatprep.subr.bf16.mxu0 0
        %4741 = vmatpush1.bf16.msra.mxu0 %v4427
        %4742 = vmatprep.subr.bf16.mxu0 0
        %4743 = vmatpush1.bf16.msra.mxu0 0
        %4744 = vmatprep.subr.bf16.mxu0 0
        %4745 = vmatpush1.bf16.msra.mxu0 0
        %4746 = vmatprep.subr.bf16.mxu0 0
        %4747 = vmatpush1.bf16.msra.mxu0 0
        %4748 = vmatprep.subr.bf16.mxu0 0
        %4749 = vmatpush1.bf16.msra.mxu0 0
        %4750 = vmatprep.subr.bf16.mxu0 0
        %4751 = vmatpush1.bf16.msra.mxu0 0
        %4752 = vmatprep.subr.bf16.mxu0 0
        %4753 = vmatpush1.bf16.msra.mxu0 0
        %4754 = vmatprep.subr.bf16.mxu0 0
        %4755 = vmatpush1.bf16.msra.mxu0 0
        %4756 = vmatprep.subr.bf16.mxu0 0
        %4757 = vmatpush1.bf16.msra.mxu0 0
        %4758 = vmatprep.subr.bf16.mxu0 0
        %4759 = vmatpush1.bf16.msra.mxu0 0
        %4760 = vmatprep.subr.bf16.mxu0 0
        %4761 = vmatpush1.bf16.msra.mxu0 0
        %4762 = vmatprep.subr.bf16.mxu0 0
        %4763 = vmatpush1.bf16.msra.mxu0 0
        %4764 = vmatprep.subr.bf16.mxu0 0
        %4765 = vmatpush1.bf16.msra.mxu0 0
        %4766 = vmatprep.subr.bf16.mxu0 0
        %4767 = vmatpush1.bf16.msra.mxu0 0
        %4768 = vmatprep.subr.bf16.mxu0 0
        %4769 = vmatpush1.bf16.msra.mxu0 0
        %4770 = vmatprep.subr.bf16.mxu0 0
        %4771 = vmatpush1.bf16.msra.mxu0 0
        %4772 = vmatprep.mubr.bf16.mxu0 0
        %4773 = vmatmul.mubr.bf16.gmra.mrb[0].mxu0 %v4738
        %v4774 = vpop.f32.mrb[0].mxu0
        %v4775 = vadd.f32 0.0, %v4774
        %v4776 = vpop.f32.mrb[0].mxu0
        %v4777 = vpop.f32.mrb[0].mxu0
        %v4778 = vadd.f32 0.0, %v4777
        %v4779 = vpop.f32.mrb[0].mxu0
        %4780 = vdwg.mxu0
        %v4781 = vadd.f32 %v4237, %v4467
        %v4782 = vadd.f32 %v4238, %v4470
        %v4783 = vadd.f32 %v4239, %v4511
        %v4784 = vadd.f32 %v4240, %v4514
        %v4785 = vadd.f32 %v4241, %v4555
        %v4786 = vadd.f32 %v4242, %v4558
        %v4787 = vadd.f32 %v4243, %v4599
        %v4788 = vadd.f32 %v4244, %v4602
        %v4789 = vadd.f32 %v4245, %v4643
        %v4790 = vadd.f32 %v4246, %v4646
        %v4791 = vadd.f32 %v4247, %v4687
        %v4792 = vadd.f32 %v4248, %v4690
        %v4793 = vadd.f32 %v4249, %v4731
        %v4794 = vadd.f32 %v4250, %v4734
        %v4795 = vadd.f32 %v4251, %v4775
        %v4796 = vadd.f32 %v4252, %v4778
        %4797 = vst.msk [vmem:[#allocation5] sm:$0xff] %vm3398, %v4781
        %4798 = vst.msk [vmem:[#allocation5 + $0x8] sm:$0xff] %vm3398, %v4782
        %4799 = vst.msk [vmem:[#allocation5 + $0x10] sm:$0xff] %vm3398, %v4783
        %4800 = vst.msk [vmem:[#allocation5 + $0x18] sm:$0xff] %vm3398, %v4784
        %4801 = vst.msk [vmem:[#allocation5 + $0x20] sm:$0xff] %vm3398, %v4785
        %4802 = vst.msk [vmem:[#allocation5 + $0x28] sm:$0xff] %vm3398, %v4786
        %4803 = vst.msk [vmem:[#allocation5 + $0x30] sm:$0xff] %vm3398, %v4787
        %4804 = vst.msk [vmem:[#allocation5 + $0x38] sm:$0xff] %vm3398, %v4788
        %4805 = vst.msk [vmem:[#allocation5 + $0x40] sm:$0xff] %vm3398, %v4789
        %4806 = vst.msk [vmem:[#allocation5 + $0x48] sm:$0xff] %vm3398, %v4790
        %4807 = vst.msk [vmem:[#allocation5 + $0x50] sm:$0xff] %vm3398, %v4791
        %4808 = vst.msk [vmem:[#allocation5 + $0x58] sm:$0xff] %vm3398, %v4792
        %4809 = vst.msk [vmem:[#allocation5 + $0x60] sm:$0xff] %vm3398, %v4793
        %4810 = vst.msk [vmem:[#allocation5 + $0x68] sm:$0xff] %vm3398, %v4794
        %4811 = vst.msk [vmem:[#allocation5 + $0x70] sm:$0xff] %vm3398, %v4795
        %4812 = vst.msk [vmem:[#allocation5 + $0x78] sm:$0xff] %vm3398, %v4796
        %4813 = vst.msk [vmem:[#allocation3] sm:$0xff] %vm4124, %v3836
        %4814 = vst.msk [vmem:[#allocation3 + $0x8] sm:$0xff] %vm4124, %v3837
        %4815 = vst.msk [vmem:[#allocation3 + $0x10] sm:$0xff] %vm4124, %v3838
        %4816 = vst.msk [vmem:[#allocation3 + $0x18] sm:$0xff] %vm4124, %v3839
        %4817 = vst.msk [vmem:[#allocation3 + $0x20] sm:$0xff] %vm4124, %v3840
        %4818 = vst.msk [vmem:[#allocation3 + $0x28] sm:$0xff] %vm4124, %v3841
        %4819 = vst.msk [vmem:[#allocation3 + $0x30] sm:$0xff] %vm4124, %v3842
        %4820 = vst.msk [vmem:[#allocation3 + $0x38] sm:$0xff] %vm4124, %v3843
        %4821 = vst.msk [vmem:[#allocation3 + $0x40] sm:$0xff] %vm4124, %v3844
        %4822 = vst.msk [vmem:[#allocation3 + $0x48] sm:$0xff] %vm4124, %v3845
        %4823 = vst.msk [vmem:[#allocation3 + $0x50] sm:$0xff] %vm4124, %v3846
        %4824 = vst.msk [vmem:[#allocation3 + $0x58] sm:$0xff] %vm4124, %v3847
        %4825 = vst.msk [vmem:[#allocation3 + $0x60] sm:$0xff] %vm4124, %v3848
        %4826 = vst.msk [vmem:[#allocation3 + $0x68] sm:$0xff] %vm4124, %v3849
        %4827 = vst.msk [vmem:[#allocation3 + $0x70] sm:$0xff] %vm4124, %v3850
        %4828 = vst.msk [vmem:[#allocation3 + $0x78] sm:$0xff] %vm4124, %v3851
        %p4829 = scmp.eq.s32.totalorder %s44, 1
        // Predicated region
        $region113: #{tpu_custom_call.1} parent=79 // pred_check
          %p4830 = pneg %p4829
        $region114: #{tpu_custom_call.1} parent=79 // pred_check_branch
          %4832 = sbr.rel (%p4830) target = $region116
        $region115: #{tpu_custom_call.1} parent=79 // pred_region
          %v4833 = vld [vmem:[#allocation4] sm:$0xff]
          %v4834 = vld [vmem:[#allocation4 + $0x8] sm:$0xff]
          %v4835 = vld [vmem:[#allocation4 + $0x10] sm:$0xff]
          %v4836 = vld [vmem:[#allocation4 + $0x18] sm:$0xff]
          %v4837 = vld [vmem:[#allocation4 + $0x20] sm:$0xff]
          %v4838 = vld [vmem:[#allocation4 + $0x28] sm:$0xff]
          %v4839 = vld [vmem:[#allocation4 + $0x30] sm:$0xff]
          %v4840 = vld [vmem:[#allocation4 + $0x38] sm:$0xff]
          %v4841 = vld [vmem:[#allocation4 + $0x40] sm:$0xff]
          %v4842 = vld [vmem:[#allocation4 + $0x48] sm:$0xff]
          %v4843 = vld [vmem:[#allocation4 + $0x50] sm:$0xff]
          %v4844 = vld [vmem:[#allocation4 + $0x58] sm:$0xff]
          %v4845 = vld [vmem:[#allocation4 + $0x60] sm:$0xff]
          %v4846 = vld [vmem:[#allocation4 + $0x68] sm:$0xff]
          %v4847 = vld [vmem:[#allocation4 + $0x70] sm:$0xff]
          %v4848 = vld [vmem:[#allocation4 + $0x78] sm:$0xff]
          %v4849 = vrcp.pop %v4833
          %v4850 = vrcp.pop %v4834
          %v4851 = vrcp.pop %v4835
          %v4852 = vrcp.pop %v4836
          %v4853 = vrcp.pop %v4837
          %v4854 = vrcp.pop %v4838
          %v4855 = vrcp.pop %v4839
          %v4856 = vrcp.pop %v4840
          %v4857 = vrcp.pop %v4841
          %v4858 = vrcp.pop %v4842
          %v4859 = vrcp.pop %v4843
          %v4860 = vrcp.pop %v4844
          %v4861 = vrcp.pop %v4845
          %v4862 = vrcp.pop %v4846
          %v4863 = vrcp.pop %v4847
          %v4864 = vrcp.pop %v4848
          %v4865 = vld [vmem:[#allocation5] sm:$0xff]
          %v4866 = vld [vmem:[#allocation5 + $0x8] sm:$0xff]
          %v4867 = vld [vmem:[#allocation5 + $0x10] sm:$0xff]
          %v4868 = vld [vmem:[#allocation5 + $0x18] sm:$0xff]
          %v4869 = vld [vmem:[#allocation5 + $0x20] sm:$0xff]
          %v4870 = vld [vmem:[#allocation5 + $0x28] sm:$0xff]
          %v4871 = vld [vmem:[#allocation5 + $0x30] sm:$0xff]
          %v4872 = vld [vmem:[#allocation5 + $0x38] sm:$0xff]
          %v4873 = vld [vmem:[#allocation5 + $0x40] sm:$0xff]
          %v4874 = vld [vmem:[#allocation5 + $0x48] sm:$0xff]
          %v4875 = vld [vmem:[#allocation5 + $0x50] sm:$0xff]
          %v4876 = vld [vmem:[#allocation5 + $0x58] sm:$0xff]
          %v4877 = vld [vmem:[#allocation5 + $0x60] sm:$0xff]
          %v4878 = vld [vmem:[#allocation5 + $0x68] sm:$0xff]
          %v4879 = vld [vmem:[#allocation5 + $0x70] sm:$0xff]
          %v4880 = vld [vmem:[#allocation5 + $0x78] sm:$0xff]
          %4882 = vset.pattern.permute.xlu0 0
          %4883 = vperm.xlu0 %4882, %v4849
          %v4884 = vpop.permute.xlu0 %4883
          %4887 = vset.pattern.permute.xlu0 0
          %4888 = vperm.xlu0 %4887, %v4850
          %v4889 = vpop.permute.xlu0 %4888
          %4892 = vset.pattern.permute.xlu0 0
          %4893 = vperm.xlu0 %4892, %v4851
          %v4894 = vpop.permute.xlu0 %4893
          %4897 = vset.pattern.permute.xlu0 0
          %4898 = vperm.xlu0 %4897, %v4852
          %v4899 = vpop.permute.xlu0 %4898
          %4902 = vset.pattern.permute.xlu0 0
          %4903 = vperm.xlu0 %4902, %v4853
          %v4904 = vpop.permute.xlu0 %4903
          %4907 = vset.pattern.permute.xlu0 0
          %4908 = vperm.xlu0 %4907, %v4854
          %v4909 = vpop.permute.xlu0 %4908
          %4912 = vset.pattern.permute.xlu0 0
          %4913 = vperm.xlu0 %4912, %v4855
          %v4914 = vpop.permute.xlu0 %4913
          %4917 = vset.pattern.permute.xlu0 0
          %4918 = vperm.xlu0 %4917, %v4856
          %v4919 = vpop.permute.xlu0 %4918
          %4922 = vset.pattern.permute.xlu0 0
          %4923 = vperm.xlu0 %4922, %v4857
          %v4924 = vpop.permute.xlu0 %4923
          %4927 = vset.pattern.permute.xlu0 0
          %4928 = vperm.xlu0 %4927, %v4858
          %v4929 = vpop.permute.xlu0 %4928
          %4932 = vset.pattern.permute.xlu0 0
          %4933 = vperm.xlu0 %4932, %v4859
          %v4934 = vpop.permute.xlu0 %4933
          %4937 = vset.pattern.permute.xlu0 0
          %4938 = vperm.xlu0 %4937, %v4860
          %v4939 = vpop.permute.xlu0 %4938
          %4942 = vset.pattern.permute.xlu0 0
          %4943 = vperm.xlu0 %4942, %v4861
          %v4944 = vpop.permute.xlu0 %4943
          %4947 = vset.pattern.permute.xlu0 0
          %4948 = vperm.xlu0 %4947, %v4862
          %v4949 = vpop.permute.xlu0 %4948
          %4952 = vset.pattern.permute.xlu0 0
          %4953 = vperm.xlu0 %4952, %v4863
          %v4954 = vpop.permute.xlu0 %4953
          %4957 = vset.pattern.permute.xlu0 0
          %4958 = vperm.xlu0 %4957, %v4864
          %v4959 = vpop.permute.xlu0 %4958
          %v4961 = vmul.f32 %v4865, %v4884
          %v4962 = vmul.f32 %v4866, %v4889
          %v4963 = vmul.f32 %v4867, %v4894
          %v4964 = vmul.f32 %v4868, %v4899
          %v4965 = vmul.f32 %v4869, %v4904
          %v4966 = vmul.f32 %v4870, %v4909
          %v4967 = vmul.f32 %v4871, %v4914
          %v4968 = vmul.f32 %v4872, %v4919
          %v4969 = vmul.f32 %v4873, %v4924
          %v4970 = vmul.f32 %v4874, %v4929
          %v4971 = vmul.f32 %v4875, %v4934
          %v4972 = vmul.f32 %v4876, %v4939
          %v4973 = vmul.f32 %v4877, %v4944
          %v4974 = vmul.f32 %v4878, %v4949
          %v4975 = vmul.f32 %v4879, %v4954
          %v4976 = vmul.f32 %v4880, %v4959
          %v4977 = vpack.c.bf16 %v4962, %v4961
          %v4978 = vpack.c.bf16 %v4964, %v4963
          %v4979 = vpack.c.bf16 %v4966, %v4965
          %v4980 = vpack.c.bf16 %v4968, %v4967
          %v4981 = vpack.c.bf16 %v4970, %v4969
          %v4982 = vpack.c.bf16 %v4972, %v4971
          %v4983 = vpack.c.bf16 %v4974, %v4973
          %v4984 = vpack.c.bf16 %v4976, %v4975
          %v4985 = vld [vmem:[#allocation17] sm:$0xf]
          %v4986 = vld [vmem:[#allocation17 + $0x4] sm:$0xf]
          %v4987 = vld [vmem:[#allocation17 + $0x8] sm:$0xf]
          %v4988 = vld [vmem:[#allocation17 + $0xc] sm:$0xf]
          %v4989 = vld [vmem:[#allocation17 + $0x10] sm:$0xf]
          %v4990 = vld [vmem:[#allocation17 + $0x14] sm:$0xf]
          %v4991 = vld [vmem:[#allocation17 + $0x18] sm:$0xf]
          %v4992 = vld [vmem:[#allocation17 + $0x1c] sm:$0xf]
          %v4993 = vld [vmem:[#allocation17 + $0x20] sm:$0xf]
          %v4994 = vld [vmem:[#allocation17 + $0x24] sm:$0xf]
          %v4995 = vld [vmem:[#allocation17 + $0x28] sm:$0xf]
          %v4996 = vld [vmem:[#allocation17 + $0x2c] sm:$0xf]
          %v4997 = vld [vmem:[#allocation17 + $0x30] sm:$0xf]
          %v4998 = vld [vmem:[#allocation17 + $0x34] sm:$0xf]
          %v4999 = vld [vmem:[#allocation17 + $0x38] sm:$0xf]
          %v5000 = vld [vmem:[#allocation17 + $0x3c] sm:$0xf]
          %v5003 = vunpack.c.l.b16 %v4985
          %v5004 = vunpack.c.l.b16 %v4986
          %v5005 = vpack.c.b16 %v5004, %v5003
          %v5008 = vsel %vm3398, %v4977, 0
          %5010 = vmatprep.subr.bf16.mxu0 0
          %5011 = vmatpush1.bf16.msra.mxu0 %v5005
          %5012 = vmatprep.subr.bf16.mxu0 0
          %5013 = vmatpush1.bf16.msra.mxu0 0
          %5014 = vmatprep.subr.bf16.mxu0 0
          %5015 = vmatpush1.bf16.msra.mxu0 0
          %5016 = vmatprep.subr.bf16.mxu0 0
          %5017 = vmatpush1.bf16.msra.mxu0 0
          %5018 = vmatprep.subr.bf16.mxu0 0
          %5019 = vmatpush1.bf16.msra.mxu0 0
          %5020 = vmatprep.subr.bf16.mxu0 0
          %5021 = vmatpush1.bf16.msra.mxu0 0
          %5022 = vmatprep.subr.bf16.mxu0 0
          %5023 = vmatpush1.bf16.msra.mxu0 0
          %5024 = vmatprep.subr.bf16.mxu0 0
          %5025 = vmatpush1.bf16.msra.mxu0 0
          %5026 = vmatprep.subr.bf16.mxu0 0
          %5027 = vmatpush1.bf16.msra.mxu0 0
          %5028 = vmatprep.subr.bf16.mxu0 0
          %5029 = vmatpush1.bf16.msra.mxu0 0
          %5030 = vmatprep.subr.bf16.mxu0 0
          %5031 = vmatpush1.bf16.msra.mxu0 0
          %5032 = vmatprep.subr.bf16.mxu0 0
          %5033 = vmatpush1.bf16.msra.mxu0 0
          %5034 = vmatprep.subr.bf16.mxu0 0
          %5035 = vmatpush1.bf16.msra.mxu0 0
          %5036 = vmatprep.subr.bf16.mxu0 0
          %5037 = vmatpush1.bf16.msra.mxu0 0
          %5038 = vmatprep.subr.bf16.mxu0 0
          %5039 = vmatpush1.bf16.msra.mxu0 0
          %5040 = vmatprep.subr.bf16.mxu0 0
          %5041 = vmatpush1.bf16.msra.mxu0 0
          %5042 = vmatprep.mubr.bf16.mxu0 0
          %5043 = vmatmul.mubr.bf16.gmra.mrb[0].mxu0 %v5008
          %v5044 = vpop.f32.mrb[0].mxu0
          %v5045 = vadd.f32 0.0, %v5044
          %v5046 = vpop.f32.mrb[0].mxu0
          %v5047 = vpop.f32.mrb[0].mxu0
          %v5048 = vadd.f32 0.0, %v5047
          %v5049 = vpop.f32.mrb[0].mxu0
          %5050 = vdwg.mxu0
          %v5053 = vunpack.c.l.b16 %v4987
          %v5054 = vunpack.c.l.b16 %v4988
          %v5055 = vpack.c.b16 %v5054, %v5053
          %v5058 = vsel %vm3398, %v4978, 0
          %5060 = vmatprep.subr.bf16.mxu0 0
          %5061 = vmatpush1.bf16.msra.mxu0 %v5055
          %5062 = vmatprep.subr.bf16.mxu0 0
          %5063 = vmatpush1.bf16.msra.mxu0 0
          %5064 = vmatprep.subr.bf16.mxu0 0
          %5065 = vmatpush1.bf16.msra.mxu0 0
          %5066 = vmatprep.subr.bf16.mxu0 0
          %5067 = vmatpush1.bf16.msra.mxu0 0
          %5068 = vmatprep.subr.bf16.mxu0 0
          %5069 = vmatpush1.bf16.msra.mxu0 0
          %5070 = vmatprep.subr.bf16.mxu0 0
          %5071 = vmatpush1.bf16.msra.mxu0 0
          %5072 = vmatprep.subr.bf16.mxu0 0
          %5073 = vmatpush1.bf16.msra.mxu0 0
          %5074 = vmatprep.subr.bf16.mxu0 0
          %5075 = vmatpush1.bf16.msra.mxu0 0
          %5076 = vmatprep.subr.bf16.mxu0 0
          %5077 = vmatpush1.bf16.msra.mxu0 0
          %5078 = vmatprep.subr.bf16.mxu0 0
          %5079 = vmatpush1.bf16.msra.mxu0 0
          %5080 = vmatprep.subr.bf16.mxu0 0
          %5081 = vmatpush1.bf16.msra.mxu0 0
          %5082 = vmatprep.subr.bf16.mxu0 0
          %5083 = vmatpush1.bf16.msra.mxu0 0
          %5084 = vmatprep.subr.bf16.mxu0 0
          %5085 = vmatpush1.bf16.msra.mxu0 0
          %5086 = vmatprep.subr.bf16.mxu0 0
          %5087 = vmatpush1.bf16.msra.mxu0 0
          %5088 = vmatprep.subr.bf16.mxu0 0
          %5089 = vmatpush1.bf16.msra.mxu0 0
          %5090 = vmatprep.subr.bf16.mxu0 0
          %5091 = vmatpush1.bf16.msra.mxu0 0
          %5092 = vmatprep.mubr.bf16.mxu0 0
          %5093 = vmatmul.mubr.bf16.gmra.mrb[0].mxu0 %v5058
          %v5094 = vpop.f32.mrb[0].mxu0
          %v5095 = vadd.f32 0.0, %v5094
          %v5096 = vpop.f32.mrb[0].mxu0
          %v5097 = vpop.f32.mrb[0].mxu0
          %v5098 = vadd.f32 0.0, %v5097
          %v5099 = vpop.f32.mrb[0].mxu0
          %5100 = vdwg.mxu0
          %v5103 = vunpack.c.l.b16 %v4989
          %v5104 = vunpack.c.l.b16 %v4990
          %v5105 = vpack.c.b16 %v5104, %v5103
          %v5108 = vsel %vm3398, %v4979, 0
          %5110 = vmatprep.subr.bf16.mxu0 0
          %5111 = vmatpush1.bf16.msra.mxu0 %v5105
          %5112 = vmatprep.subr.bf16.mxu0 0
          %5113 = vmatpush1.bf16.msra.mxu0 0
          %5114 = vmatprep.subr.bf16.mxu0 0
          %5115 = vmatpush1.bf16.msra.mxu0 0
          %5116 = vmatprep.subr.bf16.mxu0 0
          %5117 = vmatpush1.bf16.msra.mxu0 0
          %5118 = vmatprep.subr.bf16.mxu0 0
          %5119 = vmatpush1.bf16.msra.mxu0 0
          %5120 = vmatprep.subr.bf16.mxu0 0
          %5121 = vmatpush1.bf16.msra.mxu0 0
          %5122 = vmatprep.subr.bf16.mxu0 0
          %5123 = vmatpush1.bf16.msra.mxu0 0
          %5124 = vmatprep.subr.bf16.mxu0 0
          %5125 = vmatpush1.bf16.msra.mxu0 0
          %5126 = vmatprep.subr.bf16.mxu0 0
          %5127 = vmatpush1.bf16.msra.mxu0 0
          %5128 = vmatprep.subr.bf16.mxu0 0
          %5129 = vmatpush1.bf16.msra.mxu0 0
          %5130 = vmatprep.subr.bf16.mxu0 0
          %5131 = vmatpush1.bf16.msra.mxu0 0
          %5132 = vmatprep.subr.bf16.mxu0 0
          %5133 = vmatpush1.bf16.msra.mxu0 0
          %5134 = vmatprep.subr.bf16.mxu0 0
          %5135 = vmatpush1.bf16.msra.mxu0 0
          %5136 = vmatprep.subr.bf16.mxu0 0
          %5137 = vmatpush1.bf16.msra.mxu0 0
          %5138 = vmatprep.subr.bf16.mxu0 0
          %5139 = vmatpush1.bf16.msra.mxu0 0
          %5140 = vmatprep.subr.bf16.mxu0 0
          %5141 = vmatpush1.bf16.msra.mxu0 0
          %5142 = vmatprep.mubr.bf16.mxu0 0
          %5143 = vmatmul.mubr.bf16.gmra.mrb[0].mxu0 %v5108
          %v5144 = vpop.f32.mrb[0].mxu0
          %v5145 = vadd.f32 0.0, %v5144
          %v5146 = vpop.f32.mrb[0].mxu0
          %v5147 = vpop.f32.mrb[0].mxu0
          %v5148 = vadd.f32 0.0, %v5147
          %v5149 = vpop.f32.mrb[0].mxu0
          %5150 = vdwg.mxu0
          %v5153 = vunpack.c.l.b16 %v4991
          %v5154 = vunpack.c.l.b16 %v4992
          %v5155 = vpack.c.b16 %v5154, %v5153
          %v5158 = vsel %vm3398, %v4980, 0
          %5160 = vmatprep.subr.bf16.mxu0 0
          %5161 = vmatpush1.bf16.msra.mxu0 %v5155
          %5162 = vmatprep.subr.bf16.mxu0 0
          %5163 = vmatpush1.bf16.msra.mxu0 0
          %5164 = vmatprep.subr.bf16.mxu0 0
          %5165 = vmatpush1.bf16.msra.mxu0 0
          %5166 = vmatprep.subr.bf16.mxu0 0
          %5167 = vmatpush1.bf16.msra.mxu0 0
          %5168 = vmatprep.subr.bf16.mxu0 0
          %5169 = vmatpush1.bf16.msra.mxu0 0
          %5170 = vmatprep.subr.bf16.mxu0 0
          %5171 = vmatpush1.bf16.msra.mxu0 0
          %5172 = vmatprep.subr.bf16.mxu0 0
          %5173 = vmatpush1.bf16.msra.mxu0 0
          %5174 = vmatprep.subr.bf16.mxu0 0
          %5175 = vmatpush1.bf16.msra.mxu0 0
          %5176 = vmatprep.subr.bf16.mxu0 0
          %5177 = vmatpush1.bf16.msra.mxu0 0
          %5178 = vmatprep.subr.bf16.mxu0 0
          %5179 = vmatpush1.bf16.msra.mxu0 0
          %5180 = vmatprep.subr.bf16.mxu0 0
          %5181 = vmatpush1.bf16.msra.mxu0 0
          %5182 = vmatprep.subr.bf16.mxu0 0
          %5183 = vmatpush1.bf16.msra.mxu0 0
          %5184 = vmatprep.subr.bf16.mxu0 0
          %5185 = vmatpush1.bf16.msra.mxu0 0
          %5186 = vmatprep.subr.bf16.mxu0 0
          %5187 = vmatpush1.bf16.msra.mxu0 0
          %5188 = vmatprep.subr.bf16.mxu0 0
          %5189 = vmatpush1.bf16.msra.mxu0 0
          %5190 = vmatprep.subr.bf16.mxu0 0
          %5191 = vmatpush1.bf16.msra.mxu0 0
          %5192 = vmatprep.mubr.bf16.mxu0 0
          %5193 = vmatmul.mubr.bf16.gmra.mrb[0].mxu0 %v5158
          %v5194 = vpop.f32.mrb[0].mxu0
          %v5195 = vadd.f32 0.0, %v5194
          %v5196 = vpop.f32.mrb[0].mxu0
          %v5197 = vpop.f32.mrb[0].mxu0
          %v5198 = vadd.f32 0.0, %v5197
          %v5199 = vpop.f32.mrb[0].mxu0
          %5200 = vdwg.mxu0
          %v5203 = vunpack.c.l.b16 %v4993
          %v5204 = vunpack.c.l.b16 %v4994
          %v5205 = vpack.c.b16 %v5204, %v5203
          %v5208 = vsel %vm3398, %v4981, 0
          %5210 = vmatprep.subr.bf16.mxu0 0
          %5211 = vmatpush1.bf16.msra.mxu0 %v5205
          %5212 = vmatprep.subr.bf16.mxu0 0
          %5213 = vmatpush1.bf16.msra.mxu0 0
          %5214 = vmatprep.subr.bf16.mxu0 0
          %5215 = vmatpush1.bf16.msra.mxu0 0
          %5216 = vmatprep.subr.bf16.mxu0 0
          %5217 = vmatpush1.bf16.msra.mxu0 0
          %5218 = vmatprep.subr.bf16.mxu0 0
          %5219 = vmatpush1.bf16.msra.mxu0 0
          %5220 = vmatprep.subr.bf16.mxu0 0
          %5221 = vmatpush1.bf16.msra.mxu0 0
          %5222 = vmatprep.subr.bf16.mxu0 0
          %5223 = vmatpush1.bf16.msra.mxu0 0
          %5224 = vmatprep.subr.bf16.mxu0 0
          %5225 = vmatpush1.bf16.msra.mxu0 0
          %5226 = vmatprep.subr.bf16.mxu0 0
          %5227 = vmatpush1.bf16.msra.mxu0 0
          %5228 = vmatprep.subr.bf16.mxu0 0
          %5229 = vmatpush1.bf16.msra.mxu0 0
          %5230 = vmatprep.subr.bf16.mxu0 0
          %5231 = vmatpush1.bf16.msra.mxu0 0
          %5232 = vmatprep.subr.bf16.mxu0 0
          %5233 = vmatpush1.bf16.msra.mxu0 0
          %5234 = vmatprep.subr.bf16.mxu0 0
          %5235 = vmatpush1.bf16.msra.mxu0 0
          %5236 = vmatprep.subr.bf16.mxu0 0
          %5237 = vmatpush1.bf16.msra.mxu0 0
          %5238 = vmatprep.subr.bf16.mxu0 0
          %5239 = vmatpush1.bf16.msra.mxu0 0
          %5240 = vmatprep.subr.bf16.mxu0 0
          %5241 = vmatpush1.bf16.msra.mxu0 0
          %5242 = vmatprep.mubr.bf16.mxu0 0
          %5243 = vmatmul.mubr.bf16.gmra.mrb[0].mxu0 %v5208
          %v5244 = vpop.f32.mrb[0].mxu0
          %v5245 = vadd.f32 0.0, %v5244
          %v5246 = vpop.f32.mrb[0].mxu0
          %v5247 = vpop.f32.mrb[0].mxu0
          %v5248 = vadd.f32 0.0, %v5247
          %v5249 = vpop.f32.mrb[0].mxu0
          %5250 = vdwg.mxu0
          %v5253 = vunpack.c.l.b16 %v4995
          %v5254 = vunpack.c.l.b16 %v4996
          %v5255 = vpack.c.b16 %v5254, %v5253
          %v5258 = vsel %vm3398, %v4982, 0
          %5260 = vmatprep.subr.bf16.mxu0 0
          %5261 = vmatpush1.bf16.msra.mxu0 %v5255
          %5262 = vmatprep.subr.bf16.mxu0 0
          %5263 = vmatpush1.bf16.msra.mxu0 0
          %5264 = vmatprep.subr.bf16.mxu0 0
          %5265 = vmatpush1.bf16.msra.mxu0 0
          %5266 = vmatprep.subr.bf16.mxu0 0
          %5267 = vmatpush1.bf16.msra.mxu0 0
          %5268 = vmatprep.subr.bf16.mxu0 0
          %5269 = vmatpush1.bf16.msra.mxu0 0
          %5270 = vmatprep.subr.bf16.mxu0 0
          %5271 = vmatpush1.bf16.msra.mxu0 0
          %5272 = vmatprep.subr.bf16.mxu0 0
          %5273 = vmatpush1.bf16.msra.mxu0 0
          %5274 = vmatprep.subr.bf16.mxu0 0
          %5275 = vmatpush1.bf16.msra.mxu0 0
          %5276 = vmatprep.subr.bf16.mxu0 0
          %5277 = vmatpush1.bf16.msra.mxu0 0
          %5278 = vmatprep.subr.bf16.mxu0 0
          %5279 = vmatpush1.bf16.msra.mxu0 0
          %5280 = vmatprep.subr.bf16.mxu0 0
          %5281 = vmatpush1.bf16.msra.mxu0 0
          %5282 = vmatprep.subr.bf16.mxu0 0
          %5283 = vmatpush1.bf16.msra.mxu0 0
          %5284 = vmatprep.subr.bf16.mxu0 0
          %5285 = vmatpush1.bf16.msra.mxu0 0
          %5286 = vmatprep.subr.bf16.mxu0 0
          %5287 = vmatpush1.bf16.msra.mxu0 0
          %5288 = vmatprep.subr.bf16.mxu0 0
          %5289 = vmatpush1.bf16.msra.mxu0 0
          %5290 = vmatprep.subr.bf16.mxu0 0
          %5291 = vmatpush1.bf16.msra.mxu0 0
          %5292 = vmatprep.mubr.bf16.mxu0 0
          %5293 = vmatmul.mubr.bf16.gmra.mrb[0].mxu0 %v5258
          %v5294 = vpop.f32.mrb[0].mxu0
          %v5295 = vadd.f32 0.0, %v5294
          %v5296 = vpop.f32.mrb[0].mxu0
          %v5297 = vpop.f32.mrb[0].mxu0
          %v5298 = vadd.f32 0.0, %v5297
          %v5299 = vpop.f32.mrb[0].mxu0
          %5300 = vdwg.mxu0
          %v5303 = vunpack.c.l.b16 %v4997
          %v5304 = vunpack.c.l.b16 %v4998
          %v5305 = vpack.c.b16 %v5304, %v5303
          %v5308 = vsel %vm3398, %v4983, 0
          %5310 = vmatprep.subr.bf16.mxu0 0
          %5311 = vmatpush1.bf16.msra.mxu0 %v5305
          %5312 = vmatprep.subr.bf16.mxu0 0
          %5313 = vmatpush1.bf16.msra.mxu0 0
          %5314 = vmatprep.subr.bf16.mxu0 0
          %5315 = vmatpush1.bf16.msra.mxu0 0
          %5316 = vmatprep.subr.bf16.mxu0 0
          %5317 = vmatpush1.bf16.msra.mxu0 0
          %5318 = vmatprep.subr.bf16.mxu0 0
          %5319 = vmatpush1.bf16.msra.mxu0 0
          %5320 = vmatprep.subr.bf16.mxu0 0
          %5321 = vmatpush1.bf16.msra.mxu0 0
          %5322 = vmatprep.subr.bf16.mxu0 0
          %5323 = vmatpush1.bf16.msra.mxu0 0
          %5324 = vmatprep.subr.bf16.mxu0 0
          %5325 = vmatpush1.bf16.msra.mxu0 0
          %5326 = vmatprep.subr.bf16.mxu0 0
          %5327 = vmatpush1.bf16.msra.mxu0 0
          %5328 = vmatprep.subr.bf16.mxu0 0
          %5329 = vmatpush1.bf16.msra.mxu0 0
          %5330 = vmatprep.subr.bf16.mxu0 0
          %5331 = vmatpush1.bf16.msra.mxu0 0
          %5332 = vmatprep.subr.bf16.mxu0 0
          %5333 = vmatpush1.bf16.msra.mxu0 0
          %5334 = vmatprep.subr.bf16.mxu0 0
          %5335 = vmatpush1.bf16.msra.mxu0 0
          %5336 = vmatprep.subr.bf16.mxu0 0
          %5337 = vmatpush1.bf16.msra.mxu0 0
          %5338 = vmatprep.subr.bf16.mxu0 0
          %5339 = vmatpush1.bf16.msra.mxu0 0
          %5340 = vmatprep.subr.bf16.mxu0 0
          %5341 = vmatpush1.bf16.msra.mxu0 0
          %5342 = vmatprep.mubr.bf16.mxu0 0
          %5343 = vmatmul.mubr.bf16.gmra.mrb[0].mxu0 %v5308
          %v5344 = vpop.f32.mrb[0].mxu0
          %v5345 = vadd.f32 0.0, %v5344
          %v5346 = vpop.f32.mrb[0].mxu0
          %v5347 = vpop.f32.mrb[0].mxu0
          %v5348 = vadd.f32 0.0, %v5347
          %v5349 = vpop.f32.mrb[0].mxu0
          %5350 = vdwg.mxu0
          %v5353 = vunpack.c.l.b16 %v4999
          %v5354 = vunpack.c.l.b16 %v5000
          %v5355 = vpack.c.b16 %v5354, %v5353
          %v5358 = vsel %vm3398, %v4984, 0
          %5360 = vmatprep.subr.bf16.mxu0 0
          %5361 = vmatpush1.bf16.msra.mxu0 %v5355
          %5362 = vmatprep.subr.bf16.mxu0 0
          %5363 = vmatpush1.bf16.msra.mxu0 0
          %5364 = vmatprep.subr.bf16.mxu0 0
          %5365 = vmatpush1.bf16.msra.mxu0 0
          %5366 = vmatprep.subr.bf16.mxu0 0
          %5367 = vmatpush1.bf16.msra.mxu0 0
          %5368 = vmatprep.subr.bf16.mxu0 0
          %5369 = vmatpush1.bf16.msra.mxu0 0
          %5370 = vmatprep.subr.bf16.mxu0 0
          %5371 = vmatpush1.bf16.msra.mxu0 0
          %5372 = vmatprep.subr.bf16.mxu0 0
          %5373 = vmatpush1.bf16.msra.mxu0 0
          %5374 = vmatprep.subr.bf16.mxu0 0
          %5375 = vmatpush1.bf16.msra.mxu0 0
          %5376 = vmatprep.subr.bf16.mxu0 0
          %5377 = vmatpush1.bf16.msra.mxu0 0
          %5378 = vmatprep.subr.bf16.mxu0 0
          %5379 = vmatpush1.bf16.msra.mxu0 0
          %5380 = vmatprep.subr.bf16.mxu0 0
          %5381 = vmatpush1.bf16.msra.mxu0 0
          %5382 = vmatprep.subr.bf16.mxu0 0
          %5383 = vmatpush1.bf16.msra.mxu0 0
          %5384 = vmatprep.subr.bf16.mxu0 0
          %5385 = vmatpush1.bf16.msra.mxu0 0
          %5386 = vmatprep.subr.bf16.mxu0 0
          %5387 = vmatpush1.bf16.msra.mxu0 0
          %5388 = vmatprep.subr.bf16.mxu0 0
          %5389 = vmatpush1.bf16.msra.mxu0 0
          %5390 = vmatprep.subr.bf16.mxu0 0
          %5391 = vmatpush1.bf16.msra.mxu0 0
          %5392 = vmatprep.mubr.bf16.mxu0 0
          %5393 = vmatmul.mubr.bf16.gmra.mrb[0].mxu0 %v5358
          %v5394 = vpop.f32.mrb[0].mxu0
          %v5395 = vadd.f32 0.0, %v5394
          %v5396 = vpop.f32.mrb[0].mxu0
          %v5397 = vpop.f32.mrb[0].mxu0
          %v5398 = vadd.f32 0.0, %v5397
          %v5399 = vpop.f32.mrb[0].mxu0
          %5400 = vdwg.mxu0
          %v5401 = vadd.f32 %v5045, %v5095
          %v5402 = vadd.f32 %v5401, %v5145
          %v5403 = vadd.f32 %v5402, %v5195
          %v5404 = vadd.f32 %v5403, %v5245
          %v5405 = vadd.f32 %v5404, %v5295
          %v5406 = vadd.f32 %v5405, %v5345
          %v5407 = vadd.f32 %v5406, %v5395
          %v5408 = vadd.f32 %v5048, %v5098
          %v5409 = vadd.f32 %v5408, %v5148
          %v5410 = vadd.f32 %v5409, %v5198
          %v5411 = vadd.f32 %v5410, %v5248
          %v5412 = vadd.f32 %v5411, %v5298
          %v5413 = vadd.f32 %v5412, %v5348
          %v5414 = vadd.f32 %v5413, %v5398
          %v5415 = vld [vmem:[%s14] sm:$0x1]
          %v5417 = vlaneseq
          %v5418 = vshrl.u32 %v5417, 7
          %v5419 = vsub.s32 0, %v5418
          %v5420 = vrot.slane %v5415, %v5419
          %v5422 = vadd.f32 %v5407, %v5420
          %v5423 = vadd.f32 %v5414, %v5420
          %v5424 = vld [vmem:[%s608] sm:$0xff]
          %v5425 = vld [vmem:[%s608 + $0x8] sm:$0xff]
          %v5426 = vadd.f32 %v5422, %v5424
          %v5427 = vadd.f32 %v5423, %v5425
          %5428 = vst [vmem:[%s680] sm:$0xff] %v5426
          %5429 = vst [vmem:[%s680 + $0x8] sm:$0xff] %v5427
        $region116: #{tpu_custom_call.1} parent=79 // pred_fallthru
          _
        %s5430 = sand.u32 %s402, 1
        %s5431 = scalar_lea.sflag [#allocation8], %s5430
        %s5432 = sand.u32 %s402, 1
        %s5433 = smul.addr %s5432, 16
        %s5434 = scalar_lea.vmem [#allocation18], %s5433
        // Predicated region
        $region117: #{tpu_custom_call.1} parent=79 // pred_check
          %p5435 = pneg %p412
        $region118: #{tpu_custom_call.1} parent=79 // pred_check_branch
          %5437 = sbr.rel (%p5435) target = $region120
        $region119: #{tpu_custom_call.1} parent=79 // pred_region
          %s5438 = smul.u32 2, %s43
          %s5440 = ssub.s32 256, 256
          %5441 = vsyncadd %s5431, %s5440
          %s5442 = smul.addr %s42, 4
          %s5443 = sadd.s32 %s5438, %s5442
          %s5444 = smul.addr %s5443, 128
          %s5445 = scalar_lea.hbm %s15, %s5444
          %s5446 = sshll.u32 %s5434, 4
          %s5447 = int_to_ptr.vmem [resolvable:$true] %s5446
          %5452 = dma.vmem_to_hbm [thread:$0]  %s5447, 256, %s5445, %s5431, 128, 128, 8
        $region120: #{tpu_custom_call.1} parent=79 // pred_fallthru
          _
      $region80: #{tpu_custom_call.1} parent=5 // pred_fallthru
        _
      %p5453 = scmp.le.s32.totalorder 2, %s32
      // Predicated region
      $region121: #{tpu_custom_call.1} parent=5 // pred_check
        %p5454 = pneg %p5453
      $region122: #{tpu_custom_call.1} parent=5 // pred_check_branch
        %5456 = sbr.rel (%p5454) target = $region124
      $region123: #{tpu_custom_call.1} parent=5 // pred_region
        %s5457 = ssub.s32 %s32, 2
        // Predicated region
        $region125: #{tpu_custom_call.1} parent=123 // pred_check
          %p5458 = pneg %p418
        $region126: #{tpu_custom_call.1} parent=123 // pred_check_branch
          %5460 = sbr.rel (%p5458) target = $region128
        $region127: #{tpu_custom_call.1} parent=123 // pred_region
          %s5461 = sand.u32 %s403, 1
          %s5462 = scalar_lea.sflag [#allocation8], %s5461
          %s5463 = sand.u32 %s403, 1
          %s5464 = smul.addr %s5463, 16
          %s5465 = scalar_lea.vmem [#allocation18], %s5464
          %5466 = dma.done %s5462, 256
        $region128: #{tpu_custom_call.1} parent=123 // pred_fallthru
          _
      $region124: #{tpu_custom_call.1} parent=5 // pred_fallthru
        _
    $region6: #{tpu_custom_call.1} parent=1 // loop_footer
      %s36 = sadd.s32 1, %s32
    $region7: #{tpu_custom_call.1} parent=1 // loop_footer_branch
      %31 = sbr.rel target = $region3
    $region8: #{tpu_custom_call.1} parent=1 // loop_exit
      _
    %5467 = vsyncpa [#allocation7], 1
    %s5468 = scalar_lea.sflag [#allocation7], 1
    %5469 = vsyncpa %s5468, 1
    %5470 = vsyncpa [#allocation10], 1
    %s5471 = scalar_lea.sflag [#allocation10], 1
    %5472 = vsyncpa %s5471, 1
    %5473 = vsyncpa [#allocation13], 1
    %5474 = vsyncpa [#allocation16], 1
    %5475 = vsyncpa [#allocation8], 1
    %s5476 = scalar_lea.sflag [#allocation8], 1
    %5477 = vsyncpa %s5476, 1

</llo_original>
